<compile_context>
chip_gen: v7x
topology: tpu7x:2x2x1
jax: 0.10.0
libtpu: 0.0.40
codegen_flags: <defaults>
</compile_context>

<pallas_src>
import functools

import jax
import jax.numpy as jnp
from jax.experimental import pallas as pl
from jax.experimental.pallas import tpu as pltpu

INPUT_DIM = 2
HIDDEN_DIM = 512
OUTPUT_DIM = 1
OUT_SUBLANES = 8   # final layer padded to 8 sublanes (not 128 lanes)


def _mlnet_kernel(x_ref,
                  w1_ref, b1_ref,
                  w2_ref, b2_ref,
                  w3_ref, b3_ref,
                  w4_ref, b4_ref,
                  o_ref):
    """Fused 4-layer MLP forward for one batch tile, channel-major: h is (H, tile)."""
    x = x_ref[...]          # (2, tile)  f32, batch on lanes
    w1 = w1_ref[...]        # (H, 2)     f32

    # Layer 1 on the VPU (K=2): h[c,b] = w1[c,0]*x[0,b] + w1[c,1]*x[1,b] + b1[c]
    h = w1[:, 0:1] * x[0:1, :] + w1[:, 1:2] * x[1:2, :] + b1_ref[...]
    h = jnp.maximum(h, 0.0)

    # Layers 2-3 on the MXU: bf16 operands, f32 accumulation, f32 bias/ReLU.
    h = jnp.dot(w2_ref[...], h.astype(jnp.bfloat16),
                preferred_element_type=jnp.float32) + b2_ref[...]
    h = jnp.maximum(h, 0.0)

    h = jnp.dot(w3_ref[...], h.astype(jnp.bfloat16),
                preferred_element_type=jnp.float32) + b3_ref[...]
    h = jnp.maximum(h, 0.0)

    # Layer 4: (8, H) @ (H, tile) -> (8, tile); only row 0 carries the real output.
    out = jnp.dot(w4_ref[...], h.astype(jnp.bfloat16),
                  preferred_element_type=jnp.float32) + b4_ref[...]
    o_ref[...] = out.astype(o_ref.dtype)


def _auto_batch_tile(B):
    """256-multiple tile, <= 1024, keeping the grid >= 2 when the batch allows (v7x 2 TCs)."""
    n256 = -(-B // 256)
    if n256 <= 1:
        return 256
    return 256 * min(4, max(1, n256 // 2))


@functools.partial(jax.jit, static_argnames=("batch_tile",))
def mlnet_forward(x, packed, batch_tile=None):
    """x: (B, INPUT_DIM) f32; packed: output of pack_params() (pre-packed, call-invariant)."""
    B, D = x.shape
    assert D == INPUT_DIM
    if batch_tile is None:
        batch_tile = _auto_batch_tile(B)
    assert batch_tile % 256 == 0, "batch_tile must be a multiple of 256"

    H = packed["w2"].shape[0]
    O_sub = packed["w4p"].shape[0]

    n_tiles = -(-B // batch_tile)
    B_pad = n_tiles * batch_tile

    # Channel-major input: (2, B_pad) with batch on the lane axis (lane-dense loads/stores).
    xt = x.T
    if B_pad != B:
        xt = jnp.pad(xt, ((0, 0), (0, B_pad - B)))

    const = lambda shape: pl.BlockSpec(shape, lambda i: (0, 0))   # VMEM-resident operand

    flops = 2 * B_pad * (D * H + H * H + H * H + H * O_sub)
    bytes_accessed = (
        D * B_pad * 4 + O_sub * B_pad * 4                 # x in, output slab
        + H * D * 4 + 3 * H * 4 + O_sub * 4               # w1 + biases (f32)
        + 2 * (H * H * 2) + O_sub * H * 2                 # w2, w3, w4 (bf16)
    )

    out = pl.pallas_call(
        _mlnet_kernel,
        out_shape=jax.ShapeDtypeStruct((O_sub, B_pad), jnp.float32),
        grid_spec=pltpu.PrefetchScalarGridSpec(
            num_scalar_prefetch=0,
            grid=(n_tiles,),
            in_specs=[
                pl.BlockSpec((D, batch_tile), lambda i: (0, i)),   # x tile (batch on lanes)
                const((H, D)), const((H, 1)),                      # layer 1 (f32, VPU)
                const((H, H)), const((H, 1)),                      # layer 2 (bf16 MXU)
                const((H, H)), const((H, 1)),                      # layer 3 (bf16 MXU)
                const((O_sub, H)), const((O_sub, 1)),              # layer 4 (8-sublane pad)
            ],
            out_specs=pl.BlockSpec((O_sub, batch_tile), lambda i: (0, i)),
        ),
        compiler_params=pltpu.CompilerParams(
            dimension_semantics=("parallel",),        # batch tiles shard across v7x's 2 TCs
            vmem_limit_bytes=32 * 1024 * 1024,        # v5e scoped default is only 16 MiB
        ),
        cost_estimate=pl.CostEstimate(
            flops=flops, transcendentals=0, bytes_accessed=bytes_accessed),
    )(xt, packed["w1"], packed["b1"], packed["w2"], packed["b2"],
      packed["w3"], packed["b3"], packed["w4p"], packed["b4p"])

    return out[:OUTPUT_DIM, :B].T   # (B, OUTPUT_DIM)


def pack_params(params, out_sublanes=OUT_SUBLANES):
    """One-time repacking into the kernel's channel-major layout (hoisted out of the forward).

    Weights become native PyTorch (out, in) rows, MXU weights are cast to bf16, biases become
    (out, 1) f32 columns, and the 1-wide head is zero-padded to `out_sublanes` rows so its
    matmul and the output store stay sublane-aligned.
    """
    H = params["w2"].shape[0]
    O = params["w4"].shape[1]
    assert O <= out_sublanes
    w4p = jnp.zeros((out_sublanes, H), jnp.float32).at[:O, :].set(params["w4"].T)
    b4p = jnp.zeros((out_sublanes, 1), jnp.float32).at[:O, :].set(params["b4"].T)
    return {
        "w1": params["w1"].T.astype(jnp.float32),     # (H, 2)  f32 (VPU layer)
        "b1": params["b1"].T.astype(jnp.float32),     # (H, 1)  f32
        "w2": params["w2"].T.astype(jnp.bfloat16),    # (H, H)  bf16 (MXU)
        "b2": params["b2"].T.astype(jnp.float32),     # (H, 1)  f32
        "w3": params["w3"].T.astype(jnp.bfloat16),    # (H, H)  bf16 (MXU)
        "b3": params["b3"].T.astype(jnp.float32),     # (H, 1)  f32
        "w4p": w4p.astype(jnp.bfloat16),              # (8, H)  bf16 (MXU)
        "b4p": b4p,                                   # (8, 1)  f32
    }


def init_params(key, input_dim=INPUT_DIM, hidden_dim=HIDDEN_DIM, output_dim=OUTPUT_DIM):
    """Deterministic synthetic init mirroring nn.Linear shapes (stored as (in, out))."""
    keys = jax.random.split(key, 8)

    def linear(kw, kb, fan_in, fan_out):
        # PyTorch default: U(-1/sqrt(fan_in), 1/sqrt(fan_in))
        bound = 1.0 / jnp.sqrt(jnp.float32(fan_in))
        w = jax.random.uniform(kw, (fan_in, fan_out), jnp.float32, -bound, bound)
        b = jax.random.uniform(kb, (1, fan_out), jnp.float32, -bound, bound)
        return w, b

    w1, b1 = linear(keys[0], keys[1], input_dim, hidden_dim)
    w2, b2 = linear(keys[2], keys[3], hidden_dim, hidden_dim)
    w3, b3 = linear(keys[4], keys[5], hidden_dim, hidden_dim)
    w4, b4 = linear(keys[6], keys[7], hidden_dim, output_dim)
    return {"w1": w1, "b1": b1, "w2": w2, "b2": b2,
            "w3": w3, "b3": b3, "w4": w4, "b4": b4}


def mlnet_reference_f32(x, params):
    """Pure-JAX f32 reference of the PyTorch forward."""
    h = jnp.maximum(x @ params["w1"] + params["b1"], 0.0)
    h = jnp.maximum(h @ params["w2"] + params["b2"], 0.0)
    h = jnp.maximum(h @ params["w3"] + params["b3"], 0.0)
    return h @ params["w4"] + params["b4"]


def mlnet_reference_matched(x, params):
    """Pure-JAX reference matching the kernel's numerics (f32 VPU layer 1, bf16 MXU layers 2-4)."""
    h = (x[:, 0:1] * params["w1"][0:1, :] + x[:, 1:2] * params["w1"][1:2, :]
         + params["b1"])
    h = jnp.maximum(h, 0.0)
    for wk, bk in (("w2", "b2"), ("w3", "b3")):
        h = jnp.dot(h.astype(jnp.bfloat16), params[wk].astype(jnp.bfloat16),
                    preferred_element_type=jnp.float32) + params[bk]
        h = jnp.maximum(h, 0.0)
    return jnp.dot(h.astype(jnp.bfloat16), params["w4"].astype(jnp.bfloat16),
                   preferred_element_type=jnp.float32) + params["b4"]


if __name__ == "__main__":
    key = jax.random.PRNGKey(0)
    k_params, k_x = jax.random.split(key)

    params = init_params(k_params)
    packed = pack_params(params)   # one-time repacking, reused by every forward call

    # Even, 256-multiple batches: auto tile keeps grid >= 2 (both v7x TCs busy).
    for batch in (512, 1024):
        xb = jax.random.normal(jax.random.fold_in(k_x, batch), (batch, INPUT_DIM),
                               dtype=jnp.float32)
        out = jax.block_until_ready(mlnet_forward(xb, packed))
        assert out.shape == (batch, OUTPUT_DIM), out.shape
        assert jnp.allclose(out, mlnet_reference_matched(xb, params),
                            atol=1e-3, rtol=1e-3), "mismatch vs matched reference"
        assert jnp.allclose(out, mlnet_reference_f32(xb, params),
                            atol=2e-2, rtol=2e-2), "mismatch vs f32 reference"

    # Ragged batch: 200 rows pads to one 256-column tile internally, sliced back in the wrapper.
    x_small = jax.random.normal(k_x, (200, INPUT_DIM), dtype=jnp.float32)
    out_small = jax.block_until_ready(mlnet_forward(x_small, packed))
    assert out_small.shape == (200, OUTPUT_DIM), out_small.shape
    assert jnp.allclose(out_small, mlnet_reference_matched(x_small, params),
                        atol=1e-3, rtol=1e-3), "mismatch on padded batch"

    print("KERNEL_OK")
</pallas_src>

<mosaic_0001>
module attributes {stable_mosaic.version = 11 : i64} {
  func.func @_mlnet_kernel(%arg0: i32, %arg1: memref<2x256xf32, #tpu.memory_space<vmem>>, %arg2: memref<512x2xf32, #tpu.memory_space<vmem>>, %arg3: memref<512x1xf32, #tpu.memory_space<vmem>>, %arg4: memref<512x512xbf16, #tpu.memory_space<vmem>>, %arg5: memref<512x1xf32, #tpu.memory_space<vmem>>, %arg6: memref<512x512xbf16, #tpu.memory_space<vmem>>, %arg7: memref<512x1xf32, #tpu.memory_space<vmem>>, %arg8: memref<8x512xbf16, #tpu.memory_space<vmem>>, %arg9: memref<8x1xf32, #tpu.memory_space<vmem>>, %arg10: memref<8x256xf32, #tpu.memory_space<vmem>>) attributes {dimension_semantics = [#tpu.dimension_semantics<parallel>], iteration_bounds = array<i64: 2>, scalar_prefetch = 0 : i64, scratch_operands = 0 : i64, tpu.core_type = #tpu.core_type<tc>, window_params = [{transform_indices = @transform_0, window_bounds = array<i64: 2, 256>}, {pipeline_mode = #tpu.pipeline_mode<synchronous>, transform_indices = @transform_1, window_bounds = array<i64: 512, 2>}, {pipeline_mode = #tpu.pipeline_mode<synchronous>, transform_indices = @transform_2, window_bounds = array<i64: 512, 1>}, {pipeline_mode = #tpu.pipeline_mode<synchronous>, transform_indices = @transform_3, window_bounds = array<i64: 512, 512>}, {pipeline_mode = #tpu.pipeline_mode<synchronous>, transform_indices = @transform_4, window_bounds = array<i64: 512, 1>}, {pipeline_mode = #tpu.pipeline_mode<synchronous>, transform_indices = @transform_5, window_bounds = array<i64: 512, 512>}, {pipeline_mode = #tpu.pipeline_mode<synchronous>, transform_indices = @transform_6, window_bounds = array<i64: 512, 1>}, {pipeline_mode = #tpu.pipeline_mode<synchronous>, transform_indices = @transform_7, window_bounds = array<i64: 8, 512>}, {pipeline_mode = #tpu.pipeline_mode<synchronous>, transform_indices = @transform_8, window_bounds = array<i64: 8, 1>}, {transform_indices = @transform_9, window_bounds = array<i64: 8, 256>}]} {
    %c0 = arith.constant 0 : index
    %c0_0 = arith.constant 0 : index
    %0 = vector.load %arg1[%c0, %c0_0] : memref<2x256xf32, #tpu.memory_space<vmem>>, vector<2x256xf32>
    %c0_1 = arith.constant 0 : index
    %c0_2 = arith.constant 0 : index
    %1 = vector.load %arg2[%c0_1, %c0_2] : memref<512x2xf32, #tpu.memory_space<vmem>>, vector<512x2xf32>
    %2 = vector.extract_strided_slice %1 {offsets = [0, 0], sizes = [512, 1], strides = [1, 1]} : vector<512x2xf32> to vector<512x1xf32>
    %3 = vector.extract_strided_slice %0 {offsets = [0, 0], sizes = [1, 256], strides = [1, 1]} : vector<2x256xf32> to vector<1x256xf32>
    %4 = vector.broadcast %2 : vector<512x1xf32> to vector<512x256xf32>
    %5 = vector.broadcast %3 : vector<1x256xf32> to vector<512x256xf32>
    %6 = arith.mulf %4, %5 : vector<512x256xf32>
    %7 = vector.extract_strided_slice %1 {offsets = [0, 1], sizes = [512, 1], strides = [1, 1]} : vector<512x2xf32> to vector<512x1xf32>
    %8 = vector.extract_strided_slice %0 {offsets = [1, 0], sizes = [1, 256], strides = [1, 1]} : vector<2x256xf32> to vector<1x256xf32>
    %9 = vector.broadcast %7 : vector<512x1xf32> to vector<512x256xf32>
    %10 = vector.broadcast %8 : vector<1x256xf32> to vector<512x256xf32>
    %11 = arith.mulf %9, %10 : vector<512x256xf32>
    %12 = arith.addf %6, %11 : vector<512x256xf32>
    %c0_3 = arith.constant 0 : index
    %c0_4 = arith.constant 0 : index
    %13 = vector.load %arg3[%c0_3, %c0_4] : memref<512x1xf32, #tpu.memory_space<vmem>>, vector<512x1xf32>
    %14 = vector.broadcast %13 : vector<512x1xf32> to vector<512x256xf32>
    %15 = arith.addf %12, %14 : vector<512x256xf32>
    %cst = arith.constant 0.000000e+00 : f32
    %16 = vector.broadcast %cst : f32 to vector<512x256xf32>
    %17 = arith.maximumf %15, %16 : vector<512x256xf32>
    %c0_5 = arith.constant 0 : index
    %c0_6 = arith.constant 0 : index
    %18 = vector.load %arg4[%c0_5, %c0_6] : memref<512x512xbf16, #tpu.memory_space<vmem>>, vector<512x512xbf16>
    %19 = arith.truncf %17 : vector<512x256xf32> to vector<512x256xbf16>
    %cst_7 = arith.constant dense<0.000000e+00> : vector<512x256xf32>
    %20 = tpu.matmul %18, %19, %cst_7 {dimension_numbers = #tpu.dot_dimension_numbers<[1], [0], [0], [1], [0, 0, 1, 1], [], []>} : vector<512x512xbf16>, vector<512x256xbf16>, vector<512x256xf32> -> vector<512x256xf32>
    %c0_8 = arith.constant 0 : index
    %c0_9 = arith.constant 0 : index
    %21 = vector.load %arg5[%c0_8, %c0_9] : memref<512x1xf32, #tpu.memory_space<vmem>>, vector<512x1xf32>
    %22 = vector.broadcast %21 : vector<512x1xf32> to vector<512x256xf32>
    %23 = arith.addf %20, %22 : vector<512x256xf32>
    %cst_10 = arith.constant 0.000000e+00 : f32
    %24 = vector.broadcast %cst_10 : f32 to vector<512x256xf32>
    %25 = arith.maximumf %23, %24 : vector<512x256xf32>
    %c0_11 = arith.constant 0 : index
    %c0_12 = arith.constant 0 : index
    %26 = vector.load %arg6[%c0_11, %c0_12] : memref<512x512xbf16, #tpu.memory_space<vmem>>, vector<512x512xbf16>
    %27 = arith.truncf %25 : vector<512x256xf32> to vector<512x256xbf16>
    %cst_13 = arith.constant dense<0.000000e+00> : vector<512x256xf32>
    %28 = tpu.matmul %26, %27, %cst_13 {dimension_numbers = #tpu.dot_dimension_numbers<[1], [0], [0], [1], [0, 0, 1, 1], [], []>} : vector<512x512xbf16>, vector<512x256xbf16>, vector<512x256xf32> -> vector<512x256xf32>
    %c0_14 = arith.constant 0 : index
    %c0_15 = arith.constant 0 : index
    %29 = vector.load %arg7[%c0_14, %c0_15] : memref<512x1xf32, #tpu.memory_space<vmem>>, vector<512x1xf32>
    %30 = vector.broadcast %29 : vector<512x1xf32> to vector<512x256xf32>
    %31 = arith.addf %28, %30 : vector<512x256xf32>
    %cst_16 = arith.constant 0.000000e+00 : f32
    %32 = vector.broadcast %cst_16 : f32 to vector<512x256xf32>
    %33 = arith.maximumf %31, %32 : vector<512x256xf32>
    %c0_17 = arith.constant 0 : index
    %c0_18 = arith.constant 0 : index
    %34 = vector.load %arg8[%c0_17, %c0_18] : memref<8x512xbf16, #tpu.memory_space<vmem>>, vector<8x512xbf16>
    %35 = arith.truncf %33 : vector<512x256xf32> to vector<512x256xbf16>
    %cst_19 = arith.constant dense<0.000000e+00> : vector<8x256xf32>
    %36 = tpu.matmul %34, %35, %cst_19 {dimension_numbers = #tpu.dot_dimension_numbers<[1], [0], [0], [1], [0, 0, 1, 1], [], []>} : vector<8x512xbf16>, vector<512x256xbf16>, vector<8x256xf32> -> vector<8x256xf32>
    %c0_20 = arith.constant 0 : index
    %c0_21 = arith.constant 0 : index
    %37 = vector.load %arg9[%c0_20, %c0_21] : memref<8x1xf32, #tpu.memory_space<vmem>>, vector<8x1xf32>
    %38 = vector.broadcast %37 : vector<8x1xf32> to vector<8x256xf32>
    %39 = arith.addf %36, %38 : vector<8x256xf32>
    %c0_22 = arith.constant 0 : index
    %c0_23 = arith.constant 0 : index
    %40 = vector.load %arg10[%c0_22, %c0_23] : memref<8x256xf32, #tpu.memory_space<vmem>>, vector<8x256xf32>
    tpu.vector_store %arg10[%c0_22, %c0_23], %39 {strides = array<i32>} : memref<8x256xf32, #tpu.memory_space<vmem>>, vector<8x256xf32>,
    return
  }
  func.func @transform_0(%arg0: i32) -> (i32, i32) {
    %c0_i32 = arith.constant 0 : i32
    %c0_i32_0 = arith.constant 0 : i32
    return %c0_i32, %arg0 : i32, i32
  }
  func.func @transform_1(%arg0: i32) -> (i32, i32) {
    %c0_i32 = arith.constant 0 : i32
    %c0_i32_0 = arith.constant 0 : i32
    %c0_i32_1 = arith.constant 0 : i32
    return %c0_i32, %c0_i32_0 : i32, i32
  }
  func.func @transform_2(%arg0: i32) -> (i32, i32) {
    %c0_i32 = arith.constant 0 : i32
    %c0_i32_0 = arith.constant 0 : i32
    %c0_i32_1 = arith.constant 0 : i32
    return %c0_i32, %c0_i32_0 : i32, i32
  }
  func.func @transform_3(%arg0: i32) -> (i32, i32) {
    %c0_i32 = arith.constant 0 : i32
    %c0_i32_0 = arith.constant 0 : i32
    %c0_i32_1 = arith.constant 0 : i32
    return %c0_i32, %c0_i32_0 : i32, i32
  }
  func.func @transform_4(%arg0: i32) -> (i32, i32) {
    %c0_i32 = arith.constant 0 : i32
    %c0_i32_0 = arith.constant 0 : i32
    %c0_i32_1 = arith.constant 0 : i32
    return %c0_i32, %c0_i32_0 : i32, i32
  }
  func.func @transform_5(%arg0: i32) -> (i32, i32) {
    %c0_i32 = arith.constant 0 : i32
    %c0_i32_0 = arith.constant 0 : i32
    %c0_i32_1 = arith.constant 0 : i32
    return %c0_i32, %c0_i32_0 : i32, i32
  }
  func.func @transform_6(%arg0: i32) -> (i32, i32) {
    %c0_i32 = arith.constant 0 : i32
    %c0_i32_0 = arith.constant 0 : i32
    %c0_i32_1 = arith.constant 0 : i32
    return %c0_i32, %c0_i32_0 : i32, i32
  }
  func.func @transform_7(%arg0: i32) -> (i32, i32) {
    %c0_i32 = arith.constant 0 : i32
    %c0_i32_0 = arith.constant 0 : i32
    %c0_i32_1 = arith.constant 0 : i32
    return %c0_i32, %c0_i32_0 : i32, i32
  }
  func.func @transform_8(%arg0: i32) -> (i32, i32) {
    %c0_i32 = arith.constant 0 : i32
    %c0_i32_0 = arith.constant 0 : i32
    %c0_i32_1 = arith.constant 0 : i32
    return %c0_i32, %c0_i32_0 : i32, i32
  }
  func.func @transform_9(%arg0: i32) -> (i32, i32) {
    %c0_i32 = arith.constant 0 : i32
    %c0_i32_0 = arith.constant 0 : i32
    return %c0_i32, %arg0 : i32, i32
  }
}

</mosaic_0001>

<llo_original>
// kernel: mlnet_forward.1
$region0: #{mlnet_forward.1}
  #allocation0 [shape = 'u32[]', space=smem, size = 0x4, offset = 0x4, fixed_abs, tag = 'smem constant byte address 0x4 - core index']
  #allocation1 [shape = 'u32[144,128]{1,0:T(1,128)}', space=vmem, size = 0x12000, scoped, tag = 'internal scratch']
  %s0 = inlined_call_operand.hbm [shape: f32[2,512], index: 0, kind: input, shape index: {}]
  %s1 = inlined_call_operand.vmem [shape: f32[512,2], index: 1, kind: input, shape index: {}]
  %s2 = inlined_call_operand.vmem [shape: f32[512,1], index: 2, kind: input, shape index: {}]
  %s3 = inlined_call_operand.vmem [shape: bf16[512,512], index: 3, kind: input, shape index: {}]
  %s4 = inlined_call_operand.vmem [shape: f32[512,1], index: 4, kind: input, shape index: {}]
  %s5 = inlined_call_operand.vmem [shape: bf16[512,512], index: 5, kind: input, shape index: {}]
  %s6 = inlined_call_operand.vmem [shape: f32[512,1], index: 6, kind: input, shape index: {}]
  %s7 = inlined_call_operand.vmem [shape: bf16[8,512], index: 7, kind: input, shape index: {}]
  %s8 = inlined_call_operand.vmem [shape: f32[8,1], index: 8, kind: input, shape index: {}]
  %s9 = inlined_call_operand.vmem [shape: f32[8,512], index: 9, kind: output, shape index: {}]
  %s10 = sld [smem:[#allocation0]]
  $region73: #{mlnet_forward.1} parent=0
    _
  %s12 = ssub.s32 1, %s10
  %s13 = scalar_select 0, %s12, %s10
  $region1: #{mlnet_forward.1} parent=0
    #allocation2 [shape = 'u8[4096]{0}', space=vmem, size = 0x1000, scoped, tag = 'input window, operand 0']
    #allocation3 [shape = 's32[2]{0}', space=sflag, size = 0x8, scoped, tag = 'scoped memory for mlnet_forward.1']
    %14 = vsyncpa [#allocation3], 0
    %s15 = scalar_lea.sflag [#allocation3], 1
    %16 = vsyncpa %s15, 0
    loop: start=0, step=1, limit=4
    $region2: #{mlnet_forward.1} parent=1 // loop_pre_header
      _
    $region3: #{mlnet_forward.1} parent=1 // loop_header
      %s18 = sphi 0, %s22
      %p19 = scmp.ge.s32.totalorder %s18, 4
      %s28 = sphi 0, %s30
      %s31 = sphi 0, %s28
      %s32 = sphi 0, %s31
      %s48 = sphi 0, %s32
      %s52 = sphi 0, %s52
      %s54 = sphi 0, %s52
      %s55 = sphi 0, %s54
      %s69 = sphi 0, %s55
      %s73 = sphi 0, %s73
      %s75 = sphi 0, %s73
      %s76 = sphi 0, %s75
      %s90 = sphi 0, %s76
      %s94 = sphi 0, %s94
      %s96 = sphi 0, %s94
      %s97 = sphi 0, %s96
      %s111 = sphi 0, %s97
      %s115 = sphi 0, %s115
      %s117 = sphi 0, %s115
      %s118 = sphi 0, %s117
      %s132 = sphi 0, %s118
      %s136 = sphi 0, %s136
      %s138 = sphi 0, %s136
      %s139 = sphi 0, %s138
      %s153 = sphi 0, %s139
      %s157 = sphi 0, %s157
      %s159 = sphi 0, %s157
      %s160 = sphi 0, %s159
      %s174 = sphi 0, %s160
      %s178 = sphi 0, %s178
      %s180 = sphi 0, %s178
      %s181 = sphi 0, %s180
      %s195 = sphi 0, %s181
      %s199 = sphi 0, %s199
      %s201 = sphi 0, %s199
      %s202 = sphi 0, %s201
      %s216 = sphi 0, %s202
      %s222 = sphi 0, %s224
      %s225 = sphi 0, %s222
      %s226 = sphi 0, %s225
      %s242 = sphi 0, %s226
    $region4: #{mlnet_forward.1} parent=1 // loop_header_branch
      %21 = sbr.rel (%p19) target = $region8
    $region5: #{mlnet_forward.1} parent=1 // loop_body
      %s23 = ssub.s32 %s18, 1
      %s24 = ssub.s32 %s18, 2
      %s25 = sadd.s32 %s18, 1
      %s26 = ssub.s32 %s18, %s25
      %p27 = scmp.eq.s32.totalorder %s26, 0
      %s29 = sadd.s32 %s28, 1
      %s30 = scalar_select %p27, %s28, %s29
      %p33 = pneg %p27
      %p34 = scmp.eq.s32.totalorder %s18, 1
      %p35 = por %p33, %p34
      %p36 = scmp.ne.s32.totalorder %s28, %s31
      %p37 = scmp.eq.s32.totalorder %s18, 0
      %p38 = por %p36, %p37
      %p39 = scmp.ne.s32.totalorder %s28, %s31
      %p40 = scmp.eq.s32.totalorder %s23, 1
      %p41 = por %p39, %p40
      %p42 = scmp.ne.s32.totalorder %s31, %s32
      %p43 = scmp.eq.s32.totalorder %s23, 0
      %p44 = por %p42, %p43
      %p45 = scmp.ne.s32.totalorder %s31, %s32
      %p46 = scmp.eq.s32.totalorder %s24, 1
      %p47 = por %p45, %p46
      %p49 = scmp.ne.s32.totalorder %s32, %s48
      %p50 = scmp.eq.s32.totalorder %s24, 0
      %p51 = por %p49, %p50
      %s53 = sadd.s32 %s52, 1
      %p56 = scmp.eq.s32.totalorder %s18, 1
      %p57 = scmp.ne.s32.totalorder %s52, %s54
      %p58 = scmp.eq.s32.totalorder %s18, 0
      %p59 = por %p57, %p58
      %p60 = scmp.ne.s32.totalorder %s52, %s54
      %p61 = scmp.eq.s32.totalorder %s23, 1
      %p62 = por %p60, %p61
      %p63 = scmp.ne.s32.totalorder %s54, %s55
      %p64 = scmp.eq.s32.totalorder %s23, 0
      %p65 = por %p63, %p64
      %p66 = scmp.ne.s32.totalorder %s54, %s55
      %p67 = scmp.eq.s32.totalorder %s24, 1
      %p68 = por %p66, %p67
      %p70 = scmp.ne.s32.totalorder %s55, %s69
      %p71 = scmp.eq.s32.totalorder %s24, 0
      %p72 = por %p70, %p71
      %s74 = sadd.s32 %s73, 1
      %p77 = scmp.eq.s32.totalorder %s18, 1
      %p78 = scmp.ne.s32.totalorder %s73, %s75
      %p79 = scmp.eq.s32.totalorder %s18, 0
      %p80 = por %p78, %p79
      %p81 = scmp.ne.s32.totalorder %s73, %s75
      %p82 = scmp.eq.s32.totalorder %s23, 1
      %p83 = por %p81, %p82
      %p84 = scmp.ne.s32.totalorder %s75, %s76
      %p85 = scmp.eq.s32.totalorder %s23, 0
      %p86 = por %p84, %p85
      %p87 = scmp.ne.s32.totalorder %s75, %s76
      %p88 = scmp.eq.s32.totalorder %s24, 1
      %p89 = por %p87, %p88
      %p91 = scmp.ne.s32.totalorder %s76, %s90
      %p92 = scmp.eq.s32.totalorder %s24, 0
      %p93 = por %p91, %p92
      %s95 = sadd.s32 %s94, 1
      %p98 = scmp.eq.s32.totalorder %s18, 1
      %p99 = scmp.ne.s32.totalorder %s94, %s96
      %p100 = scmp.eq.s32.totalorder %s18, 0
      %p101 = por %p99, %p100
      %p102 = scmp.ne.s32.totalorder %s94, %s96
      %p103 = scmp.eq.s32.totalorder %s23, 1
      %p104 = por %p102, %p103
      %p105 = scmp.ne.s32.totalorder %s96, %s97
      %p106 = scmp.eq.s32.totalorder %s23, 0
      %p107 = por %p105, %p106
      %p108 = scmp.ne.s32.totalorder %s96, %s97
      %p109 = scmp.eq.s32.totalorder %s24, 1
      %p110 = por %p108, %p109
      %p112 = scmp.ne.s32.totalorder %s97, %s111
      %p113 = scmp.eq.s32.totalorder %s24, 0
      %p114 = por %p112, %p113
      %s116 = sadd.s32 %s115, 1
      %p119 = scmp.eq.s32.totalorder %s18, 1
      %p120 = scmp.ne.s32.totalorder %s115, %s117
      %p121 = scmp.eq.s32.totalorder %s18, 0
      %p122 = por %p120, %p121
      %p123 = scmp.ne.s32.totalorder %s115, %s117
      %p124 = scmp.eq.s32.totalorder %s23, 1
      %p125 = por %p123, %p124
      %p126 = scmp.ne.s32.totalorder %s117, %s118
      %p127 = scmp.eq.s32.totalorder %s23, 0
      %p128 = por %p126, %p127
      %p129 = scmp.ne.s32.totalorder %s117, %s118
      %p130 = scmp.eq.s32.totalorder %s24, 1
      %p131 = por %p129, %p130
      %p133 = scmp.ne.s32.totalorder %s118, %s132
      %p134 = scmp.eq.s32.totalorder %s24, 0
      %p135 = por %p133, %p134
      %s137 = sadd.s32 %s136, 1
      %p140 = scmp.eq.s32.totalorder %s18, 1
      %p141 = scmp.ne.s32.totalorder %s136, %s138
      %p142 = scmp.eq.s32.totalorder %s18, 0
      %p143 = por %p141, %p142
      %p144 = scmp.ne.s32.totalorder %s136, %s138
      %p145 = scmp.eq.s32.totalorder %s23, 1
      %p146 = por %p144, %p145
      %p147 = scmp.ne.s32.totalorder %s138, %s139
      %p148 = scmp.eq.s32.totalorder %s23, 0
      %p149 = por %p147, %p148
      %p150 = scmp.ne.s32.totalorder %s138, %s139
      %p151 = scmp.eq.s32.totalorder %s24, 1
      %p152 = por %p150, %p151
      %p154 = scmp.ne.s32.totalorder %s139, %s153
      %p155 = scmp.eq.s32.totalorder %s24, 0
      %p156 = por %p154, %p155
      %s158 = sadd.s32 %s157, 1
      %p161 = scmp.eq.s32.totalorder %s18, 1
      %p162 = scmp.ne.s32.totalorder %s157, %s159
      %p163 = scmp.eq.s32.totalorder %s18, 0
      %p164 = por %p162, %p163
      %p165 = scmp.ne.s32.totalorder %s157, %s159
      %p166 = scmp.eq.s32.totalorder %s23, 1
      %p167 = por %p165, %p166
      %p168 = scmp.ne.s32.totalorder %s159, %s160
      %p169 = scmp.eq.s32.totalorder %s23, 0
      %p170 = por %p168, %p169
      %p171 = scmp.ne.s32.totalorder %s159, %s160
      %p172 = scmp.eq.s32.totalorder %s24, 1
      %p173 = por %p171, %p172
      %p175 = scmp.ne.s32.totalorder %s160, %s174
      %p176 = scmp.eq.s32.totalorder %s24, 0
      %p177 = por %p175, %p176
      %s179 = sadd.s32 %s178, 1
      %p182 = scmp.eq.s32.totalorder %s18, 1
      %p183 = scmp.ne.s32.totalorder %s178, %s180
      %p184 = scmp.eq.s32.totalorder %s18, 0
      %p185 = por %p183, %p184
      %p186 = scmp.ne.s32.totalorder %s178, %s180
      %p187 = scmp.eq.s32.totalorder %s23, 1
      %p188 = por %p186, %p187
      %p189 = scmp.ne.s32.totalorder %s180, %s181
      %p190 = scmp.eq.s32.totalorder %s23, 0
      %p191 = por %p189, %p190
      %p192 = scmp.ne.s32.totalorder %s180, %s181
      %p193 = scmp.eq.s32.totalorder %s24, 1
      %p194 = por %p192, %p193
      %p196 = scmp.ne.s32.totalorder %s181, %s195
      %p197 = scmp.eq.s32.totalorder %s24, 0
      %p198 = por %p196, %p197
      %s200 = sadd.s32 %s199, 1
      %p203 = scmp.eq.s32.totalorder %s18, 1
      %p204 = scmp.ne.s32.totalorder %s199, %s201
      %p205 = scmp.eq.s32.totalorder %s18, 0
      %p206 = por %p204, %p205
      %p207 = scmp.ne.s32.totalorder %s199, %s201
      %p208 = scmp.eq.s32.totalorder %s23, 1
      %p209 = por %p207, %p208
      %p210 = scmp.ne.s32.totalorder %s201, %s202
      %p211 = scmp.eq.s32.totalorder %s23, 0
      %p212 = por %p210, %p211
      %p213 = scmp.ne.s32.totalorder %s201, %s202
      %p214 = scmp.eq.s32.totalorder %s24, 1
      %p215 = por %p213, %p214
      %p217 = scmp.ne.s32.totalorder %s202, %s216
      %p218 = scmp.eq.s32.totalorder %s24, 0
      %p219 = por %p217, %p218
      %s220 = ssub.s32 %s18, %s25
      %p221 = scmp.eq.s32.totalorder %s220, 0
      %s223 = sadd.s32 %s222, 1
      %s224 = scalar_select %p221, %s222, %s223
      %p227 = pneg %p221
      %p228 = scmp.eq.s32.totalorder %s18, 1
      %p229 = por %p227, %p228
      %p230 = scmp.ne.s32.totalorder %s222, %s225
      %p231 = scmp.eq.s32.totalorder %s18, 0
      %p232 = por %p230, %p231
      %p233 = scmp.ne.s32.totalorder %s222, %s225
      %p234 = scmp.eq.s32.totalorder %s23, 1
      %p235 = por %p233, %p234
      %p236 = scmp.ne.s32.totalorder %s225, %s226
      %p237 = scmp.eq.s32.totalorder %s23, 0
      %p238 = por %p236, %p237
      %p239 = scmp.ne.s32.totalorder %s225, %s226
      %p240 = scmp.eq.s32.totalorder %s24, 1
      %p241 = por %p239, %p240
      %p243 = scmp.ne.s32.totalorder %s226, %s242
      %p244 = scmp.eq.s32.totalorder %s24, 0
      %p245 = por %p243, %p244
      %p246 = scmp.le.s32.totalorder 1, %s18
      %p247 = scmp.lt.s32.totalorder %s18, 3
      %p248 = pnand %p246, %p247
      %p249 = pneg %p248
      // Predicated region
      $region9: #{mlnet_forward.1} parent=5 // pred_check
        _
      $region10: #{mlnet_forward.1} parent=5 // pred_check_branch
        %251 = sbr.rel (%p248) target = $region12
      $region11: #{mlnet_forward.1} parent=5 // pred_region
        %s252 = ssub.s32 %s18, 1
        // Predicated region
        $region13: #{mlnet_forward.1} parent=11 // pred_check
          %p253 = pneg %p65
        $region14: #{mlnet_forward.1} parent=11 // pred_check_branch
          %255 = sbr.rel (%p253) target = $region16
        $region15: #{mlnet_forward.1} parent=11 // pred_region
          _
        $region16: #{mlnet_forward.1} parent=11 // pred_fallthru
          _
        // Predicated region
        $region17: #{mlnet_forward.1} parent=11 // pred_check
          %p256 = pneg %p86
        $region18: #{mlnet_forward.1} parent=11 // pred_check_branch
          %258 = sbr.rel (%p256) target = $region20
        $region19: #{mlnet_forward.1} parent=11 // pred_region
          _
        $region20: #{mlnet_forward.1} parent=11 // pred_fallthru
          _
        // Predicated region
        $region21: #{mlnet_forward.1} parent=11 // pred_check
          %p259 = pneg %p107
        $region22: #{mlnet_forward.1} parent=11 // pred_check_branch
          %261 = sbr.rel (%p259) target = $region24
        $region23: #{mlnet_forward.1} parent=11 // pred_region
          _
        $region24: #{mlnet_forward.1} parent=11 // pred_fallthru
          _
        // Predicated region
        $region25: #{mlnet_forward.1} parent=11 // pred_check
          %p262 = pneg %p128
        $region26: #{mlnet_forward.1} parent=11 // pred_check_branch
          %264 = sbr.rel (%p262) target = $region28
        $region27: #{mlnet_forward.1} parent=11 // pred_region
          _
        $region28: #{mlnet_forward.1} parent=11 // pred_fallthru
          _
        // Predicated region
        $region29: #{mlnet_forward.1} parent=11 // pred_check
          %p265 = pneg %p149
        $region30: #{mlnet_forward.1} parent=11 // pred_check_branch
          %267 = sbr.rel (%p265) target = $region32
        $region31: #{mlnet_forward.1} parent=11 // pred_region
          _
        $region32: #{mlnet_forward.1} parent=11 // pred_fallthru
          _
        // Predicated region
        $region33: #{mlnet_forward.1} parent=11 // pred_check
          %p268 = pneg %p170
        $region34: #{mlnet_forward.1} parent=11 // pred_check_branch
          %270 = sbr.rel (%p268) target = $region36
        $region35: #{mlnet_forward.1} parent=11 // pred_region
          _
        $region36: #{mlnet_forward.1} parent=11 // pred_fallthru
          _
        // Predicated region
        $region37: #{mlnet_forward.1} parent=11 // pred_check
          %p271 = pneg %p191
        $region38: #{mlnet_forward.1} parent=11 // pred_check_branch
          %273 = sbr.rel (%p271) target = $region40
        $region39: #{mlnet_forward.1} parent=11 // pred_region
          _
        $region40: #{mlnet_forward.1} parent=11 // pred_fallthru
          _
        // Predicated region
        $region41: #{mlnet_forward.1} parent=11 // pred_check
          %p274 = pneg %p212
        $region42: #{mlnet_forward.1} parent=11 // pred_check_branch
          %276 = sbr.rel (%p274) target = $region44
        $region43: #{mlnet_forward.1} parent=11 // pred_region
          _
        $region44: #{mlnet_forward.1} parent=11 // pred_fallthru
          _
      $region12: #{mlnet_forward.1} parent=5 // pred_fallthru
        _
      %p277 = scmp.lt.s32.totalorder %s18, 2
      // Predicated region
      $region45: #{mlnet_forward.1} parent=5 // pred_check
        %p278 = pneg %p277
      $region46: #{mlnet_forward.1} parent=5 // pred_check_branch
        %280 = sbr.rel (%p278) target = $region48
      $region47: #{mlnet_forward.1} parent=5 // pred_region
        // Predicated region
        $region49: #{mlnet_forward.1} parent=47 // pred_check
          %p281 = pneg %p38
        $region50: #{mlnet_forward.1} parent=47 // pred_check_branch
          %283 = sbr.rel (%p281) target = $region52
        $region51: #{mlnet_forward.1} parent=47 // pred_region
          %s284 = sand.u32 %s28, 1
          %s285 = scalar_lea.sflag [#allocation3], %s284
          %s286 = sand.u32 %s28, 1
          %s287 = smul.addr %s286, 4
          %s288 = scalar_lea.vmem [#allocation2], %s287
          %s289 = smul.u32 2, %s18
          %s291 = ssub.s32 64, 64
          %292 = vsyncadd %s285, %s291
          %s293 = smul.addr %s289, 32
          %s294 = scalar_lea.hbm %s0, %s293
          %s296 = sshll.u32 %s288, 4
          %s297 = int_to_ptr.vmem [resolvable:$true] %s296
          %299 = dma.hbm_to_vmem [thread:$0]  %s294, 64, %s297, %s285
        $region52: #{mlnet_forward.1} parent=47 // pred_fallthru
          _
      $region48: #{mlnet_forward.1} parent=5 // pred_fallthru
        _
      %p300 = scmp.le.s32.totalorder 1, %s18
      %p301 = scmp.lt.s32.totalorder %s18, 3
      %p302 = pnand %p300, %p301
      %p303 = pneg %p302
      // Predicated region
      $region53: #{mlnet_forward.1} parent=5 // pred_check
        _
      $region54: #{mlnet_forward.1} parent=5 // pred_check_branch
        %305 = sbr.rel (%p302) target = $region56
      $region55: #{mlnet_forward.1} parent=5 // pred_region
        %s306 = ssub.s32 %s18, 1
        %s307 = sand.u32 %s31, 1
        %s308 = scalar_lea.sflag [#allocation3], %s307
        %s309 = sand.u32 %s31, 1
        %s310 = smul.addr %s309, 4
        %s311 = scalar_lea.vmem [#allocation2], %s310
        // Predicated region
        $region57: #{mlnet_forward.1} parent=55 // pred_check
          %p312 = pneg %p44
        $region58: #{mlnet_forward.1} parent=55 // pred_check_branch
          %314 = sbr.rel (%p312) target = $region60
        $region59: #{mlnet_forward.1} parent=55 // pred_region
          %315 = dma.done %s308, 64
        $region60: #{mlnet_forward.1} parent=55 // pred_fallthru
          _
        %s316 = sand.u32 %s31, 1
        %s317 = scalar_lea.sflag [#allocation3], %s316
        %s318 = sand.u32 %s31, 1
        %s319 = smul.addr %s318, 4
        %s320 = scalar_lea.vmem [#allocation2], %s319
        %p321 = pneg %p44
        %p322 = pneg %p41
        %p323 = pneg %p65
        %p324 = pneg %p62
        %p325 = pneg %p86
        %p326 = pneg %p83
        %p327 = pneg %p107
        %p328 = pneg %p104
        %p329 = pneg %p128
        %p330 = pneg %p125
        %p331 = pneg %p149
        %p332 = pneg %p146
        %p333 = pneg %p170
        %p334 = pneg %p167
        %p335 = pneg %p191
        %p336 = pneg %p188
        %p337 = pneg %p212
        %p338 = pneg %p209
        %p339 = pneg %p238
        %p340 = pneg %p235
        %s341 = smul.u32 2, %s23
        %p342 = scmp.lt.s32.totalorder %s341, 3
        %s343 = scalar_select %p342, %s341, 3
        %s344 = smul.addr %s343, 8
        %s345 = scalar_lea.vmem %s9, %s344
        %s346 = smul.u32 2, %s23
        %s347 = smul.u32 2, %s23
        %p348 = scmp.lt.s32.totalorder %s347, 3
        %s349 = scalar_select %p348, %s347, 3
        %s350 = smul.addr %s349, 8
        %s351 = scalar_lea.vmem %s9, %s350
        %s352 = smul.u32 2, %s23
        %v353 = vld [vmem:[%s311] sm:$0xf]
        %v354 = vld [vmem:[%s1] sm:$0xff]
        %v355 = vld [vmem:[%s1 + $0x8] sm:$0xff]
        %v356 = vld [vmem:[%s1 + $0x10] sm:$0xff]
        %v357 = vld [vmem:[%s1 + $0x18] sm:$0xff]
        %v358 = vld [vmem:[%s1 + $0x20] sm:$0xff]
        %v359 = vld [vmem:[%s1 + $0x28] sm:$0xff]
        %v360 = vld [vmem:[%s1 + $0x30] sm:$0xff]
        %v361 = vld [vmem:[%s1 + $0x38] sm:$0xff]
        %v362 = vld [vmem:[%s1 + $0x40] sm:$0xff]
        %v363 = vld [vmem:[%s1 + $0x48] sm:$0xff]
        %v364 = vld [vmem:[%s1 + $0x50] sm:$0xff]
        %v365 = vld [vmem:[%s1 + $0x58] sm:$0xff]
        %v366 = vld [vmem:[%s1 + $0x60] sm:$0xff]
        %v367 = vld [vmem:[%s1 + $0x68] sm:$0xff]
        %v368 = vld [vmem:[%s1 + $0x70] sm:$0xff]
        %v369 = vld [vmem:[%s1 + $0x78] sm:$0xff]
        %v370 = vld [vmem:[%s1 + $0x80] sm:$0xff]
        %v371 = vld [vmem:[%s1 + $0x88] sm:$0xff]
        %v372 = vld [vmem:[%s1 + $0x90] sm:$0xff]
        %v373 = vld [vmem:[%s1 + $0x98] sm:$0xff]
        %v374 = vld [vmem:[%s1 + $0xa0] sm:$0xff]
        %v375 = vld [vmem:[%s1 + $0xa8] sm:$0xff]
        %v376 = vld [vmem:[%s1 + $0xb0] sm:$0xff]
        %v377 = vld [vmem:[%s1 + $0xb8] sm:$0xff]
        %v378 = vld [vmem:[%s1 + $0xc0] sm:$0xff]
        %v379 = vld [vmem:[%s1 + $0xc8] sm:$0xff]
        %v380 = vld [vmem:[%s1 + $0xd0] sm:$0xff]
        %v381 = vld [vmem:[%s1 + $0xd8] sm:$0xff]
        %v382 = vld [vmem:[%s1 + $0xe0] sm:$0xff]
        %v383 = vld [vmem:[%s1 + $0xe8] sm:$0xff]
        %v384 = vld [vmem:[%s1 + $0xf0] sm:$0xff]
        %v385 = vld [vmem:[%s1 + $0xf8] sm:$0xff]
        %v386 = vld [vmem:[%s1 + $0x100] sm:$0xff]
        %v387 = vld [vmem:[%s1 + $0x108] sm:$0xff]
        %v388 = vld [vmem:[%s1 + $0x110] sm:$0xff]
        %v389 = vld [vmem:[%s1 + $0x118] sm:$0xff]
        %v390 = vld [vmem:[%s1 + $0x120] sm:$0xff]
        %v391 = vld [vmem:[%s1 + $0x128] sm:$0xff]
        %v392 = vld [vmem:[%s1 + $0x130] sm:$0xff]
        %v393 = vld [vmem:[%s1 + $0x138] sm:$0xff]
        %v394 = vld [vmem:[%s1 + $0x140] sm:$0xff]
        %v395 = vld [vmem:[%s1 + $0x148] sm:$0xff]
        %v396 = vld [vmem:[%s1 + $0x150] sm:$0xff]
        %v397 = vld [vmem:[%s1 + $0x158] sm:$0xff]
        %v398 = vld [vmem:[%s1 + $0x160] sm:$0xff]
        %v399 = vld [vmem:[%s1 + $0x168] sm:$0xff]
        %v400 = vld [vmem:[%s1 + $0x170] sm:$0xff]
        %v401 = vld [vmem:[%s1 + $0x178] sm:$0xff]
        %v402 = vld [vmem:[%s1 + $0x180] sm:$0xff]
        %v403 = vld [vmem:[%s1 + $0x188] sm:$0xff]
        %v404 = vld [vmem:[%s1 + $0x190] sm:$0xff]
        %v405 = vld [vmem:[%s1 + $0x198] sm:$0xff]
        %v406 = vld [vmem:[%s1 + $0x1a0] sm:$0xff]
        %v407 = vld [vmem:[%s1 + $0x1a8] sm:$0xff]
        %v408 = vld [vmem:[%s1 + $0x1b0] sm:$0xff]
        %v409 = vld [vmem:[%s1 + $0x1b8] sm:$0xff]
        %v410 = vld [vmem:[%s1 + $0x1c0] sm:$0xff]
        %v411 = vld [vmem:[%s1 + $0x1c8] sm:$0xff]
        %v412 = vld [vmem:[%s1 + $0x1d0] sm:$0xff]
        %v413 = vld [vmem:[%s1 + $0x1d8] sm:$0xff]
        %v414 = vld [vmem:[%s1 + $0x1e0] sm:$0xff]
        %v415 = vld [vmem:[%s1 + $0x1e8] sm:$0xff]
        %v416 = vld [vmem:[%s1 + $0x1f0] sm:$0xff]
        %v417 = vld [vmem:[%s1 + $0x1f8] sm:$0xff]
        %419 = vset.pattern.permute.xlu0 0
        %420 = vperm.xlu0 %419, %v354
        %v421 = vpop.permute.xlu0 %420
        %424 = vset.pattern.permute.xlu0 0
        %425 = vperm.xlu0 %424, %v355
        %v426 = vpop.permute.xlu0 %425
        %429 = vset.pattern.permute.xlu0 0
        %430 = vperm.xlu0 %429, %v356
        %v431 = vpop.permute.xlu0 %430
        %434 = vset.pattern.permute.xlu0 0
        %435 = vperm.xlu0 %434, %v357
        %v436 = vpop.permute.xlu0 %435
        %439 = vset.pattern.permute.xlu0 0
        %440 = vperm.xlu0 %439, %v358
        %v441 = vpop.permute.xlu0 %440
        %444 = vset.pattern.permute.xlu0 0
        %445 = vperm.xlu0 %444, %v359
        %v446 = vpop.permute.xlu0 %445
        %449 = vset.pattern.permute.xlu0 0
        %450 = vperm.xlu0 %449, %v360
        %v451 = vpop.permute.xlu0 %450
        %454 = vset.pattern.permute.xlu0 0
        %455 = vperm.xlu0 %454, %v361
        %v456 = vpop.permute.xlu0 %455
        %459 = vset.pattern.permute.xlu0 0
        %460 = vperm.xlu0 %459, %v362
        %v461 = vpop.permute.xlu0 %460
        %464 = vset.pattern.permute.xlu0 0
        %465 = vperm.xlu0 %464, %v363
        %v466 = vpop.permute.xlu0 %465
        %469 = vset.pattern.permute.xlu0 0
        %470 = vperm.xlu0 %469, %v364
        %v471 = vpop.permute.xlu0 %470
        %474 = vset.pattern.permute.xlu0 0
        %475 = vperm.xlu0 %474, %v365
        %v476 = vpop.permute.xlu0 %475
        %479 = vset.pattern.permute.xlu0 0
        %480 = vperm.xlu0 %479, %v366
        %v481 = vpop.permute.xlu0 %480
        %484 = vset.pattern.permute.xlu0 0
        %485 = vperm.xlu0 %484, %v367
        %v486 = vpop.permute.xlu0 %485
        %489 = vset.pattern.permute.xlu0 0
        %490 = vperm.xlu0 %489, %v368
        %v491 = vpop.permute.xlu0 %490
        %494 = vset.pattern.permute.xlu0 0
        %495 = vperm.xlu0 %494, %v369
        %v496 = vpop.permute.xlu0 %495
        %499 = vset.pattern.permute.xlu0 0
        %500 = vperm.xlu0 %499, %v370
        %v501 = vpop.permute.xlu0 %500
        %504 = vset.pattern.permute.xlu0 0
        %505 = vperm.xlu0 %504, %v371
        %v506 = vpop.permute.xlu0 %505
        %509 = vset.pattern.permute.xlu0 0
        %510 = vperm.xlu0 %509, %v372
        %v511 = vpop.permute.xlu0 %510
        %514 = vset.pattern.permute.xlu0 0
        %515 = vperm.xlu0 %514, %v373
        %v516 = vpop.permute.xlu0 %515
        %519 = vset.pattern.permute.xlu0 0
        %520 = vperm.xlu0 %519, %v374
        %v521 = vpop.permute.xlu0 %520
        %524 = vset.pattern.permute.xlu0 0
        %525 = vperm.xlu0 %524, %v375
        %v526 = vpop.permute.xlu0 %525
        %529 = vset.pattern.permute.xlu0 0
        %530 = vperm.xlu0 %529, %v376
        %v531 = vpop.permute.xlu0 %530
        %534 = vset.pattern.permute.xlu0 0
        %535 = vperm.xlu0 %534, %v377
        %v536 = vpop.permute.xlu0 %535
        %539 = vset.pattern.permute.xlu0 0
        %540 = vperm.xlu0 %539, %v378
        %v541 = vpop.permute.xlu0 %540
        %544 = vset.pattern.permute.xlu0 0
        %545 = vperm.xlu0 %544, %v379
        %v546 = vpop.permute.xlu0 %545
        %549 = vset.pattern.permute.xlu0 0
        %550 = vperm.xlu0 %549, %v380
        %v551 = vpop.permute.xlu0 %550
        %554 = vset.pattern.permute.xlu0 0
        %555 = vperm.xlu0 %554, %v381
        %v556 = vpop.permute.xlu0 %555
        %559 = vset.pattern.permute.xlu0 0
        %560 = vperm.xlu0 %559, %v382
        %v561 = vpop.permute.xlu0 %560
        %564 = vset.pattern.permute.xlu0 0
        %565 = vperm.xlu0 %564, %v383
        %v566 = vpop.permute.xlu0 %565
        %569 = vset.pattern.permute.xlu0 0
        %570 = vperm.xlu0 %569, %v384
        %v571 = vpop.permute.xlu0 %570
        %574 = vset.pattern.permute.xlu0 0
        %575 = vperm.xlu0 %574, %v385
        %v576 = vpop.permute.xlu0 %575
        %579 = vset.pattern.permute.xlu0 0
        %580 = vperm.xlu0 %579, %v386
        %v581 = vpop.permute.xlu0 %580
        %584 = vset.pattern.permute.xlu0 0
        %585 = vperm.xlu0 %584, %v387
        %v586 = vpop.permute.xlu0 %585
        %589 = vset.pattern.permute.xlu0 0
        %590 = vperm.xlu0 %589, %v388
        %v591 = vpop.permute.xlu0 %590
        %594 = vset.pattern.permute.xlu0 0
        %595 = vperm.xlu0 %594, %v389
        %v596 = vpop.permute.xlu0 %595
        %599 = vset.pattern.permute.xlu0 0
        %600 = vperm.xlu0 %599, %v390
        %v601 = vpop.permute.xlu0 %600
        %604 = vset.pattern.permute.xlu0 0
        %605 = vperm.xlu0 %604, %v391
        %v606 = vpop.permute.xlu0 %605
        %609 = vset.pattern.permute.xlu0 0
        %610 = vperm.xlu0 %609, %v392
        %v611 = vpop.permute.xlu0 %610
        %614 = vset.pattern.permute.xlu0 0
        %615 = vperm.xlu0 %614, %v393
        %v616 = vpop.permute.xlu0 %615
        %619 = vset.pattern.permute.xlu0 0
        %620 = vperm.xlu0 %619, %v394
        %v621 = vpop.permute.xlu0 %620
        %624 = vset.pattern.permute.xlu0 0
        %625 = vperm.xlu0 %624, %v395
        %v626 = vpop.permute.xlu0 %625
        %629 = vset.pattern.permute.xlu0 0
        %630 = vperm.xlu0 %629, %v396
        %v631 = vpop.permute.xlu0 %630
        %634 = vset.pattern.permute.xlu0 0
        %635 = vperm.xlu0 %634, %v397
        %v636 = vpop.permute.xlu0 %635
        %639 = vset.pattern.permute.xlu0 0
        %640 = vperm.xlu0 %639, %v398
        %v641 = vpop.permute.xlu0 %640
        %644 = vset.pattern.permute.xlu0 0
        %645 = vperm.xlu0 %644, %v399
        %v646 = vpop.permute.xlu0 %645
        %649 = vset.pattern.permute.xlu0 0
        %650 = vperm.xlu0 %649, %v400
        %v651 = vpop.permute.xlu0 %650
        %654 = vset.pattern.permute.xlu0 0
        %655 = vperm.xlu0 %654, %v401
        %v656 = vpop.permute.xlu0 %655
        %659 = vset.pattern.permute.xlu0 0
        %660 = vperm.xlu0 %659, %v402
        %v661 = vpop.permute.xlu0 %660
        %664 = vset.pattern.permute.xlu0 0
        %665 = vperm.xlu0 %664, %v403
        %v666 = vpop.permute.xlu0 %665
        %669 = vset.pattern.permute.xlu0 0
        %670 = vperm.xlu0 %669, %v404
        %v671 = vpop.permute.xlu0 %670
        %674 = vset.pattern.permute.xlu0 0
        %675 = vperm.xlu0 %674, %v405
        %v676 = vpop.permute.xlu0 %675
        %679 = vset.pattern.permute.xlu0 0
        %680 = vperm.xlu0 %679, %v406
        %v681 = vpop.permute.xlu0 %680
        %684 = vset.pattern.permute.xlu0 0
        %685 = vperm.xlu0 %684, %v407
        %v686 = vpop.permute.xlu0 %685
        %689 = vset.pattern.permute.xlu0 0
        %690 = vperm.xlu0 %689, %v408
        %v691 = vpop.permute.xlu0 %690
        %694 = vset.pattern.permute.xlu0 0
        %695 = vperm.xlu0 %694, %v409
        %v696 = vpop.permute.xlu0 %695
        %699 = vset.pattern.permute.xlu0 0
        %700 = vperm.xlu0 %699, %v410
        %v701 = vpop.permute.xlu0 %700
        %704 = vset.pattern.permute.xlu0 0
        %705 = vperm.xlu0 %704, %v411
        %v706 = vpop.permute.xlu0 %705
        %709 = vset.pattern.permute.xlu0 0
        %710 = vperm.xlu0 %709, %v412
        %v711 = vpop.permute.xlu0 %710
        %714 = vset.pattern.permute.xlu0 0
        %715 = vperm.xlu0 %714, %v413
        %v716 = vpop.permute.xlu0 %715
        %719 = vset.pattern.permute.xlu0 0
        %720 = vperm.xlu0 %719, %v414
        %v721 = vpop.permute.xlu0 %720
        %724 = vset.pattern.permute.xlu0 0
        %725 = vperm.xlu0 %724, %v415
        %v726 = vpop.permute.xlu0 %725
        %729 = vset.pattern.permute.xlu0 0
        %730 = vperm.xlu0 %729, %v416
        %v731 = vpop.permute.xlu0 %730
        %734 = vset.pattern.permute.xlu0 0
        %735 = vperm.xlu0 %734, %v417
        %v736 = vpop.permute.xlu0 %735
        %v739 = vlaneseq
        %v740 = vshrl.u32 %v739, 7
        %v741 = vsub.s32 0, %v740
        %v742 = vrot.slane %v353, %v741
        %v743 = vlaneseq
        %v744 = vshrl.u32 %v743, 7
        %v745 = vsub.s32 2, %v744
        %v746 = vrot.slane %v353, %v745
        %v749 = vlaneseq
        %v750 = vshrl.u32 %v749, 7
        %v751 = vsub.s32 0, %v750
        %v752 = vrot.slane %v742, %v751
        %v753 = vlaneseq
        %v754 = vshrl.u32 %v753, 7
        %v755 = vsub.s32 0, %v754
        %v756 = vrot.slane %v746, %v755
        %v757 = vmul.f32 %v421, %v752
        %v758 = vmul.f32 %v421, %v756
        %v759 = vmul.f32 %v426, %v752
        %v760 = vmul.f32 %v426, %v756
        %v761 = vmul.f32 %v431, %v752
        %v762 = vmul.f32 %v431, %v756
        %v763 = vmul.f32 %v436, %v752
        %v764 = vmul.f32 %v436, %v756
        %v765 = vmul.f32 %v441, %v752
        %v766 = vmul.f32 %v441, %v756
        %v767 = vmul.f32 %v446, %v752
        %v768 = vmul.f32 %v446, %v756
        %v769 = vmul.f32 %v451, %v752
        %v770 = vmul.f32 %v451, %v756
        %v771 = vmul.f32 %v456, %v752
        %v772 = vmul.f32 %v456, %v756
        %v773 = vmul.f32 %v461, %v752
        %v774 = vmul.f32 %v461, %v756
        %v775 = vmul.f32 %v466, %v752
        %v776 = vmul.f32 %v466, %v756
        %v777 = vmul.f32 %v471, %v752
        %v778 = vmul.f32 %v471, %v756
        %v779 = vmul.f32 %v476, %v752
        %v780 = vmul.f32 %v476, %v756
        %v781 = vmul.f32 %v481, %v752
        %v782 = vmul.f32 %v481, %v756
        %v783 = vmul.f32 %v486, %v752
        %v784 = vmul.f32 %v486, %v756
        %v785 = vmul.f32 %v491, %v752
        %v786 = vmul.f32 %v491, %v756
        %v787 = vmul.f32 %v496, %v752
        %v788 = vmul.f32 %v496, %v756
        %v789 = vmul.f32 %v501, %v752
        %v790 = vmul.f32 %v501, %v756
        %v791 = vmul.f32 %v506, %v752
        %v792 = vmul.f32 %v506, %v756
        %v793 = vmul.f32 %v511, %v752
        %v794 = vmul.f32 %v511, %v756
        %v795 = vmul.f32 %v516, %v752
        %v796 = vmul.f32 %v516, %v756
        %v797 = vmul.f32 %v521, %v752
        %v798 = vmul.f32 %v521, %v756
        %v799 = vmul.f32 %v526, %v752
        %v800 = vmul.f32 %v526, %v756
        %v801 = vmul.f32 %v531, %v752
        %v802 = vmul.f32 %v531, %v756
        %v803 = vmul.f32 %v536, %v752
        %v804 = vmul.f32 %v536, %v756
        %v805 = vmul.f32 %v541, %v752
        %v806 = vmul.f32 %v541, %v756
        %v807 = vmul.f32 %v546, %v752
        %v808 = vmul.f32 %v546, %v756
        %v809 = vmul.f32 %v551, %v752
        %v810 = vmul.f32 %v551, %v756
        %v811 = vmul.f32 %v556, %v752
        %v812 = vmul.f32 %v556, %v756
        %v813 = vmul.f32 %v561, %v752
        %v814 = vmul.f32 %v561, %v756
        %v815 = vmul.f32 %v566, %v752
        %v816 = vmul.f32 %v566, %v756
        %v817 = vmul.f32 %v571, %v752
        %v818 = vmul.f32 %v571, %v756
        %v819 = vmul.f32 %v576, %v752
        %v820 = vmul.f32 %v576, %v756
        %v821 = vmul.f32 %v581, %v752
        %v822 = vmul.f32 %v581, %v756
        %v823 = vmul.f32 %v586, %v752
        %v824 = vmul.f32 %v586, %v756
        %v825 = vmul.f32 %v591, %v752
        %v826 = vmul.f32 %v591, %v756
        %v827 = vmul.f32 %v596, %v752
        %v828 = vmul.f32 %v596, %v756
        %v829 = vmul.f32 %v601, %v752
        %v830 = vmul.f32 %v601, %v756
        %v831 = vmul.f32 %v606, %v752
        %v832 = vmul.f32 %v606, %v756
        %v833 = vmul.f32 %v611, %v752
        %v834 = vmul.f32 %v611, %v756
        %v835 = vmul.f32 %v616, %v752
        %v836 = vmul.f32 %v616, %v756
        %v837 = vmul.f32 %v621, %v752
        %v838 = vmul.f32 %v621, %v756
        %v839 = vmul.f32 %v626, %v752
        %v840 = vmul.f32 %v626, %v756
        %v841 = vmul.f32 %v631, %v752
        %v842 = vmul.f32 %v631, %v756
        %v843 = vmul.f32 %v636, %v752
        %v844 = vmul.f32 %v636, %v756
        %v845 = vmul.f32 %v641, %v752
        %v846 = vmul.f32 %v641, %v756
        %v847 = vmul.f32 %v646, %v752
        %v848 = vmul.f32 %v646, %v756
        %v849 = vmul.f32 %v651, %v752
        %v850 = vmul.f32 %v651, %v756
        %v851 = vmul.f32 %v656, %v752
        %v852 = vmul.f32 %v656, %v756
        %v853 = vmul.f32 %v661, %v752
        %v854 = vmul.f32 %v661, %v756
        %v855 = vmul.f32 %v666, %v752
        %v856 = vmul.f32 %v666, %v756
        %v857 = vmul.f32 %v671, %v752
        %v858 = vmul.f32 %v671, %v756
        %v859 = vmul.f32 %v676, %v752
        %v860 = vmul.f32 %v676, %v756
        %v861 = vmul.f32 %v681, %v752
        %v862 = vmul.f32 %v681, %v756
        %v863 = vmul.f32 %v686, %v752
        %v864 = vmul.f32 %v686, %v756
        %v865 = vmul.f32 %v691, %v752
        %v866 = vmul.f32 %v691, %v756
        %v867 = vmul.f32 %v696, %v752
        %v868 = vmul.f32 %v696, %v756
        %v869 = vmul.f32 %v701, %v752
        %v870 = vmul.f32 %v701, %v756
        %v871 = vmul.f32 %v706, %v752
        %v872 = vmul.f32 %v706, %v756
        %v873 = vmul.f32 %v711, %v752
        %v874 = vmul.f32 %v711, %v756
        %v875 = vmul.f32 %v716, %v752
        %v876 = vmul.f32 %v716, %v756
        %v877 = vmul.f32 %v721, %v752
        %v878 = vmul.f32 %v721, %v756
        %v879 = vmul.f32 %v726, %v752
        %v880 = vmul.f32 %v726, %v756
        %v881 = vmul.f32 %v731, %v752
        %v882 = vmul.f32 %v731, %v756
        %v883 = vmul.f32 %v736, %v752
        %v884 = vmul.f32 %v736, %v756
        %885 = vset.pattern.permute.xlu0 1
        %886 = vperm.xlu0 %885, %v354
        %v887 = vpop.permute.xlu0 %886
        %889 = vset.pattern.permute.xlu0 1
        %890 = vperm.xlu0 %889, %v355
        %v891 = vpop.permute.xlu0 %890
        %893 = vset.pattern.permute.xlu0 1
        %894 = vperm.xlu0 %893, %v356
        %v895 = vpop.permute.xlu0 %894
        %897 = vset.pattern.permute.xlu0 1
        %898 = vperm.xlu0 %897, %v357
        %v899 = vpop.permute.xlu0 %898
        %901 = vset.pattern.permute.xlu0 1
        %902 = vperm.xlu0 %901, %v358
        %v903 = vpop.permute.xlu0 %902
        %905 = vset.pattern.permute.xlu0 1
        %906 = vperm.xlu0 %905, %v359
        %v907 = vpop.permute.xlu0 %906
        %909 = vset.pattern.permute.xlu0 1
        %910 = vperm.xlu0 %909, %v360
        %v911 = vpop.permute.xlu0 %910
        %913 = vset.pattern.permute.xlu0 1
        %914 = vperm.xlu0 %913, %v361
        %v915 = vpop.permute.xlu0 %914
        %917 = vset.pattern.permute.xlu0 1
        %918 = vperm.xlu0 %917, %v362
        %v919 = vpop.permute.xlu0 %918
        %921 = vset.pattern.permute.xlu0 1
        %922 = vperm.xlu0 %921, %v363
        %v923 = vpop.permute.xlu0 %922
        %925 = vset.pattern.permute.xlu0 1
        %926 = vperm.xlu0 %925, %v364
        %v927 = vpop.permute.xlu0 %926
        %929 = vset.pattern.permute.xlu0 1
        %930 = vperm.xlu0 %929, %v365
        %v931 = vpop.permute.xlu0 %930
        %933 = vset.pattern.permute.xlu0 1
        %934 = vperm.xlu0 %933, %v366
        %v935 = vpop.permute.xlu0 %934
        %937 = vset.pattern.permute.xlu0 1
        %938 = vperm.xlu0 %937, %v367
        %v939 = vpop.permute.xlu0 %938
        %941 = vset.pattern.permute.xlu0 1
        %942 = vperm.xlu0 %941, %v368
        %v943 = vpop.permute.xlu0 %942
        %945 = vset.pattern.permute.xlu0 1
        %946 = vperm.xlu0 %945, %v369
        %v947 = vpop.permute.xlu0 %946
        %949 = vset.pattern.permute.xlu0 1
        %950 = vperm.xlu0 %949, %v370
        %v951 = vpop.permute.xlu0 %950
        %953 = vset.pattern.permute.xlu0 1
        %954 = vperm.xlu0 %953, %v371
        %v955 = vpop.permute.xlu0 %954
        %957 = vset.pattern.permute.xlu0 1
        %958 = vperm.xlu0 %957, %v372
        %v959 = vpop.permute.xlu0 %958
        %961 = vset.pattern.permute.xlu0 1
        %962 = vperm.xlu0 %961, %v373
        %v963 = vpop.permute.xlu0 %962
        %965 = vset.pattern.permute.xlu0 1
        %966 = vperm.xlu0 %965, %v374
        %v967 = vpop.permute.xlu0 %966
        %969 = vset.pattern.permute.xlu0 1
        %970 = vperm.xlu0 %969, %v375
        %v971 = vpop.permute.xlu0 %970
        %973 = vset.pattern.permute.xlu0 1
        %974 = vperm.xlu0 %973, %v376
        %v975 = vpop.permute.xlu0 %974
        %977 = vset.pattern.permute.xlu0 1
        %978 = vperm.xlu0 %977, %v377
        %v979 = vpop.permute.xlu0 %978
        %981 = vset.pattern.permute.xlu0 1
        %982 = vperm.xlu0 %981, %v378
        %v983 = vpop.permute.xlu0 %982
        %985 = vset.pattern.permute.xlu0 1
        %986 = vperm.xlu0 %985, %v379
        %v987 = vpop.permute.xlu0 %986
        %989 = vset.pattern.permute.xlu0 1
        %990 = vperm.xlu0 %989, %v380
        %v991 = vpop.permute.xlu0 %990
        %993 = vset.pattern.permute.xlu0 1
        %994 = vperm.xlu0 %993, %v381
        %v995 = vpop.permute.xlu0 %994
        %997 = vset.pattern.permute.xlu0 1
        %998 = vperm.xlu0 %997, %v382
        %v999 = vpop.permute.xlu0 %998
        %1001 = vset.pattern.permute.xlu0 1
        %1002 = vperm.xlu0 %1001, %v383
        %v1003 = vpop.permute.xlu0 %1002
        %1005 = vset.pattern.permute.xlu0 1
        %1006 = vperm.xlu0 %1005, %v384
        %v1007 = vpop.permute.xlu0 %1006
        %1009 = vset.pattern.permute.xlu0 1
        %1010 = vperm.xlu0 %1009, %v385
        %v1011 = vpop.permute.xlu0 %1010
        %1013 = vset.pattern.permute.xlu0 1
        %1014 = vperm.xlu0 %1013, %v386
        %v1015 = vpop.permute.xlu0 %1014
        %1017 = vset.pattern.permute.xlu0 1
        %1018 = vperm.xlu0 %1017, %v387
        %v1019 = vpop.permute.xlu0 %1018
        %1021 = vset.pattern.permute.xlu0 1
        %1022 = vperm.xlu0 %1021, %v388
        %v1023 = vpop.permute.xlu0 %1022
        %1025 = vset.pattern.permute.xlu0 1
        %1026 = vperm.xlu0 %1025, %v389
        %v1027 = vpop.permute.xlu0 %1026
        %1029 = vset.pattern.permute.xlu0 1
        %1030 = vperm.xlu0 %1029, %v390
        %v1031 = vpop.permute.xlu0 %1030
        %1033 = vset.pattern.permute.xlu0 1
        %1034 = vperm.xlu0 %1033, %v391
        %v1035 = vpop.permute.xlu0 %1034
        %1037 = vset.pattern.permute.xlu0 1
        %1038 = vperm.xlu0 %1037, %v392
        %v1039 = vpop.permute.xlu0 %1038
        %1041 = vset.pattern.permute.xlu0 1
        %1042 = vperm.xlu0 %1041, %v393
        %v1043 = vpop.permute.xlu0 %1042
        %1045 = vset.pattern.permute.xlu0 1
        %1046 = vperm.xlu0 %1045, %v394
        %v1047 = vpop.permute.xlu0 %1046
        %1049 = vset.pattern.permute.xlu0 1
        %1050 = vperm.xlu0 %1049, %v395
        %v1051 = vpop.permute.xlu0 %1050
        %1053 = vset.pattern.permute.xlu0 1
        %1054 = vperm.xlu0 %1053, %v396
        %v1055 = vpop.permute.xlu0 %1054
        %1057 = vset.pattern.permute.xlu0 1
        %1058 = vperm.xlu0 %1057, %v397
        %v1059 = vpop.permute.xlu0 %1058
        %1061 = vset.pattern.permute.xlu0 1
        %1062 = vperm.xlu0 %1061, %v398
        %v1063 = vpop.permute.xlu0 %1062
        %1065 = vset.pattern.permute.xlu0 1
        %1066 = vperm.xlu0 %1065, %v399
        %v1067 = vpop.permute.xlu0 %1066
        %1069 = vset.pattern.permute.xlu0 1
        %1070 = vperm.xlu0 %1069, %v400
        %v1071 = vpop.permute.xlu0 %1070
        %1073 = vset.pattern.permute.xlu0 1
        %1074 = vperm.xlu0 %1073, %v401
        %v1075 = vpop.permute.xlu0 %1074
        %1077 = vset.pattern.permute.xlu0 1
        %1078 = vperm.xlu0 %1077, %v402
        %v1079 = vpop.permute.xlu0 %1078
        %1081 = vset.pattern.permute.xlu0 1
        %1082 = vperm.xlu0 %1081, %v403
        %v1083 = vpop.permute.xlu0 %1082
        %1085 = vset.pattern.permute.xlu0 1
        %1086 = vperm.xlu0 %1085, %v404
        %v1087 = vpop.permute.xlu0 %1086
        %1089 = vset.pattern.permute.xlu0 1
        %1090 = vperm.xlu0 %1089, %v405
        %v1091 = vpop.permute.xlu0 %1090
        %1093 = vset.pattern.permute.xlu0 1
        %1094 = vperm.xlu0 %1093, %v406
        %v1095 = vpop.permute.xlu0 %1094
        %1097 = vset.pattern.permute.xlu0 1
        %1098 = vperm.xlu0 %1097, %v407
        %v1099 = vpop.permute.xlu0 %1098
        %1101 = vset.pattern.permute.xlu0 1
        %1102 = vperm.xlu0 %1101, %v408
        %v1103 = vpop.permute.xlu0 %1102
        %1105 = vset.pattern.permute.xlu0 1
        %1106 = vperm.xlu0 %1105, %v409
        %v1107 = vpop.permute.xlu0 %1106
        %1109 = vset.pattern.permute.xlu0 1
        %1110 = vperm.xlu0 %1109, %v410
        %v1111 = vpop.permute.xlu0 %1110
        %1113 = vset.pattern.permute.xlu0 1
        %1114 = vperm.xlu0 %1113, %v411
        %v1115 = vpop.permute.xlu0 %1114
        %1117 = vset.pattern.permute.xlu0 1
        %1118 = vperm.xlu0 %1117, %v412
        %v1119 = vpop.permute.xlu0 %1118
        %1121 = vset.pattern.permute.xlu0 1
        %1122 = vperm.xlu0 %1121, %v413
        %v1123 = vpop.permute.xlu0 %1122
        %1125 = vset.pattern.permute.xlu0 1
        %1126 = vperm.xlu0 %1125, %v414
        %v1127 = vpop.permute.xlu0 %1126
        %1129 = vset.pattern.permute.xlu0 1
        %1130 = vperm.xlu0 %1129, %v415
        %v1131 = vpop.permute.xlu0 %1130
        %1133 = vset.pattern.permute.xlu0 1
        %1134 = vperm.xlu0 %1133, %v416
        %v1135 = vpop.permute.xlu0 %1134
        %1137 = vset.pattern.permute.xlu0 1
        %1138 = vperm.xlu0 %1137, %v417
        %v1139 = vpop.permute.xlu0 %1138
        %v1141 = vlaneseq
        %v1142 = vshrl.u32 %v1141, 7
        %v1143 = vsub.s32 1, %v1142
        %v1144 = vrot.slane %v353, %v1143
        %v1145 = vlaneseq
        %v1146 = vshrl.u32 %v1145, 7
        %v1147 = vsub.s32 3, %v1146
        %v1148 = vrot.slane %v353, %v1147
        %v1151 = vlaneseq
        %v1152 = vshrl.u32 %v1151, 7
        %v1153 = vsub.s32 1, %v1152
        %v1154 = vrot.slane %v1144, %v1153
        %v1155 = vlaneseq
        %v1156 = vshrl.u32 %v1155, 7
        %v1157 = vsub.s32 1, %v1156
        %v1158 = vrot.slane %v1148, %v1157
        %v1159 = vmul.f32 %v887, %v1154
        %v1160 = vmul.f32 %v887, %v1158
        %v1161 = vmul.f32 %v891, %v1154
        %v1162 = vmul.f32 %v891, %v1158
        %v1163 = vmul.f32 %v895, %v1154
        %v1164 = vmul.f32 %v895, %v1158
        %v1165 = vmul.f32 %v899, %v1154
        %v1166 = vmul.f32 %v899, %v1158
        %v1167 = vmul.f32 %v903, %v1154
        %v1168 = vmul.f32 %v903, %v1158
        %v1169 = vmul.f32 %v907, %v1154
        %v1170 = vmul.f32 %v907, %v1158
        %v1171 = vmul.f32 %v911, %v1154
        %v1172 = vmul.f32 %v911, %v1158
        %v1173 = vmul.f32 %v915, %v1154
        %v1174 = vmul.f32 %v915, %v1158
        %v1175 = vmul.f32 %v919, %v1154
        %v1176 = vmul.f32 %v919, %v1158
        %v1177 = vmul.f32 %v923, %v1154
        %v1178 = vmul.f32 %v923, %v1158
        %v1179 = vmul.f32 %v927, %v1154
        %v1180 = vmul.f32 %v927, %v1158
        %v1181 = vmul.f32 %v931, %v1154
        %v1182 = vmul.f32 %v931, %v1158
        %v1183 = vmul.f32 %v935, %v1154
        %v1184 = vmul.f32 %v935, %v1158
        %v1185 = vmul.f32 %v939, %v1154
        %v1186 = vmul.f32 %v939, %v1158
        %v1187 = vmul.f32 %v943, %v1154
        %v1188 = vmul.f32 %v943, %v1158
        %v1189 = vmul.f32 %v947, %v1154
        %v1190 = vmul.f32 %v947, %v1158
        %v1191 = vmul.f32 %v951, %v1154
        %v1192 = vmul.f32 %v951, %v1158
        %v1193 = vmul.f32 %v955, %v1154
        %v1194 = vmul.f32 %v955, %v1158
        %v1195 = vmul.f32 %v959, %v1154
        %v1196 = vmul.f32 %v959, %v1158
        %v1197 = vmul.f32 %v963, %v1154
        %v1198 = vmul.f32 %v963, %v1158
        %v1199 = vmul.f32 %v967, %v1154
        %v1200 = vmul.f32 %v967, %v1158
        %v1201 = vmul.f32 %v971, %v1154
        %v1202 = vmul.f32 %v971, %v1158
        %v1203 = vmul.f32 %v975, %v1154
        %v1204 = vmul.f32 %v975, %v1158
        %v1205 = vmul.f32 %v979, %v1154
        %v1206 = vmul.f32 %v979, %v1158
        %v1207 = vmul.f32 %v983, %v1154
        %v1208 = vmul.f32 %v983, %v1158
        %v1209 = vmul.f32 %v987, %v1154
        %v1210 = vmul.f32 %v987, %v1158
        %v1211 = vmul.f32 %v991, %v1154
        %v1212 = vmul.f32 %v991, %v1158
        %v1213 = vmul.f32 %v995, %v1154
        %v1214 = vmul.f32 %v995, %v1158
        %v1215 = vmul.f32 %v999, %v1154
        %v1216 = vmul.f32 %v999, %v1158
        %v1217 = vmul.f32 %v1003, %v1154
        %v1218 = vmul.f32 %v1003, %v1158
        %v1219 = vmul.f32 %v1007, %v1154
        %v1220 = vmul.f32 %v1007, %v1158
        %v1221 = vmul.f32 %v1011, %v1154
        %v1222 = vmul.f32 %v1011, %v1158
        %v1223 = vmul.f32 %v1015, %v1154
        %v1224 = vmul.f32 %v1015, %v1158
        %v1225 = vmul.f32 %v1019, %v1154
        %v1226 = vmul.f32 %v1019, %v1158
        %v1227 = vmul.f32 %v1023, %v1154
        %v1228 = vmul.f32 %v1023, %v1158
        %v1229 = vmul.f32 %v1027, %v1154
        %v1230 = vmul.f32 %v1027, %v1158
        %v1231 = vmul.f32 %v1031, %v1154
        %v1232 = vmul.f32 %v1031, %v1158
        %v1233 = vmul.f32 %v1035, %v1154
        %v1234 = vmul.f32 %v1035, %v1158
        %v1235 = vmul.f32 %v1039, %v1154
        %v1236 = vmul.f32 %v1039, %v1158
        %v1237 = vmul.f32 %v1043, %v1154
        %v1238 = vmul.f32 %v1043, %v1158
        %v1239 = vmul.f32 %v1047, %v1154
        %v1240 = vmul.f32 %v1047, %v1158
        %v1241 = vmul.f32 %v1051, %v1154
        %v1242 = vmul.f32 %v1051, %v1158
        %v1243 = vmul.f32 %v1055, %v1154
        %v1244 = vmul.f32 %v1055, %v1158
        %v1245 = vmul.f32 %v1059, %v1154
        %v1246 = vmul.f32 %v1059, %v1158
        %v1247 = vmul.f32 %v1063, %v1154
        %v1248 = vmul.f32 %v1063, %v1158
        %v1249 = vmul.f32 %v1067, %v1154
        %v1250 = vmul.f32 %v1067, %v1158
        %v1251 = vmul.f32 %v1071, %v1154
        %v1252 = vmul.f32 %v1071, %v1158
        %v1253 = vmul.f32 %v1075, %v1154
        %v1254 = vmul.f32 %v1075, %v1158
        %v1255 = vmul.f32 %v1079, %v1154
        %v1256 = vmul.f32 %v1079, %v1158
        %v1257 = vmul.f32 %v1083, %v1154
        %v1258 = vmul.f32 %v1083, %v1158
        %v1259 = vmul.f32 %v1087, %v1154
        %v1260 = vmul.f32 %v1087, %v1158
        %v1261 = vmul.f32 %v1091, %v1154
        %v1262 = vmul.f32 %v1091, %v1158
        %v1263 = vmul.f32 %v1095, %v1154
        %v1264 = vmul.f32 %v1095, %v1158
        %v1265 = vmul.f32 %v1099, %v1154
        %v1266 = vmul.f32 %v1099, %v1158
        %v1267 = vmul.f32 %v1103, %v1154
        %v1268 = vmul.f32 %v1103, %v1158
        %v1269 = vmul.f32 %v1107, %v1154
        %v1270 = vmul.f32 %v1107, %v1158
        %v1271 = vmul.f32 %v1111, %v1154
        %v1272 = vmul.f32 %v1111, %v1158
        %v1273 = vmul.f32 %v1115, %v1154
        %v1274 = vmul.f32 %v1115, %v1158
        %v1275 = vmul.f32 %v1119, %v1154
        %v1276 = vmul.f32 %v1119, %v1158
        %v1277 = vmul.f32 %v1123, %v1154
        %v1278 = vmul.f32 %v1123, %v1158
        %v1279 = vmul.f32 %v1127, %v1154
        %v1280 = vmul.f32 %v1127, %v1158
        %v1281 = vmul.f32 %v1131, %v1154
        %v1282 = vmul.f32 %v1131, %v1158
        %v1283 = vmul.f32 %v1135, %v1154
        %v1284 = vmul.f32 %v1135, %v1158
        %v1285 = vmul.f32 %v1139, %v1154
        %v1286 = vmul.f32 %v1139, %v1158
        %v1287 = vadd.f32 %v757, %v1159
        %v1288 = vadd.f32 %v758, %v1160
        %v1289 = vadd.f32 %v759, %v1161
        %v1290 = vadd.f32 %v760, %v1162
        %v1291 = vadd.f32 %v761, %v1163
        %v1292 = vadd.f32 %v762, %v1164
        %v1293 = vadd.f32 %v763, %v1165
        %v1294 = vadd.f32 %v764, %v1166
        %v1295 = vadd.f32 %v765, %v1167
        %v1296 = vadd.f32 %v766, %v1168
        %v1297 = vadd.f32 %v767, %v1169
        %v1298 = vadd.f32 %v768, %v1170
        %v1299 = vadd.f32 %v769, %v1171
        %v1300 = vadd.f32 %v770, %v1172
        %v1301 = vadd.f32 %v771, %v1173
        %v1302 = vadd.f32 %v772, %v1174
        %v1303 = vadd.f32 %v773, %v1175
        %v1304 = vadd.f32 %v774, %v1176
        %v1305 = vadd.f32 %v775, %v1177
        %v1306 = vadd.f32 %v776, %v1178
        %v1307 = vadd.f32 %v777, %v1179
        %v1308 = vadd.f32 %v778, %v1180
        %v1309 = vadd.f32 %v779, %v1181
        %v1310 = vadd.f32 %v780, %v1182
        %v1311 = vadd.f32 %v781, %v1183
        %v1312 = vadd.f32 %v782, %v1184
        %v1313 = vadd.f32 %v783, %v1185
        %v1314 = vadd.f32 %v784, %v1186
        %v1315 = vadd.f32 %v785, %v1187
        %v1316 = vadd.f32 %v786, %v1188
        %v1317 = vadd.f32 %v787, %v1189
        %v1318 = vadd.f32 %v788, %v1190
        %v1319 = vadd.f32 %v789, %v1191
        %v1320 = vadd.f32 %v790, %v1192
        %v1321 = vadd.f32 %v791, %v1193
        %v1322 = vadd.f32 %v792, %v1194
        %v1323 = vadd.f32 %v793, %v1195
        %v1324 = vadd.f32 %v794, %v1196
        %v1325 = vadd.f32 %v795, %v1197
        %v1326 = vadd.f32 %v796, %v1198
        %v1327 = vadd.f32 %v797, %v1199
        %v1328 = vadd.f32 %v798, %v1200
        %v1329 = vadd.f32 %v799, %v1201
        %v1330 = vadd.f32 %v800, %v1202
        %v1331 = vadd.f32 %v801, %v1203
        %v1332 = vadd.f32 %v802, %v1204
        %v1333 = vadd.f32 %v803, %v1205
        %v1334 = vadd.f32 %v804, %v1206
        %v1335 = vadd.f32 %v805, %v1207
        %v1336 = vadd.f32 %v806, %v1208
        %v1337 = vadd.f32 %v807, %v1209
        %v1338 = vadd.f32 %v808, %v1210
        %v1339 = vadd.f32 %v809, %v1211
        %v1340 = vadd.f32 %v810, %v1212
        %v1341 = vadd.f32 %v811, %v1213
        %v1342 = vadd.f32 %v812, %v1214
        %v1343 = vadd.f32 %v813, %v1215
        %v1344 = vadd.f32 %v814, %v1216
        %v1345 = vadd.f32 %v815, %v1217
        %v1346 = vadd.f32 %v816, %v1218
        %v1347 = vadd.f32 %v817, %v1219
        %v1348 = vadd.f32 %v818, %v1220
        %v1349 = vadd.f32 %v819, %v1221
        %v1350 = vadd.f32 %v820, %v1222
        %v1351 = vadd.f32 %v821, %v1223
        %v1352 = vadd.f32 %v822, %v1224
        %v1353 = vadd.f32 %v823, %v1225
        %v1354 = vadd.f32 %v824, %v1226
        %v1355 = vadd.f32 %v825, %v1227
        %v1356 = vadd.f32 %v826, %v1228
        %v1357 = vadd.f32 %v827, %v1229
        %v1358 = vadd.f32 %v828, %v1230
        %v1359 = vadd.f32 %v829, %v1231
        %v1360 = vadd.f32 %v830, %v1232
        %v1361 = vadd.f32 %v831, %v1233
        %v1362 = vadd.f32 %v832, %v1234
        %v1363 = vadd.f32 %v833, %v1235
        %v1364 = vadd.f32 %v834, %v1236
        %v1365 = vadd.f32 %v835, %v1237
        %v1366 = vadd.f32 %v836, %v1238
        %v1367 = vadd.f32 %v837, %v1239
        %v1368 = vadd.f32 %v838, %v1240
        %v1369 = vadd.f32 %v839, %v1241
        %v1370 = vadd.f32 %v840, %v1242
        %v1371 = vadd.f32 %v841, %v1243
        %v1372 = vadd.f32 %v842, %v1244
        %v1373 = vadd.f32 %v843, %v1245
        %v1374 = vadd.f32 %v844, %v1246
        %v1375 = vadd.f32 %v845, %v1247
        %v1376 = vadd.f32 %v846, %v1248
        %v1377 = vadd.f32 %v847, %v1249
        %v1378 = vadd.f32 %v848, %v1250
        %v1379 = vadd.f32 %v849, %v1251
        %v1380 = vadd.f32 %v850, %v1252
        %v1381 = vadd.f32 %v851, %v1253
        %v1382 = vadd.f32 %v852, %v1254
        %v1383 = vadd.f32 %v853, %v1255
        %v1384 = vadd.f32 %v854, %v1256
        %v1385 = vadd.f32 %v855, %v1257
        %v1386 = vadd.f32 %v856, %v1258
        %v1387 = vadd.f32 %v857, %v1259
        %v1388 = vadd.f32 %v858, %v1260
        %v1389 = vadd.f32 %v859, %v1261
        %v1390 = vadd.f32 %v860, %v1262
        %v1391 = vadd.f32 %v861, %v1263
        %v1392 = vadd.f32 %v862, %v1264
        %v1393 = vadd.f32 %v863, %v1265
        %v1394 = vadd.f32 %v864, %v1266
        %v1395 = vadd.f32 %v865, %v1267
        %v1396 = vadd.f32 %v866, %v1268
        %v1397 = vadd.f32 %v867, %v1269
        %v1398 = vadd.f32 %v868, %v1270
        %v1399 = vadd.f32 %v869, %v1271
        %v1400 = vadd.f32 %v870, %v1272
        %v1401 = vadd.f32 %v871, %v1273
        %v1402 = vadd.f32 %v872, %v1274
        %v1403 = vadd.f32 %v873, %v1275
        %v1404 = vadd.f32 %v874, %v1276
        %v1405 = vadd.f32 %v875, %v1277
        %v1406 = vadd.f32 %v876, %v1278
        %v1407 = vadd.f32 %v877, %v1279
        %v1408 = vadd.f32 %v878, %v1280
        %v1409 = vadd.f32 %v879, %v1281
        %v1410 = vadd.f32 %v880, %v1282
        %v1411 = vadd.f32 %v881, %v1283
        %v1412 = vadd.f32 %v882, %v1284
        %v1413 = vadd.f32 %v883, %v1285
        %v1414 = vadd.f32 %v884, %v1286
        %v1415 = vld [vmem:[%s2] sm:$0xff]
        %v1416 = vld [vmem:[%s2 + $0x8] sm:$0xff]
        %v1417 = vld [vmem:[%s2 + $0x10] sm:$0xff]
        %v1418 = vld [vmem:[%s2 + $0x18] sm:$0xff]
        %v1419 = vld [vmem:[%s2 + $0x20] sm:$0xff]
        %v1420 = vld [vmem:[%s2 + $0x28] sm:$0xff]
        %v1421 = vld [vmem:[%s2 + $0x30] sm:$0xff]
        %v1422 = vld [vmem:[%s2 + $0x38] sm:$0xff]
        %v1423 = vld [vmem:[%s2 + $0x40] sm:$0xff]
        %v1424 = vld [vmem:[%s2 + $0x48] sm:$0xff]
        %v1425 = vld [vmem:[%s2 + $0x50] sm:$0xff]
        %v1426 = vld [vmem:[%s2 + $0x58] sm:$0xff]
        %v1427 = vld [vmem:[%s2 + $0x60] sm:$0xff]
        %v1428 = vld [vmem:[%s2 + $0x68] sm:$0xff]
        %v1429 = vld [vmem:[%s2 + $0x70] sm:$0xff]
        %v1430 = vld [vmem:[%s2 + $0x78] sm:$0xff]
        %v1431 = vld [vmem:[%s2 + $0x80] sm:$0xff]
        %v1432 = vld [vmem:[%s2 + $0x88] sm:$0xff]
        %v1433 = vld [vmem:[%s2 + $0x90] sm:$0xff]
        %v1434 = vld [vmem:[%s2 + $0x98] sm:$0xff]
        %v1435 = vld [vmem:[%s2 + $0xa0] sm:$0xff]
        %v1436 = vld [vmem:[%s2 + $0xa8] sm:$0xff]
        %v1437 = vld [vmem:[%s2 + $0xb0] sm:$0xff]
        %v1438 = vld [vmem:[%s2 + $0xb8] sm:$0xff]
        %v1439 = vld [vmem:[%s2 + $0xc0] sm:$0xff]
        %v1440 = vld [vmem:[%s2 + $0xc8] sm:$0xff]
        %v1441 = vld [vmem:[%s2 + $0xd0] sm:$0xff]
        %v1442 = vld [vmem:[%s2 + $0xd8] sm:$0xff]
        %v1443 = vld [vmem:[%s2 + $0xe0] sm:$0xff]
        %v1444 = vld [vmem:[%s2 + $0xe8] sm:$0xff]
        %v1445 = vld [vmem:[%s2 + $0xf0] sm:$0xff]
        %v1446 = vld [vmem:[%s2 + $0xf8] sm:$0xff]
        %v1447 = vld [vmem:[%s2 + $0x100] sm:$0xff]
        %v1448 = vld [vmem:[%s2 + $0x108] sm:$0xff]
        %v1449 = vld [vmem:[%s2 + $0x110] sm:$0xff]
        %v1450 = vld [vmem:[%s2 + $0x118] sm:$0xff]
        %v1451 = vld [vmem:[%s2 + $0x120] sm:$0xff]
        %v1452 = vld [vmem:[%s2 + $0x128] sm:$0xff]
        %v1453 = vld [vmem:[%s2 + $0x130] sm:$0xff]
        %v1454 = vld [vmem:[%s2 + $0x138] sm:$0xff]
        %v1455 = vld [vmem:[%s2 + $0x140] sm:$0xff]
        %v1456 = vld [vmem:[%s2 + $0x148] sm:$0xff]
        %v1457 = vld [vmem:[%s2 + $0x150] sm:$0xff]
        %v1458 = vld [vmem:[%s2 + $0x158] sm:$0xff]
        %v1459 = vld [vmem:[%s2 + $0x160] sm:$0xff]
        %v1460 = vld [vmem:[%s2 + $0x168] sm:$0xff]
        %v1461 = vld [vmem:[%s2 + $0x170] sm:$0xff]
        %v1462 = vld [vmem:[%s2 + $0x178] sm:$0xff]
        %v1463 = vld [vmem:[%s2 + $0x180] sm:$0xff]
        %v1464 = vld [vmem:[%s2 + $0x188] sm:$0xff]
        %v1465 = vld [vmem:[%s2 + $0x190] sm:$0xff]
        %v1466 = vld [vmem:[%s2 + $0x198] sm:$0xff]
        %v1467 = vld [vmem:[%s2 + $0x1a0] sm:$0xff]
        %v1468 = vld [vmem:[%s2 + $0x1a8] sm:$0xff]
        %v1469 = vld [vmem:[%s2 + $0x1b0] sm:$0xff]
        %v1470 = vld [vmem:[%s2 + $0x1b8] sm:$0xff]
        %v1471 = vld [vmem:[%s2 + $0x1c0] sm:$0xff]
        %v1472 = vld [vmem:[%s2 + $0x1c8] sm:$0xff]
        %v1473 = vld [vmem:[%s2 + $0x1d0] sm:$0xff]
        %v1474 = vld [vmem:[%s2 + $0x1d8] sm:$0xff]
        %v1475 = vld [vmem:[%s2 + $0x1e0] sm:$0xff]
        %v1476 = vld [vmem:[%s2 + $0x1e8] sm:$0xff]
        %v1477 = vld [vmem:[%s2 + $0x1f0] sm:$0xff]
        %v1478 = vld [vmem:[%s2 + $0x1f8] sm:$0xff]
        %1480 = vset.pattern.permute.xlu0 0
        %1481 = vperm.xlu0 %1480, %v1415
        %v1482 = vpop.permute.xlu0 %1481
        %1485 = vset.pattern.permute.xlu0 0
        %1486 = vperm.xlu0 %1485, %v1416
        %v1487 = vpop.permute.xlu0 %1486
        %1490 = vset.pattern.permute.xlu0 0
        %1491 = vperm.xlu0 %1490, %v1417
        %v1492 = vpop.permute.xlu0 %1491
        %1495 = vset.pattern.permute.xlu0 0
        %1496 = vperm.xlu0 %1495, %v1418
        %v1497 = vpop.permute.xlu0 %1496
        %1500 = vset.pattern.permute.xlu0 0
        %1501 = vperm.xlu0 %1500, %v1419
        %v1502 = vpop.permute.xlu0 %1501
        %1505 = vset.pattern.permute.xlu0 0
        %1506 = vperm.xlu0 %1505, %v1420
        %v1507 = vpop.permute.xlu0 %1506
        %1510 = vset.pattern.permute.xlu0 0
        %1511 = vperm.xlu0 %1510, %v1421
        %v1512 = vpop.permute.xlu0 %1511
        %1515 = vset.pattern.permute.xlu0 0
        %1516 = vperm.xlu0 %1515, %v1422
        %v1517 = vpop.permute.xlu0 %1516
        %1520 = vset.pattern.permute.xlu0 0
        %1521 = vperm.xlu0 %1520, %v1423
        %v1522 = vpop.permute.xlu0 %1521
        %1525 = vset.pattern.permute.xlu0 0
        %1526 = vperm.xlu0 %1525, %v1424
        %v1527 = vpop.permute.xlu0 %1526
        %1530 = vset.pattern.permute.xlu0 0
        %1531 = vperm.xlu0 %1530, %v1425
        %v1532 = vpop.permute.xlu0 %1531
        %1535 = vset.pattern.permute.xlu0 0
        %1536 = vperm.xlu0 %1535, %v1426
        %v1537 = vpop.permute.xlu0 %1536
        %1540 = vset.pattern.permute.xlu0 0
        %1541 = vperm.xlu0 %1540, %v1427
        %v1542 = vpop.permute.xlu0 %1541
        %1545 = vset.pattern.permute.xlu0 0
        %1546 = vperm.xlu0 %1545, %v1428
        %v1547 = vpop.permute.xlu0 %1546
        %1550 = vset.pattern.permute.xlu0 0
        %1551 = vperm.xlu0 %1550, %v1429
        %v1552 = vpop.permute.xlu0 %1551
        %1555 = vset.pattern.permute.xlu0 0
        %1556 = vperm.xlu0 %1555, %v1430
        %v1557 = vpop.permute.xlu0 %1556
        %1560 = vset.pattern.permute.xlu0 0
        %1561 = vperm.xlu0 %1560, %v1431
        %v1562 = vpop.permute.xlu0 %1561
        %1565 = vset.pattern.permute.xlu0 0
        %1566 = vperm.xlu0 %1565, %v1432
        %v1567 = vpop.permute.xlu0 %1566
        %1570 = vset.pattern.permute.xlu0 0
        %1571 = vperm.xlu0 %1570, %v1433
        %v1572 = vpop.permute.xlu0 %1571
        %1575 = vset.pattern.permute.xlu0 0
        %1576 = vperm.xlu0 %1575, %v1434
        %v1577 = vpop.permute.xlu0 %1576
        %1580 = vset.pattern.permute.xlu0 0
        %1581 = vperm.xlu0 %1580, %v1435
        %v1582 = vpop.permute.xlu0 %1581
        %1585 = vset.pattern.permute.xlu0 0
        %1586 = vperm.xlu0 %1585, %v1436
        %v1587 = vpop.permute.xlu0 %1586
        %1590 = vset.pattern.permute.xlu0 0
        %1591 = vperm.xlu0 %1590, %v1437
        %v1592 = vpop.permute.xlu0 %1591
        %1595 = vset.pattern.permute.xlu0 0
        %1596 = vperm.xlu0 %1595, %v1438
        %v1597 = vpop.permute.xlu0 %1596
        %1600 = vset.pattern.permute.xlu0 0
        %1601 = vperm.xlu0 %1600, %v1439
        %v1602 = vpop.permute.xlu0 %1601
        %1605 = vset.pattern.permute.xlu0 0
        %1606 = vperm.xlu0 %1605, %v1440
        %v1607 = vpop.permute.xlu0 %1606
        %1610 = vset.pattern.permute.xlu0 0
        %1611 = vperm.xlu0 %1610, %v1441
        %v1612 = vpop.permute.xlu0 %1611
        %1615 = vset.pattern.permute.xlu0 0
        %1616 = vperm.xlu0 %1615, %v1442
        %v1617 = vpop.permute.xlu0 %1616
        %1620 = vset.pattern.permute.xlu0 0
        %1621 = vperm.xlu0 %1620, %v1443
        %v1622 = vpop.permute.xlu0 %1621
        %1625 = vset.pattern.permute.xlu0 0
        %1626 = vperm.xlu0 %1625, %v1444
        %v1627 = vpop.permute.xlu0 %1626
        %1630 = vset.pattern.permute.xlu0 0
        %1631 = vperm.xlu0 %1630, %v1445
        %v1632 = vpop.permute.xlu0 %1631
        %1635 = vset.pattern.permute.xlu0 0
        %1636 = vperm.xlu0 %1635, %v1446
        %v1637 = vpop.permute.xlu0 %1636
        %1640 = vset.pattern.permute.xlu0 0
        %1641 = vperm.xlu0 %1640, %v1447
        %v1642 = vpop.permute.xlu0 %1641
        %1645 = vset.pattern.permute.xlu0 0
        %1646 = vperm.xlu0 %1645, %v1448
        %v1647 = vpop.permute.xlu0 %1646
        %1650 = vset.pattern.permute.xlu0 0
        %1651 = vperm.xlu0 %1650, %v1449
        %v1652 = vpop.permute.xlu0 %1651
        %1655 = vset.pattern.permute.xlu0 0
        %1656 = vperm.xlu0 %1655, %v1450
        %v1657 = vpop.permute.xlu0 %1656
        %1660 = vset.pattern.permute.xlu0 0
        %1661 = vperm.xlu0 %1660, %v1451
        %v1662 = vpop.permute.xlu0 %1661
        %1665 = vset.pattern.permute.xlu0 0
        %1666 = vperm.xlu0 %1665, %v1452
        %v1667 = vpop.permute.xlu0 %1666
        %1670 = vset.pattern.permute.xlu0 0
        %1671 = vperm.xlu0 %1670, %v1453
        %v1672 = vpop.permute.xlu0 %1671
        %1675 = vset.pattern.permute.xlu0 0
        %1676 = vperm.xlu0 %1675, %v1454
        %v1677 = vpop.permute.xlu0 %1676
        %1680 = vset.pattern.permute.xlu0 0
        %1681 = vperm.xlu0 %1680, %v1455
        %v1682 = vpop.permute.xlu0 %1681
        %1685 = vset.pattern.permute.xlu0 0
        %1686 = vperm.xlu0 %1685, %v1456
        %v1687 = vpop.permute.xlu0 %1686
        %1690 = vset.pattern.permute.xlu0 0
        %1691 = vperm.xlu0 %1690, %v1457
        %v1692 = vpop.permute.xlu0 %1691
        %1695 = vset.pattern.permute.xlu0 0
        %1696 = vperm.xlu0 %1695, %v1458
        %v1697 = vpop.permute.xlu0 %1696
        %1700 = vset.pattern.permute.xlu0 0
        %1701 = vperm.xlu0 %1700, %v1459
        %v1702 = vpop.permute.xlu0 %1701
        %1705 = vset.pattern.permute.xlu0 0
        %1706 = vperm.xlu0 %1705, %v1460
        %v1707 = vpop.permute.xlu0 %1706
        %1710 = vset.pattern.permute.xlu0 0
        %1711 = vperm.xlu0 %1710, %v1461
        %v1712 = vpop.permute.xlu0 %1711
        %1715 = vset.pattern.permute.xlu0 0
        %1716 = vperm.xlu0 %1715, %v1462
        %v1717 = vpop.permute.xlu0 %1716
        %1720 = vset.pattern.permute.xlu0 0
        %1721 = vperm.xlu0 %1720, %v1463
        %v1722 = vpop.permute.xlu0 %1721
        %1725 = vset.pattern.permute.xlu0 0
        %1726 = vperm.xlu0 %1725, %v1464
        %v1727 = vpop.permute.xlu0 %1726
        %1730 = vset.pattern.permute.xlu0 0
        %1731 = vperm.xlu0 %1730, %v1465
        %v1732 = vpop.permute.xlu0 %1731
        %1735 = vset.pattern.permute.xlu0 0
        %1736 = vperm.xlu0 %1735, %v1466
        %v1737 = vpop.permute.xlu0 %1736
        %1740 = vset.pattern.permute.xlu0 0
        %1741 = vperm.xlu0 %1740, %v1467
        %v1742 = vpop.permute.xlu0 %1741
        %1745 = vset.pattern.permute.xlu0 0
        %1746 = vperm.xlu0 %1745, %v1468
        %v1747 = vpop.permute.xlu0 %1746
        %1750 = vset.pattern.permute.xlu0 0
        %1751 = vperm.xlu0 %1750, %v1469
        %v1752 = vpop.permute.xlu0 %1751
        %1755 = vset.pattern.permute.xlu0 0
        %1756 = vperm.xlu0 %1755, %v1470
        %v1757 = vpop.permute.xlu0 %1756
        %1760 = vset.pattern.permute.xlu0 0
        %1761 = vperm.xlu0 %1760, %v1471
        %v1762 = vpop.permute.xlu0 %1761
        %1765 = vset.pattern.permute.xlu0 0
        %1766 = vperm.xlu0 %1765, %v1472
        %v1767 = vpop.permute.xlu0 %1766
        %1770 = vset.pattern.permute.xlu0 0
        %1771 = vperm.xlu0 %1770, %v1473
        %v1772 = vpop.permute.xlu0 %1771
        %1775 = vset.pattern.permute.xlu0 0
        %1776 = vperm.xlu0 %1775, %v1474
        %v1777 = vpop.permute.xlu0 %1776
        %1780 = vset.pattern.permute.xlu0 0
        %1781 = vperm.xlu0 %1780, %v1475
        %v1782 = vpop.permute.xlu0 %1781
        %1785 = vset.pattern.permute.xlu0 0
        %1786 = vperm.xlu0 %1785, %v1476
        %v1787 = vpop.permute.xlu0 %1786
        %1790 = vset.pattern.permute.xlu0 0
        %1791 = vperm.xlu0 %1790, %v1477
        %v1792 = vpop.permute.xlu0 %1791
        %1795 = vset.pattern.permute.xlu0 0
        %1796 = vperm.xlu0 %1795, %v1478
        %v1797 = vpop.permute.xlu0 %1796
        %v1799 = vadd.f32 %v1287, %v1482
        %v1800 = vadd.f32 %v1288, %v1482
        %v1801 = vadd.f32 %v1289, %v1487
        %v1802 = vadd.f32 %v1290, %v1487
        %v1803 = vadd.f32 %v1291, %v1492
        %v1804 = vadd.f32 %v1292, %v1492
        %v1805 = vadd.f32 %v1293, %v1497
        %v1806 = vadd.f32 %v1294, %v1497
        %v1807 = vadd.f32 %v1295, %v1502
        %v1808 = vadd.f32 %v1296, %v1502
        %v1809 = vadd.f32 %v1297, %v1507
        %v1810 = vadd.f32 %v1298, %v1507
        %v1811 = vadd.f32 %v1299, %v1512
        %v1812 = vadd.f32 %v1300, %v1512
        %v1813 = vadd.f32 %v1301, %v1517
        %v1814 = vadd.f32 %v1302, %v1517
        %v1815 = vadd.f32 %v1303, %v1522
        %v1816 = vadd.f32 %v1304, %v1522
        %v1817 = vadd.f32 %v1305, %v1527
        %v1818 = vadd.f32 %v1306, %v1527
        %v1819 = vadd.f32 %v1307, %v1532
        %v1820 = vadd.f32 %v1308, %v1532
        %v1821 = vadd.f32 %v1309, %v1537
        %v1822 = vadd.f32 %v1310, %v1537
        %v1823 = vadd.f32 %v1311, %v1542
        %v1824 = vadd.f32 %v1312, %v1542
        %v1825 = vadd.f32 %v1313, %v1547
        %v1826 = vadd.f32 %v1314, %v1547
        %v1827 = vadd.f32 %v1315, %v1552
        %v1828 = vadd.f32 %v1316, %v1552
        %v1829 = vadd.f32 %v1317, %v1557
        %v1830 = vadd.f32 %v1318, %v1557
        %v1831 = vadd.f32 %v1319, %v1562
        %v1832 = vadd.f32 %v1320, %v1562
        %v1833 = vadd.f32 %v1321, %v1567
        %v1834 = vadd.f32 %v1322, %v1567
        %v1835 = vadd.f32 %v1323, %v1572
        %v1836 = vadd.f32 %v1324, %v1572
        %v1837 = vadd.f32 %v1325, %v1577
        %v1838 = vadd.f32 %v1326, %v1577
        %v1839 = vadd.f32 %v1327, %v1582
        %v1840 = vadd.f32 %v1328, %v1582
        %v1841 = vadd.f32 %v1329, %v1587
        %v1842 = vadd.f32 %v1330, %v1587
        %v1843 = vadd.f32 %v1331, %v1592
        %v1844 = vadd.f32 %v1332, %v1592
        %v1845 = vadd.f32 %v1333, %v1597
        %v1846 = vadd.f32 %v1334, %v1597
        %v1847 = vadd.f32 %v1335, %v1602
        %v1848 = vadd.f32 %v1336, %v1602
        %v1849 = vadd.f32 %v1337, %v1607
        %v1850 = vadd.f32 %v1338, %v1607
        %v1851 = vadd.f32 %v1339, %v1612
        %v1852 = vadd.f32 %v1340, %v1612
        %v1853 = vadd.f32 %v1341, %v1617
        %v1854 = vadd.f32 %v1342, %v1617
        %v1855 = vadd.f32 %v1343, %v1622
        %v1856 = vadd.f32 %v1344, %v1622
        %v1857 = vadd.f32 %v1345, %v1627
        %v1858 = vadd.f32 %v1346, %v1627
        %v1859 = vadd.f32 %v1347, %v1632
        %v1860 = vadd.f32 %v1348, %v1632
        %v1861 = vadd.f32 %v1349, %v1637
        %v1862 = vadd.f32 %v1350, %v1637
        %v1863 = vadd.f32 %v1351, %v1642
        %v1864 = vadd.f32 %v1352, %v1642
        %v1865 = vadd.f32 %v1353, %v1647
        %v1866 = vadd.f32 %v1354, %v1647
        %v1867 = vadd.f32 %v1355, %v1652
        %v1868 = vadd.f32 %v1356, %v1652
        %v1869 = vadd.f32 %v1357, %v1657
        %v1870 = vadd.f32 %v1358, %v1657
        %v1871 = vadd.f32 %v1359, %v1662
        %v1872 = vadd.f32 %v1360, %v1662
        %v1873 = vadd.f32 %v1361, %v1667
        %v1874 = vadd.f32 %v1362, %v1667
        %v1875 = vadd.f32 %v1363, %v1672
        %v1876 = vadd.f32 %v1364, %v1672
        %v1877 = vadd.f32 %v1365, %v1677
        %v1878 = vadd.f32 %v1366, %v1677
        %v1879 = vadd.f32 %v1367, %v1682
        %v1880 = vadd.f32 %v1368, %v1682
        %v1881 = vadd.f32 %v1369, %v1687
        %v1882 = vadd.f32 %v1370, %v1687
        %v1883 = vadd.f32 %v1371, %v1692
        %v1884 = vadd.f32 %v1372, %v1692
        %v1885 = vadd.f32 %v1373, %v1697
        %v1886 = vadd.f32 %v1374, %v1697
        %v1887 = vadd.f32 %v1375, %v1702
        %v1888 = vadd.f32 %v1376, %v1702
        %v1889 = vadd.f32 %v1377, %v1707
        %v1890 = vadd.f32 %v1378, %v1707
        %v1891 = vadd.f32 %v1379, %v1712
        %v1892 = vadd.f32 %v1380, %v1712
        %v1893 = vadd.f32 %v1381, %v1717
        %v1894 = vadd.f32 %v1382, %v1717
        %v1895 = vadd.f32 %v1383, %v1722
        %v1896 = vadd.f32 %v1384, %v1722
        %v1897 = vadd.f32 %v1385, %v1727
        %v1898 = vadd.f32 %v1386, %v1727
        %v1899 = vadd.f32 %v1387, %v1732
        %v1900 = vadd.f32 %v1388, %v1732
        %v1901 = vadd.f32 %v1389, %v1737
        %v1902 = vadd.f32 %v1390, %v1737
        %v1903 = vadd.f32 %v1391, %v1742
        %v1904 = vadd.f32 %v1392, %v1742
        %v1905 = vadd.f32 %v1393, %v1747
        %v1906 = vadd.f32 %v1394, %v1747
        %v1907 = vadd.f32 %v1395, %v1752
        %v1908 = vadd.f32 %v1396, %v1752
        %v1909 = vadd.f32 %v1397, %v1757
        %v1910 = vadd.f32 %v1398, %v1757
        %v1911 = vadd.f32 %v1399, %v1762
        %v1912 = vadd.f32 %v1400, %v1762
        %v1913 = vadd.f32 %v1401, %v1767
        %v1914 = vadd.f32 %v1402, %v1767
        %v1915 = vadd.f32 %v1403, %v1772
        %v1916 = vadd.f32 %v1404, %v1772
        %v1917 = vadd.f32 %v1405, %v1777
        %v1918 = vadd.f32 %v1406, %v1777
        %v1919 = vadd.f32 %v1407, %v1782
        %v1920 = vadd.f32 %v1408, %v1782
        %v1921 = vadd.f32 %v1409, %v1787
        %v1922 = vadd.f32 %v1410, %v1787
        %v1923 = vadd.f32 %v1411, %v1792
        %v1924 = vadd.f32 %v1412, %v1792
        %v1925 = vadd.f32 %v1413, %v1797
        %v1926 = vadd.f32 %v1414, %v1797
        %v1927 = vmax.f32 %v1799, 0.0
        %v1928 = vmax.f32 %v1800, 0.0
        %v1929 = vmax.f32 %v1801, 0.0
        %v1930 = vmax.f32 %v1802, 0.0
        %v1931 = vmax.f32 %v1803, 0.0
        %v1932 = vmax.f32 %v1804, 0.0
        %v1933 = vmax.f32 %v1805, 0.0
        %v1934 = vmax.f32 %v1806, 0.0
        %v1935 = vmax.f32 %v1807, 0.0
        %v1936 = vmax.f32 %v1808, 0.0
        %v1937 = vmax.f32 %v1809, 0.0
        %v1938 = vmax.f32 %v1810, 0.0
        %v1939 = vmax.f32 %v1811, 0.0
        %v1940 = vmax.f32 %v1812, 0.0
        %v1941 = vmax.f32 %v1813, 0.0
        %v1942 = vmax.f32 %v1814, 0.0
        %v1943 = vmax.f32 %v1815, 0.0
        %v1944 = vmax.f32 %v1816, 0.0
        %v1945 = vmax.f32 %v1817, 0.0
        %v1946 = vmax.f32 %v1818, 0.0
        %v1947 = vmax.f32 %v1819, 0.0
        %v1948 = vmax.f32 %v1820, 0.0
        %v1949 = vmax.f32 %v1821, 0.0
        %v1950 = vmax.f32 %v1822, 0.0
        %v1951 = vmax.f32 %v1823, 0.0
        %v1952 = vmax.f32 %v1824, 0.0
        %v1953 = vmax.f32 %v1825, 0.0
        %v1954 = vmax.f32 %v1826, 0.0
        %v1955 = vmax.f32 %v1827, 0.0
        %v1956 = vmax.f32 %v1828, 0.0
        %v1957 = vmax.f32 %v1829, 0.0
        %v1958 = vmax.f32 %v1830, 0.0
        %v1959 = vmax.f32 %v1831, 0.0
        %v1960 = vmax.f32 %v1832, 0.0
        %v1961 = vmax.f32 %v1833, 0.0
        %v1962 = vmax.f32 %v1834, 0.0
        %v1963 = vmax.f32 %v1835, 0.0
        %v1964 = vmax.f32 %v1836, 0.0
        %v1965 = vmax.f32 %v1837, 0.0
        %v1966 = vmax.f32 %v1838, 0.0
        %v1967 = vmax.f32 %v1839, 0.0
        %v1968 = vmax.f32 %v1840, 0.0
        %v1969 = vmax.f32 %v1841, 0.0
        %v1970 = vmax.f32 %v1842, 0.0
        %v1971 = vmax.f32 %v1843, 0.0
        %v1972 = vmax.f32 %v1844, 0.0
        %v1973 = vmax.f32 %v1845, 0.0
        %v1974 = vmax.f32 %v1846, 0.0
        %v1975 = vmax.f32 %v1847, 0.0
        %v1976 = vmax.f32 %v1848, 0.0
        %v1977 = vmax.f32 %v1849, 0.0
        %v1978 = vmax.f32 %v1850, 0.0
        %v1979 = vmax.f32 %v1851, 0.0
        %v1980 = vmax.f32 %v1852, 0.0
        %v1981 = vmax.f32 %v1853, 0.0
        %v1982 = vmax.f32 %v1854, 0.0
        %v1983 = vmax.f32 %v1855, 0.0
        %v1984 = vmax.f32 %v1856, 0.0
        %v1985 = vmax.f32 %v1857, 0.0
        %v1986 = vmax.f32 %v1858, 0.0
        %v1987 = vmax.f32 %v1859, 0.0
        %v1988 = vmax.f32 %v1860, 0.0
        %v1989 = vmax.f32 %v1861, 0.0
        %v1990 = vmax.f32 %v1862, 0.0
        %v1991 = vmax.f32 %v1863, 0.0
        %v1992 = vmax.f32 %v1864, 0.0
        %v1993 = vmax.f32 %v1865, 0.0
        %v1994 = vmax.f32 %v1866, 0.0
        %v1995 = vmax.f32 %v1867, 0.0
        %v1996 = vmax.f32 %v1868, 0.0
        %v1997 = vmax.f32 %v1869, 0.0
        %v1998 = vmax.f32 %v1870, 0.0
        %v1999 = vmax.f32 %v1871, 0.0
        %v2000 = vmax.f32 %v1872, 0.0
        %v2001 = vmax.f32 %v1873, 0.0
        %v2002 = vmax.f32 %v1874, 0.0
        %v2003 = vmax.f32 %v1875, 0.0
        %v2004 = vmax.f32 %v1876, 0.0
        %v2005 = vmax.f32 %v1877, 0.0
        %v2006 = vmax.f32 %v1878, 0.0
        %v2007 = vmax.f32 %v1879, 0.0
        %v2008 = vmax.f32 %v1880, 0.0
        %v2009 = vmax.f32 %v1881, 0.0
        %v2010 = vmax.f32 %v1882, 0.0
        %v2011 = vmax.f32 %v1883, 0.0
        %v2012 = vmax.f32 %v1884, 0.0
        %v2013 = vmax.f32 %v1885, 0.0
        %v2014 = vmax.f32 %v1886, 0.0
        %v2015 = vmax.f32 %v1887, 0.0
        %v2016 = vmax.f32 %v1888, 0.0
        %v2017 = vmax.f32 %v1889, 0.0
        %v2018 = vmax.f32 %v1890, 0.0
        %v2019 = vmax.f32 %v1891, 0.0
        %v2020 = vmax.f32 %v1892, 0.0
        %v2021 = vmax.f32 %v1893, 0.0
        %v2022 = vmax.f32 %v1894, 0.0
        %v2023 = vmax.f32 %v1895, 0.0
        %v2024 = vmax.f32 %v1896, 0.0
        %v2025 = vmax.f32 %v1897, 0.0
        %v2026 = vmax.f32 %v1898, 0.0
        %v2027 = vmax.f32 %v1899, 0.0
        %v2028 = vmax.f32 %v1900, 0.0
        %v2029 = vmax.f32 %v1901, 0.0
        %v2030 = vmax.f32 %v1902, 0.0
        %v2031 = vmax.f32 %v1903, 0.0
        %v2032 = vmax.f32 %v1904, 0.0
        %v2033 = vmax.f32 %v1905, 0.0
        %v2034 = vmax.f32 %v1906, 0.0
        %v2035 = vmax.f32 %v1907, 0.0
        %v2036 = vmax.f32 %v1908, 0.0
        %v2037 = vmax.f32 %v1909, 0.0
        %v2038 = vmax.f32 %v1910, 0.0
        %v2039 = vmax.f32 %v1911, 0.0
        %v2040 = vmax.f32 %v1912, 0.0
        %v2041 = vmax.f32 %v1913, 0.0
        %v2042 = vmax.f32 %v1914, 0.0
        %v2043 = vmax.f32 %v1915, 0.0
        %v2044 = vmax.f32 %v1916, 0.0
        %v2045 = vmax.f32 %v1917, 0.0
        %v2046 = vmax.f32 %v1918, 0.0
        %v2047 = vmax.f32 %v1919, 0.0
        %v2048 = vmax.f32 %v1920, 0.0
        %v2049 = vmax.f32 %v1921, 0.0
        %v2050 = vmax.f32 %v1922, 0.0
        %v2051 = vmax.f32 %v1923, 0.0
        %v2052 = vmax.f32 %v1924, 0.0
        %v2053 = vmax.f32 %v1925, 0.0
        %v2054 = vmax.f32 %v1926, 0.0
        %v2055 = vld [vmem:[%s3] sm:$0xff]
        %v2056 = vld [vmem:[%s3 + $0x8] sm:$0xff]
        %v2057 = vld [vmem:[%s3 + $0x10] sm:$0xff]
        %v2058 = vld [vmem:[%s3 + $0x18] sm:$0xff]
        %v2059 = vld [vmem:[%s3 + $0x20] sm:$0xff]
        %v2060 = vld [vmem:[%s3 + $0x28] sm:$0xff]
        %v2061 = vld [vmem:[%s3 + $0x30] sm:$0xff]
        %v2062 = vld [vmem:[%s3 + $0x38] sm:$0xff]
        %v2063 = vld [vmem:[%s3 + $0x40] sm:$0xff]
        %v2064 = vld [vmem:[%s3 + $0x48] sm:$0xff]
        %v2065 = vld [vmem:[%s3 + $0x50] sm:$0xff]
        %v2066 = vld [vmem:[%s3 + $0x58] sm:$0xff]
        %v2067 = vld [vmem:[%s3 + $0x60] sm:$0xff]
        %v2068 = vld [vmem:[%s3 + $0x68] sm:$0xff]
        %v2069 = vld [vmem:[%s3 + $0x70] sm:$0xff]
        %v2070 = vld [vmem:[%s3 + $0x78] sm:$0xff]
        %v2071 = vld [vmem:[%s3 + $0x80] sm:$0xff]
        %v2072 = vld [vmem:[%s3 + $0x88] sm:$0xff]
        %v2073 = vld [vmem:[%s3 + $0x90] sm:$0xff]
        %v2074 = vld [vmem:[%s3 + $0x98] sm:$0xff]
        %v2075 = vld [vmem:[%s3 + $0xa0] sm:$0xff]
        %v2076 = vld [vmem:[%s3 + $0xa8] sm:$0xff]
        %v2077 = vld [vmem:[%s3 + $0xb0] sm:$0xff]
        %v2078 = vld [vmem:[%s3 + $0xb8] sm:$0xff]
        %v2079 = vld [vmem:[%s3 + $0xc0] sm:$0xff]
        %v2080 = vld [vmem:[%s3 + $0xc8] sm:$0xff]
        %v2081 = vld [vmem:[%s3 + $0xd0] sm:$0xff]
        %v2082 = vld [vmem:[%s3 + $0xd8] sm:$0xff]
        %v2083 = vld [vmem:[%s3 + $0xe0] sm:$0xff]
        %v2084 = vld [vmem:[%s3 + $0xe8] sm:$0xff]
        %v2085 = vld [vmem:[%s3 + $0xf0] sm:$0xff]
        %v2086 = vld [vmem:[%s3 + $0xf8] sm:$0xff]
        %v2087 = vld [vmem:[%s3 + $0x100] sm:$0xff]
        %v2088 = vld [vmem:[%s3 + $0x108] sm:$0xff]
        %v2089 = vld [vmem:[%s3 + $0x110] sm:$0xff]
        %v2090 = vld [vmem:[%s3 + $0x118] sm:$0xff]
        %v2091 = vld [vmem:[%s3 + $0x120] sm:$0xff]
        %v2092 = vld [vmem:[%s3 + $0x128] sm:$0xff]
        %v2093 = vld [vmem:[%s3 + $0x130] sm:$0xff]
        %v2094 = vld [vmem:[%s3 + $0x138] sm:$0xff]
        %v2095 = vld [vmem:[%s3 + $0x140] sm:$0xff]
        %v2096 = vld [vmem:[%s3 + $0x148] sm:$0xff]
        %v2097 = vld [vmem:[%s3 + $0x150] sm:$0xff]
        %v2098 = vld [vmem:[%s3 + $0x158] sm:$0xff]
        %v2099 = vld [vmem:[%s3 + $0x160] sm:$0xff]
        %v2100 = vld [vmem:[%s3 + $0x168] sm:$0xff]
        %v2101 = vld [vmem:[%s3 + $0x170] sm:$0xff]
        %v2102 = vld [vmem:[%s3 + $0x178] sm:$0xff]
        %v2103 = vld [vmem:[%s3 + $0x180] sm:$0xff]
        %v2104 = vld [vmem:[%s3 + $0x188] sm:$0xff]
        %v2105 = vld [vmem:[%s3 + $0x190] sm:$0xff]
        %v2106 = vld [vmem:[%s3 + $0x198] sm:$0xff]
        %v2107 = vld [vmem:[%s3 + $0x1a0] sm:$0xff]
        %v2108 = vld [vmem:[%s3 + $0x1a8] sm:$0xff]
        %v2109 = vld [vmem:[%s3 + $0x1b0] sm:$0xff]
        %v2110 = vld [vmem:[%s3 + $0x1b8] sm:$0xff]
        %v2111 = vld [vmem:[%s3 + $0x1c0] sm:$0xff]
        %v2112 = vld [vmem:[%s3 + $0x1c8] sm:$0xff]
        %v2113 = vld [vmem:[%s3 + $0x1d0] sm:$0xff]
        %v2114 = vld [vmem:[%s3 + $0x1d8] sm:$0xff]
        %v2115 = vld [vmem:[%s3 + $0x1e0] sm:$0xff]
        %v2116 = vld [vmem:[%s3 + $0x1e8] sm:$0xff]
        %v2117 = vld [vmem:[%s3 + $0x1f0] sm:$0xff]
        %v2118 = vld [vmem:[%s3 + $0x1f8] sm:$0xff]
        %v2119 = vld [vmem:[%s3 + $0x200] sm:$0xff]
        %v2120 = vld [vmem:[%s3 + $0x208] sm:$0xff]
        %v2121 = vld [vmem:[%s3 + $0x210] sm:$0xff]
        %v2122 = vld [vmem:[%s3 + $0x218] sm:$0xff]
        %v2123 = vld [vmem:[%s3 + $0x220] sm:$0xff]
        %v2124 = vld [vmem:[%s3 + $0x228] sm:$0xff]
        %v2125 = vld [vmem:[%s3 + $0x230] sm:$0xff]
        %v2126 = vld [vmem:[%s3 + $0x238] sm:$0xff]
        %v2127 = vld [vmem:[%s3 + $0x240] sm:$0xff]
        %v2128 = vld [vmem:[%s3 + $0x248] sm:$0xff]
        %v2129 = vld [vmem:[%s3 + $0x250] sm:$0xff]
        %v2130 = vld [vmem:[%s3 + $0x258] sm:$0xff]
        %v2131 = vld [vmem:[%s3 + $0x260] sm:$0xff]
        %v2132 = vld [vmem:[%s3 + $0x268] sm:$0xff]
        %v2133 = vld [vmem:[%s3 + $0x270] sm:$0xff]
        %v2134 = vld [vmem:[%s3 + $0x278] sm:$0xff]
        %v2135 = vld [vmem:[%s3 + $0x280] sm:$0xff]
        %v2136 = vld [vmem:[%s3 + $0x288] sm:$0xff]
        %v2137 = vld [vmem:[%s3 + $0x290] sm:$0xff]
        %v2138 = vld [vmem:[%s3 + $0x298] sm:$0xff]
        %v2139 = vld [vmem:[%s3 + $0x2a0] sm:$0xff]
        %v2140 = vld [vmem:[%s3 + $0x2a8] sm:$0xff]
        %v2141 = vld [vmem:[%s3 + $0x2b0] sm:$0xff]
        %v2142 = vld [vmem:[%s3 + $0x2b8] sm:$0xff]
        %v2143 = vld [vmem:[%s3 + $0x2c0] sm:$0xff]
        %v2144 = vld [vmem:[%s3 + $0x2c8] sm:$0xff]
        %v2145 = vld [vmem:[%s3 + $0x2d0] sm:$0xff]
        %v2146 = vld [vmem:[%s3 + $0x2d8] sm:$0xff]
        %v2147 = vld [vmem:[%s3 + $0x2e0] sm:$0xff]
        %v2148 = vld [vmem:[%s3 + $0x2e8] sm:$0xff]
        %v2149 = vld [vmem:[%s3 + $0x2f0] sm:$0xff]
        %v2150 = vld [vmem:[%s3 + $0x2f8] sm:$0xff]
        %v2151 = vld [vmem:[%s3 + $0x300] sm:$0xff]
        %v2152 = vld [vmem:[%s3 + $0x308] sm:$0xff]
        %v2153 = vld [vmem:[%s3 + $0x310] sm:$0xff]
        %v2154 = vld [vmem:[%s3 + $0x318] sm:$0xff]
        %v2155 = vld [vmem:[%s3 + $0x320] sm:$0xff]
        %v2156 = vld [vmem:[%s3 + $0x328] sm:$0xff]
        %v2157 = vld [vmem:[%s3 + $0x330] sm:$0xff]
        %v2158 = vld [vmem:[%s3 + $0x338] sm:$0xff]
        %v2159 = vld [vmem:[%s3 + $0x340] sm:$0xff]
        %v2160 = vld [vmem:[%s3 + $0x348] sm:$0xff]
        %v2161 = vld [vmem:[%s3 + $0x350] sm:$0xff]
        %v2162 = vld [vmem:[%s3 + $0x358] sm:$0xff]
        %v2163 = vld [vmem:[%s3 + $0x360] sm:$0xff]
        %v2164 = vld [vmem:[%s3 + $0x368] sm:$0xff]
        %v2165 = vld [vmem:[%s3 + $0x370] sm:$0xff]
        %v2166 = vld [vmem:[%s3 + $0x378] sm:$0xff]
        %v2167 = vld [vmem:[%s3 + $0x380] sm:$0xff]
        %v2168 = vld [vmem:[%s3 + $0x388] sm:$0xff]
        %v2169 = vld [vmem:[%s3 + $0x390] sm:$0xff]
        %v2170 = vld [vmem:[%s3 + $0x398] sm:$0xff]
        %v2171 = vld [vmem:[%s3 + $0x3a0] sm:$0xff]
        %v2172 = vld [vmem:[%s3 + $0x3a8] sm:$0xff]
        %v2173 = vld [vmem:[%s3 + $0x3b0] sm:$0xff]
        %v2174 = vld [vmem:[%s3 + $0x3b8] sm:$0xff]
        %v2175 = vld [vmem:[%s3 + $0x3c0] sm:$0xff]
        %v2176 = vld [vmem:[%s3 + $0x3c8] sm:$0xff]
        %v2177 = vld [vmem:[%s3 + $0x3d0] sm:$0xff]
        %v2178 = vld [vmem:[%s3 + $0x3d8] sm:$0xff]
        %v2179 = vld [vmem:[%s3 + $0x3e0] sm:$0xff]
        %v2180 = vld [vmem:[%s3 + $0x3e8] sm:$0xff]
        %v2181 = vld [vmem:[%s3 + $0x3f0] sm:$0xff]
        %v2182 = vld [vmem:[%s3 + $0x3f8] sm:$0xff]
        %v2183 = vpack.c.bf16 %v1929, %v1927
        %v2184 = vpack.c.bf16 %v1930, %v1928
        %v2185 = vpack.c.bf16 %v1933, %v1931
        %v2186 = vpack.c.bf16 %v1934, %v1932
        %v2187 = vpack.c.bf16 %v1937, %v1935
        %v2188 = vpack.c.bf16 %v1938, %v1936
        %v2189 = vpack.c.bf16 %v1941, %v1939
        %v2190 = vpack.c.bf16 %v1942, %v1940
        %v2191 = vpack.c.bf16 %v1945, %v1943
        %v2192 = vpack.c.bf16 %v1946, %v1944
        %v2193 = vpack.c.bf16 %v1949, %v1947
        %v2194 = vpack.c.bf16 %v1950, %v1948
        %v2195 = vpack.c.bf16 %v1953, %v1951
        %v2196 = vpack.c.bf16 %v1954, %v1952
        %v2197 = vpack.c.bf16 %v1957, %v1955
        %v2198 = vpack.c.bf16 %v1958, %v1956
        %v2199 = vpack.c.bf16 %v1961, %v1959
        %v2200 = vpack.c.bf16 %v1962, %v1960
        %v2201 = vpack.c.bf16 %v1965, %v1963
        %v2202 = vpack.c.bf16 %v1966, %v1964
        %v2203 = vpack.c.bf16 %v1969, %v1967
        %v2204 = vpack.c.bf16 %v1970, %v1968
        %v2205 = vpack.c.bf16 %v1973, %v1971
        %v2206 = vpack.c.bf16 %v1974, %v1972
        %v2207 = vpack.c.bf16 %v1977, %v1975
        %v2208 = vpack.c.bf16 %v1978, %v1976
        %v2209 = vpack.c.bf16 %v1981, %v1979
        %v2210 = vpack.c.bf16 %v1982, %v1980
        %v2211 = vpack.c.bf16 %v1985, %v1983
        %v2212 = vpack.c.bf16 %v1986, %v1984
        %v2213 = vpack.c.bf16 %v1989, %v1987
        %v2214 = vpack.c.bf16 %v1990, %v1988
        %v2215 = vpack.c.bf16 %v1993, %v1991
        %v2216 = vpack.c.bf16 %v1994, %v1992
        %v2217 = vpack.c.bf16 %v1997, %v1995
        %v2218 = vpack.c.bf16 %v1998, %v1996
        %v2219 = vpack.c.bf16 %v2001, %v1999
        %v2220 = vpack.c.bf16 %v2002, %v2000
        %v2221 = vpack.c.bf16 %v2005, %v2003
        %v2222 = vpack.c.bf16 %v2006, %v2004
        %v2223 = vpack.c.bf16 %v2009, %v2007
        %v2224 = vpack.c.bf16 %v2010, %v2008
        %v2225 = vpack.c.bf16 %v2013, %v2011
        %v2226 = vpack.c.bf16 %v2014, %v2012
        %v2227 = vpack.c.bf16 %v2017, %v2015
        %v2228 = vpack.c.bf16 %v2018, %v2016
        %v2229 = vpack.c.bf16 %v2021, %v2019
        %v2230 = vpack.c.bf16 %v2022, %v2020
        %v2231 = vpack.c.bf16 %v2025, %v2023
        %v2232 = vpack.c.bf16 %v2026, %v2024
        %v2233 = vpack.c.bf16 %v2029, %v2027
        %v2234 = vpack.c.bf16 %v2030, %v2028
        %v2235 = vpack.c.bf16 %v2033, %v2031
        %v2236 = vpack.c.bf16 %v2034, %v2032
        %v2237 = vpack.c.bf16 %v2037, %v2035
        %v2238 = vpack.c.bf16 %v2038, %v2036
        %v2239 = vpack.c.bf16 %v2041, %v2039
        %v2240 = vpack.c.bf16 %v2042, %v2040
        %v2241 = vpack.c.bf16 %v2045, %v2043
        %v2242 = vpack.c.bf16 %v2046, %v2044
        %v2243 = vpack.c.bf16 %v2049, %v2047
        %v2244 = vpack.c.bf16 %v2050, %v2048
        %v2245 = vpack.c.bf16 %v2053, %v2051
        %v2246 = vpack.c.bf16 %v2054, %v2052
        %v2247 = vld [vmem:[%s4] sm:$0xff]
        %v2248 = vld [vmem:[%s4 + $0x8] sm:$0xff]
        %v2249 = vld [vmem:[%s4 + $0x10] sm:$0xff]
        %v2250 = vld [vmem:[%s4 + $0x18] sm:$0xff]
        %v2251 = vld [vmem:[%s4 + $0x20] sm:$0xff]
        %v2252 = vld [vmem:[%s4 + $0x28] sm:$0xff]
        %v2253 = vld [vmem:[%s4 + $0x30] sm:$0xff]
        %v2254 = vld [vmem:[%s4 + $0x38] sm:$0xff]
        %v2255 = vld [vmem:[%s4 + $0x40] sm:$0xff]
        %v2256 = vld [vmem:[%s4 + $0x48] sm:$0xff]
        %v2257 = vld [vmem:[%s4 + $0x50] sm:$0xff]
        %v2258 = vld [vmem:[%s4 + $0x58] sm:$0xff]
        %v2259 = vld [vmem:[%s4 + $0x60] sm:$0xff]
        %v2260 = vld [vmem:[%s4 + $0x68] sm:$0xff]
        %v2261 = vld [vmem:[%s4 + $0x70] sm:$0xff]
        %v2262 = vld [vmem:[%s4 + $0x78] sm:$0xff]
        %v2263 = vld [vmem:[%s4 + $0x80] sm:$0xff]
        %v2264 = vld [vmem:[%s4 + $0x88] sm:$0xff]
        %v2265 = vld [vmem:[%s4 + $0x90] sm:$0xff]
        %v2266 = vld [vmem:[%s4 + $0x98] sm:$0xff]
        %v2267 = vld [vmem:[%s4 + $0xa0] sm:$0xff]
        %v2268 = vld [vmem:[%s4 + $0xa8] sm:$0xff]
        %v2269 = vld [vmem:[%s4 + $0xb0] sm:$0xff]
        %v2270 = vld [vmem:[%s4 + $0xb8] sm:$0xff]
        %v2271 = vld [vmem:[%s4 + $0xc0] sm:$0xff]
        %v2272 = vld [vmem:[%s4 + $0xc8] sm:$0xff]
        %v2273 = vld [vmem:[%s4 + $0xd0] sm:$0xff]
        %v2274 = vld [vmem:[%s4 + $0xd8] sm:$0xff]
        %v2275 = vld [vmem:[%s4 + $0xe0] sm:$0xff]
        %v2276 = vld [vmem:[%s4 + $0xe8] sm:$0xff]
        %v2277 = vld [vmem:[%s4 + $0xf0] sm:$0xff]
        %v2278 = vld [vmem:[%s4 + $0xf8] sm:$0xff]
        %v2279 = vld [vmem:[%s4 + $0x100] sm:$0xff]
        %v2280 = vld [vmem:[%s4 + $0x108] sm:$0xff]
        %v2281 = vld [vmem:[%s4 + $0x110] sm:$0xff]
        %v2282 = vld [vmem:[%s4 + $0x118] sm:$0xff]
        %v2283 = vld [vmem:[%s4 + $0x120] sm:$0xff]
        %v2284 = vld [vmem:[%s4 + $0x128] sm:$0xff]
        %v2285 = vld [vmem:[%s4 + $0x130] sm:$0xff]
        %v2286 = vld [vmem:[%s4 + $0x138] sm:$0xff]
        %v2287 = vld [vmem:[%s4 + $0x140] sm:$0xff]
        %v2288 = vld [vmem:[%s4 + $0x148] sm:$0xff]
        %v2289 = vld [vmem:[%s4 + $0x150] sm:$0xff]
        %v2290 = vld [vmem:[%s4 + $0x158] sm:$0xff]
        %v2291 = vld [vmem:[%s4 + $0x160] sm:$0xff]
        %v2292 = vld [vmem:[%s4 + $0x168] sm:$0xff]
        %v2293 = vld [vmem:[%s4 + $0x170] sm:$0xff]
        %v2294 = vld [vmem:[%s4 + $0x178] sm:$0xff]
        %v2295 = vld [vmem:[%s4 + $0x180] sm:$0xff]
        %v2296 = vld [vmem:[%s4 + $0x188] sm:$0xff]
        %v2297 = vld [vmem:[%s4 + $0x190] sm:$0xff]
        %v2298 = vld [vmem:[%s4 + $0x198] sm:$0xff]
        %v2299 = vld [vmem:[%s4 + $0x1a0] sm:$0xff]
        %v2300 = vld [vmem:[%s4 + $0x1a8] sm:$0xff]
        %v2301 = vld [vmem:[%s4 + $0x1b0] sm:$0xff]
        %v2302 = vld [vmem:[%s4 + $0x1b8] sm:$0xff]
        %v2303 = vld [vmem:[%s4 + $0x1c0] sm:$0xff]
        %v2304 = vld [vmem:[%s4 + $0x1c8] sm:$0xff]
        %v2305 = vld [vmem:[%s4 + $0x1d0] sm:$0xff]
        %v2306 = vld [vmem:[%s4 + $0x1d8] sm:$0xff]
        %v2307 = vld [vmem:[%s4 + $0x1e0] sm:$0xff]
        %v2308 = vld [vmem:[%s4 + $0x1e8] sm:$0xff]
        %v2309 = vld [vmem:[%s4 + $0x1f0] sm:$0xff]
        %v2310 = vld [vmem:[%s4 + $0x1f8] sm:$0xff]
        %2312 = vset.pattern.permute.xlu0 0
        %2313 = vperm.xlu0 %2312, %v2247
        %v2314 = vpop.permute.xlu0 %2313
        %2317 = vset.pattern.permute.xlu0 0
        %2318 = vperm.xlu0 %2317, %v2248
        %v2319 = vpop.permute.xlu0 %2318
        %2322 = vset.pattern.permute.xlu0 0
        %2323 = vperm.xlu0 %2322, %v2249
        %v2324 = vpop.permute.xlu0 %2323
        %2327 = vset.pattern.permute.xlu0 0
        %2328 = vperm.xlu0 %2327, %v2250
        %v2329 = vpop.permute.xlu0 %2328
        %2332 = vset.pattern.permute.xlu0 0
        %2333 = vperm.xlu0 %2332, %v2251
        %v2334 = vpop.permute.xlu0 %2333
        %2337 = vset.pattern.permute.xlu0 0
        %2338 = vperm.xlu0 %2337, %v2252
        %v2339 = vpop.permute.xlu0 %2338
        %2342 = vset.pattern.permute.xlu0 0
        %2343 = vperm.xlu0 %2342, %v2253
        %v2344 = vpop.permute.xlu0 %2343
        %2347 = vset.pattern.permute.xlu0 0
        %2348 = vperm.xlu0 %2347, %v2254
        %v2349 = vpop.permute.xlu0 %2348
        %2352 = vset.pattern.permute.xlu0 0
        %2353 = vperm.xlu0 %2352, %v2255
        %v2354 = vpop.permute.xlu0 %2353
        %2357 = vset.pattern.permute.xlu0 0
        %2358 = vperm.xlu0 %2357, %v2256
        %v2359 = vpop.permute.xlu0 %2358
        %2362 = vset.pattern.permute.xlu0 0
        %2363 = vperm.xlu0 %2362, %v2257
        %v2364 = vpop.permute.xlu0 %2363
        %2367 = vset.pattern.permute.xlu0 0
        %2368 = vperm.xlu0 %2367, %v2258
        %v2369 = vpop.permute.xlu0 %2368
        %2372 = vset.pattern.permute.xlu0 0
        %2373 = vperm.xlu0 %2372, %v2259
        %v2374 = vpop.permute.xlu0 %2373
        %2377 = vset.pattern.permute.xlu0 0
        %2378 = vperm.xlu0 %2377, %v2260
        %v2379 = vpop.permute.xlu0 %2378
        %2382 = vset.pattern.permute.xlu0 0
        %2383 = vperm.xlu0 %2382, %v2261
        %v2384 = vpop.permute.xlu0 %2383
        %2387 = vset.pattern.permute.xlu0 0
        %2388 = vperm.xlu0 %2387, %v2262
        %v2389 = vpop.permute.xlu0 %2388
        %2392 = vset.pattern.permute.xlu0 0
        %2393 = vperm.xlu0 %2392, %v2263
        %v2394 = vpop.permute.xlu0 %2393
        %2397 = vset.pattern.permute.xlu0 0
        %2398 = vperm.xlu0 %2397, %v2264
        %v2399 = vpop.permute.xlu0 %2398
        %2402 = vset.pattern.permute.xlu0 0
        %2403 = vperm.xlu0 %2402, %v2265
        %v2404 = vpop.permute.xlu0 %2403
        %2407 = vset.pattern.permute.xlu0 0
        %2408 = vperm.xlu0 %2407, %v2266
        %v2409 = vpop.permute.xlu0 %2408
        %2412 = vset.pattern.permute.xlu0 0
        %2413 = vperm.xlu0 %2412, %v2267
        %v2414 = vpop.permute.xlu0 %2413
        %2417 = vset.pattern.permute.xlu0 0
        %2418 = vperm.xlu0 %2417, %v2268
        %v2419 = vpop.permute.xlu0 %2418
        %2422 = vset.pattern.permute.xlu0 0
        %2423 = vperm.xlu0 %2422, %v2269
        %v2424 = vpop.permute.xlu0 %2423
        %2427 = vset.pattern.permute.xlu0 0
        %2428 = vperm.xlu0 %2427, %v2270
        %v2429 = vpop.permute.xlu0 %2428
        %2432 = vset.pattern.permute.xlu0 0
        %2433 = vperm.xlu0 %2432, %v2271
        %v2434 = vpop.permute.xlu0 %2433
        %2437 = vset.pattern.permute.xlu0 0
        %2438 = vperm.xlu0 %2437, %v2272
        %v2439 = vpop.permute.xlu0 %2438
        %2442 = vset.pattern.permute.xlu0 0
        %2443 = vperm.xlu0 %2442, %v2273
        %v2444 = vpop.permute.xlu0 %2443
        %2447 = vset.pattern.permute.xlu0 0
        %2448 = vperm.xlu0 %2447, %v2274
        %v2449 = vpop.permute.xlu0 %2448
        %2452 = vset.pattern.permute.xlu0 0
        %2453 = vperm.xlu0 %2452, %v2275
        %v2454 = vpop.permute.xlu0 %2453
        %2457 = vset.pattern.permute.xlu0 0
        %2458 = vperm.xlu0 %2457, %v2276
        %v2459 = vpop.permute.xlu0 %2458
        %2462 = vset.pattern.permute.xlu0 0
        %2463 = vperm.xlu0 %2462, %v2277
        %v2464 = vpop.permute.xlu0 %2463
        %2467 = vset.pattern.permute.xlu0 0
        %2468 = vperm.xlu0 %2467, %v2278
        %v2469 = vpop.permute.xlu0 %2468
        %2472 = vset.pattern.permute.xlu0 0
        %2473 = vperm.xlu0 %2472, %v2279
        %v2474 = vpop.permute.xlu0 %2473
        %2477 = vset.pattern.permute.xlu0 0
        %2478 = vperm.xlu0 %2477, %v2280
        %v2479 = vpop.permute.xlu0 %2478
        %2482 = vset.pattern.permute.xlu0 0
        %2483 = vperm.xlu0 %2482, %v2281
        %v2484 = vpop.permute.xlu0 %2483
        %2487 = vset.pattern.permute.xlu0 0
        %2488 = vperm.xlu0 %2487, %v2282
        %v2489 = vpop.permute.xlu0 %2488
        %2492 = vset.pattern.permute.xlu0 0
        %2493 = vperm.xlu0 %2492, %v2283
        %v2494 = vpop.permute.xlu0 %2493
        %2497 = vset.pattern.permute.xlu0 0
        %2498 = vperm.xlu0 %2497, %v2284
        %v2499 = vpop.permute.xlu0 %2498
        %2502 = vset.pattern.permute.xlu0 0
        %2503 = vperm.xlu0 %2502, %v2285
        %v2504 = vpop.permute.xlu0 %2503
        %2507 = vset.pattern.permute.xlu0 0
        %2508 = vperm.xlu0 %2507, %v2286
        %v2509 = vpop.permute.xlu0 %2508
        %2512 = vset.pattern.permute.xlu0 0
        %2513 = vperm.xlu0 %2512, %v2287
        %v2514 = vpop.permute.xlu0 %2513
        %2517 = vset.pattern.permute.xlu0 0
        %2518 = vperm.xlu0 %2517, %v2288
        %v2519 = vpop.permute.xlu0 %2518
        %2522 = vset.pattern.permute.xlu0 0
        %2523 = vperm.xlu0 %2522, %v2289
        %v2524 = vpop.permute.xlu0 %2523
        %2527 = vset.pattern.permute.xlu0 0
        %2528 = vperm.xlu0 %2527, %v2290
        %v2529 = vpop.permute.xlu0 %2528
        %2532 = vset.pattern.permute.xlu0 0
        %2533 = vperm.xlu0 %2532, %v2291
        %v2534 = vpop.permute.xlu0 %2533
        %2537 = vset.pattern.permute.xlu0 0
        %2538 = vperm.xlu0 %2537, %v2292
        %v2539 = vpop.permute.xlu0 %2538
        %2542 = vset.pattern.permute.xlu0 0
        %2543 = vperm.xlu0 %2542, %v2293
        %v2544 = vpop.permute.xlu0 %2543
        %2547 = vset.pattern.permute.xlu0 0
        %2548 = vperm.xlu0 %2547, %v2294
        %v2549 = vpop.permute.xlu0 %2548
        %2552 = vset.pattern.permute.xlu0 0
        %2553 = vperm.xlu0 %2552, %v2295
        %v2554 = vpop.permute.xlu0 %2553
        %2557 = vset.pattern.permute.xlu0 0
        %2558 = vperm.xlu0 %2557, %v2296
        %v2559 = vpop.permute.xlu0 %2558
        %2562 = vset.pattern.permute.xlu0 0
        %2563 = vperm.xlu0 %2562, %v2297
        %v2564 = vpop.permute.xlu0 %2563
        %2567 = vset.pattern.permute.xlu0 0
        %2568 = vperm.xlu0 %2567, %v2298
        %v2569 = vpop.permute.xlu0 %2568
        %2572 = vset.pattern.permute.xlu0 0
        %2573 = vperm.xlu0 %2572, %v2299
        %v2574 = vpop.permute.xlu0 %2573
        %2577 = vset.pattern.permute.xlu0 0
        %2578 = vperm.xlu0 %2577, %v2300
        %v2579 = vpop.permute.xlu0 %2578
        %2582 = vset.pattern.permute.xlu0 0
        %2583 = vperm.xlu0 %2582, %v2301
        %v2584 = vpop.permute.xlu0 %2583
        %2587 = vset.pattern.permute.xlu0 0
        %2588 = vperm.xlu0 %2587, %v2302
        %v2589 = vpop.permute.xlu0 %2588
        %2592 = vset.pattern.permute.xlu0 0
        %2593 = vperm.xlu0 %2592, %v2303
        %v2594 = vpop.permute.xlu0 %2593
        %2597 = vset.pattern.permute.xlu0 0
        %2598 = vperm.xlu0 %2597, %v2304
        %v2599 = vpop.permute.xlu0 %2598
        %2602 = vset.pattern.permute.xlu0 0
        %2603 = vperm.xlu0 %2602, %v2305
        %v2604 = vpop.permute.xlu0 %2603
        %2607 = vset.pattern.permute.xlu0 0
        %2608 = vperm.xlu0 %2607, %v2306
        %v2609 = vpop.permute.xlu0 %2608
        %2612 = vset.pattern.permute.xlu0 0
        %2613 = vperm.xlu0 %2612, %v2307
        %v2614 = vpop.permute.xlu0 %2613
        %2617 = vset.pattern.permute.xlu0 0
        %2618 = vperm.xlu0 %2617, %v2308
        %v2619 = vpop.permute.xlu0 %2618
        %2622 = vset.pattern.permute.xlu0 0
        %2623 = vperm.xlu0 %2622, %v2309
        %v2624 = vpop.permute.xlu0 %2623
        %2627 = vset.pattern.permute.xlu0 0
        %2628 = vperm.xlu0 %2627, %v2310
        %v2629 = vpop.permute.xlu0 %2628
        %v2759 = vunpack.c.l.b16 %v2055
        %v2760 = vunpack.c.h.b16 %v2055
        %v2761 = vunpack.c.l.b16 %v2056
        %v2762 = vunpack.c.h.b16 %v2056
        %v2763 = vunpack.c.l.b16 %v2057
        %v2764 = vunpack.c.h.b16 %v2057
        %v2765 = vunpack.c.l.b16 %v2058
        %v2766 = vunpack.c.h.b16 %v2058
        %v2767 = vunpack.c.l.b16 %v2059
        %v2768 = vunpack.c.h.b16 %v2059
        %v2769 = vunpack.c.l.b16 %v2060
        %v2770 = vunpack.c.h.b16 %v2060
        %v2771 = vunpack.c.l.b16 %v2061
        %v2772 = vunpack.c.h.b16 %v2061
        %v2773 = vunpack.c.l.b16 %v2062
        %v2774 = vunpack.c.h.b16 %v2062
        %v2775 = vunpack.c.l.b16 %v2063
        %v2776 = vunpack.c.h.b16 %v2063
        %v2777 = vunpack.c.l.b16 %v2064
        %v2778 = vunpack.c.h.b16 %v2064
        %v2779 = vunpack.c.l.b16 %v2065
        %v2780 = vunpack.c.h.b16 %v2065
        %v2781 = vunpack.c.l.b16 %v2066
        %v2782 = vunpack.c.h.b16 %v2066
        %v2783 = vunpack.c.l.b16 %v2067
        %v2784 = vunpack.c.h.b16 %v2067
        %v2785 = vunpack.c.l.b16 %v2068
        %v2786 = vunpack.c.h.b16 %v2068
        %v2787 = vunpack.c.l.b16 %v2069
        %v2788 = vunpack.c.h.b16 %v2069
        %v2789 = vunpack.c.l.b16 %v2070
        %v2790 = vunpack.c.h.b16 %v2070
        %v2791 = vunpack.c.l.b16 %v2071
        %v2792 = vunpack.c.h.b16 %v2071
        %v2793 = vunpack.c.l.b16 %v2072
        %v2794 = vunpack.c.h.b16 %v2072
        %v2795 = vunpack.c.l.b16 %v2073
        %v2796 = vunpack.c.h.b16 %v2073
        %v2797 = vunpack.c.l.b16 %v2074
        %v2798 = vunpack.c.h.b16 %v2074
        %v2799 = vunpack.c.l.b16 %v2075
        %v2800 = vunpack.c.h.b16 %v2075
        %v2801 = vunpack.c.l.b16 %v2076
        %v2802 = vunpack.c.h.b16 %v2076
        %v2803 = vunpack.c.l.b16 %v2077
        %v2804 = vunpack.c.h.b16 %v2077
        %v2805 = vunpack.c.l.b16 %v2078
        %v2806 = vunpack.c.h.b16 %v2078
        %v2807 = vunpack.c.l.b16 %v2079
        %v2808 = vunpack.c.h.b16 %v2079
        %v2809 = vunpack.c.l.b16 %v2080
        %v2810 = vunpack.c.h.b16 %v2080
        %v2811 = vunpack.c.l.b16 %v2081
        %v2812 = vunpack.c.h.b16 %v2081
        %v2813 = vunpack.c.l.b16 %v2082
        %v2814 = vunpack.c.h.b16 %v2082
        %v2815 = vunpack.c.l.b16 %v2083
        %v2816 = vunpack.c.h.b16 %v2083
        %v2817 = vunpack.c.l.b16 %v2084
        %v2818 = vunpack.c.h.b16 %v2084
        %v2819 = vunpack.c.l.b16 %v2085
        %v2820 = vunpack.c.h.b16 %v2085
        %v2821 = vunpack.c.l.b16 %v2086
        %v2822 = vunpack.c.h.b16 %v2086
        %v2823 = vunpack.c.l.b16 %v2087
        %v2824 = vunpack.c.h.b16 %v2087
        %v2825 = vunpack.c.l.b16 %v2088
        %v2826 = vunpack.c.h.b16 %v2088
        %v2827 = vunpack.c.l.b16 %v2089
        %v2828 = vunpack.c.h.b16 %v2089
        %v2829 = vunpack.c.l.b16 %v2090
        %v2830 = vunpack.c.h.b16 %v2090
        %v2831 = vunpack.c.l.b16 %v2091
        %v2832 = vunpack.c.h.b16 %v2091
        %v2833 = vunpack.c.l.b16 %v2092
        %v2834 = vunpack.c.h.b16 %v2092
        %v2835 = vunpack.c.l.b16 %v2093
        %v2836 = vunpack.c.h.b16 %v2093
        %v2837 = vunpack.c.l.b16 %v2094
        %v2838 = vunpack.c.h.b16 %v2094
        %v2839 = vunpack.c.l.b16 %v2095
        %v2840 = vunpack.c.h.b16 %v2095
        %v2841 = vunpack.c.l.b16 %v2096
        %v2842 = vunpack.c.h.b16 %v2096
        %v2843 = vunpack.c.l.b16 %v2097
        %v2844 = vunpack.c.h.b16 %v2097
        %v2845 = vunpack.c.l.b16 %v2098
        %v2846 = vunpack.c.h.b16 %v2098
        %v2847 = vunpack.c.l.b16 %v2099
        %v2848 = vunpack.c.h.b16 %v2099
        %v2849 = vunpack.c.l.b16 %v2100
        %v2850 = vunpack.c.h.b16 %v2100
        %v2851 = vunpack.c.l.b16 %v2101
        %v2852 = vunpack.c.h.b16 %v2101
        %v2853 = vunpack.c.l.b16 %v2102
        %v2854 = vunpack.c.h.b16 %v2102
        %v2855 = vunpack.c.l.b16 %v2103
        %v2856 = vunpack.c.h.b16 %v2103
        %v2857 = vunpack.c.l.b16 %v2104
        %v2858 = vunpack.c.h.b16 %v2104
        %v2859 = vunpack.c.l.b16 %v2105
        %v2860 = vunpack.c.h.b16 %v2105
        %v2861 = vunpack.c.l.b16 %v2106
        %v2862 = vunpack.c.h.b16 %v2106
        %v2863 = vunpack.c.l.b16 %v2107
        %v2864 = vunpack.c.h.b16 %v2107
        %v2865 = vunpack.c.l.b16 %v2108
        %v2866 = vunpack.c.h.b16 %v2108
        %v2867 = vunpack.c.l.b16 %v2109
        %v2868 = vunpack.c.h.b16 %v2109
        %v2869 = vunpack.c.l.b16 %v2110
        %v2870 = vunpack.c.h.b16 %v2110
        %v2871 = vunpack.c.l.b16 %v2111
        %v2872 = vunpack.c.h.b16 %v2111
        %v2873 = vunpack.c.l.b16 %v2112
        %v2874 = vunpack.c.h.b16 %v2112
        %v2875 = vunpack.c.l.b16 %v2113
        %v2876 = vunpack.c.h.b16 %v2113
        %v2877 = vunpack.c.l.b16 %v2114
        %v2878 = vunpack.c.h.b16 %v2114
        %v2879 = vunpack.c.l.b16 %v2115
        %v2880 = vunpack.c.h.b16 %v2115
        %v2881 = vunpack.c.l.b16 %v2116
        %v2882 = vunpack.c.h.b16 %v2116
        %v2883 = vunpack.c.l.b16 %v2117
        %v2884 = vunpack.c.h.b16 %v2117
        %v2885 = vunpack.c.l.b16 %v2118
        %v2886 = vunpack.c.h.b16 %v2118
        %v2887 = vunpack.c.l.b16 %v2119
        %v2888 = vunpack.c.h.b16 %v2119
        %v2889 = vunpack.c.l.b16 %v2120
        %v2890 = vunpack.c.h.b16 %v2120
        %v2891 = vunpack.c.l.b16 %v2121
        %v2892 = vunpack.c.h.b16 %v2121
        %v2893 = vunpack.c.l.b16 %v2122
        %v2894 = vunpack.c.h.b16 %v2122
        %v2895 = vunpack.c.l.b16 %v2123
        %v2896 = vunpack.c.h.b16 %v2123
        %v2897 = vunpack.c.l.b16 %v2124
        %v2898 = vunpack.c.h.b16 %v2124
        %v2899 = vunpack.c.l.b16 %v2125
        %v2900 = vunpack.c.h.b16 %v2125
        %v2901 = vunpack.c.l.b16 %v2126
        %v2902 = vunpack.c.h.b16 %v2126
        %v2903 = vunpack.c.l.b16 %v2127
        %v2904 = vunpack.c.h.b16 %v2127
        %v2905 = vunpack.c.l.b16 %v2128
        %v2906 = vunpack.c.h.b16 %v2128
        %v2907 = vunpack.c.l.b16 %v2129
        %v2908 = vunpack.c.h.b16 %v2129
        %v2909 = vunpack.c.l.b16 %v2130
        %v2910 = vunpack.c.h.b16 %v2130
        %v2911 = vunpack.c.l.b16 %v2131
        %v2912 = vunpack.c.h.b16 %v2131
        %v2913 = vunpack.c.l.b16 %v2132
        %v2914 = vunpack.c.h.b16 %v2132
        %v2915 = vunpack.c.l.b16 %v2133
        %v2916 = vunpack.c.h.b16 %v2133
        %v2917 = vunpack.c.l.b16 %v2134
        %v2918 = vunpack.c.h.b16 %v2134
        %v2919 = vunpack.c.l.b16 %v2135
        %v2920 = vunpack.c.h.b16 %v2135
        %v2921 = vunpack.c.l.b16 %v2136
        %v2922 = vunpack.c.h.b16 %v2136
        %v2923 = vunpack.c.l.b16 %v2137
        %v2924 = vunpack.c.h.b16 %v2137
        %v2925 = vunpack.c.l.b16 %v2138
        %v2926 = vunpack.c.h.b16 %v2138
        %v2927 = vunpack.c.l.b16 %v2139
        %v2928 = vunpack.c.h.b16 %v2139
        %v2929 = vunpack.c.l.b16 %v2140
        %v2930 = vunpack.c.h.b16 %v2140
        %v2931 = vunpack.c.l.b16 %v2141
        %v2932 = vunpack.c.h.b16 %v2141
        %v2933 = vunpack.c.l.b16 %v2142
        %v2934 = vunpack.c.h.b16 %v2142
        %v2935 = vunpack.c.l.b16 %v2143
        %v2936 = vunpack.c.h.b16 %v2143
        %v2937 = vunpack.c.l.b16 %v2144
        %v2938 = vunpack.c.h.b16 %v2144
        %v2939 = vunpack.c.l.b16 %v2145
        %v2940 = vunpack.c.h.b16 %v2145
        %v2941 = vunpack.c.l.b16 %v2146
        %v2942 = vunpack.c.h.b16 %v2146
        %v2943 = vunpack.c.l.b16 %v2147
        %v2944 = vunpack.c.h.b16 %v2147
        %v2945 = vunpack.c.l.b16 %v2148
        %v2946 = vunpack.c.h.b16 %v2148
        %v2947 = vunpack.c.l.b16 %v2149
        %v2948 = vunpack.c.h.b16 %v2149
        %v2949 = vunpack.c.l.b16 %v2150
        %v2950 = vunpack.c.h.b16 %v2150
        %v2951 = vunpack.c.l.b16 %v2151
        %v2952 = vunpack.c.h.b16 %v2151
        %v2953 = vunpack.c.l.b16 %v2152
        %v2954 = vunpack.c.h.b16 %v2152
        %v2955 = vunpack.c.l.b16 %v2153
        %v2956 = vunpack.c.h.b16 %v2153
        %v2957 = vunpack.c.l.b16 %v2154
        %v2958 = vunpack.c.h.b16 %v2154
        %v2959 = vunpack.c.l.b16 %v2155
        %v2960 = vunpack.c.h.b16 %v2155
        %v2961 = vunpack.c.l.b16 %v2156
        %v2962 = vunpack.c.h.b16 %v2156
        %v2963 = vunpack.c.l.b16 %v2157
        %v2964 = vunpack.c.h.b16 %v2157
        %v2965 = vunpack.c.l.b16 %v2158
        %v2966 = vunpack.c.h.b16 %v2158
        %v2967 = vunpack.c.l.b16 %v2159
        %v2968 = vunpack.c.h.b16 %v2159
        %v2969 = vunpack.c.l.b16 %v2160
        %v2970 = vunpack.c.h.b16 %v2160
        %v2971 = vunpack.c.l.b16 %v2161
        %v2972 = vunpack.c.h.b16 %v2161
        %v2973 = vunpack.c.l.b16 %v2162
        %v2974 = vunpack.c.h.b16 %v2162
        %v2975 = vunpack.c.l.b16 %v2163
        %v2976 = vunpack.c.h.b16 %v2163
        %v2977 = vunpack.c.l.b16 %v2164
        %v2978 = vunpack.c.h.b16 %v2164
        %v2979 = vunpack.c.l.b16 %v2165
        %v2980 = vunpack.c.h.b16 %v2165
        %v2981 = vunpack.c.l.b16 %v2166
        %v2982 = vunpack.c.h.b16 %v2166
        %v2983 = vunpack.c.l.b16 %v2167
        %v2984 = vunpack.c.h.b16 %v2167
        %v2985 = vunpack.c.l.b16 %v2168
        %v2986 = vunpack.c.h.b16 %v2168
        %v2987 = vunpack.c.l.b16 %v2169
        %v2988 = vunpack.c.h.b16 %v2169
        %v2989 = vunpack.c.l.b16 %v2170
        %v2990 = vunpack.c.h.b16 %v2170
        %v2991 = vunpack.c.l.b16 %v2171
        %v2992 = vunpack.c.h.b16 %v2171
        %v2993 = vunpack.c.l.b16 %v2172
        %v2994 = vunpack.c.h.b16 %v2172
        %v2995 = vunpack.c.l.b16 %v2173
        %v2996 = vunpack.c.h.b16 %v2173
        %v2997 = vunpack.c.l.b16 %v2174
        %v2998 = vunpack.c.h.b16 %v2174
        %v2999 = vunpack.c.l.b16 %v2175
        %v3000 = vunpack.c.h.b16 %v2175
        %v3001 = vunpack.c.l.b16 %v2176
        %v3002 = vunpack.c.h.b16 %v2176
        %v3003 = vunpack.c.l.b16 %v2177
        %v3004 = vunpack.c.h.b16 %v2177
        %v3005 = vunpack.c.l.b16 %v2178
        %v3006 = vunpack.c.h.b16 %v2178
        %v3007 = vunpack.c.l.b16 %v2179
        %v3008 = vunpack.c.h.b16 %v2179
        %v3009 = vunpack.c.l.b16 %v2180
        %v3010 = vunpack.c.h.b16 %v2180
        %v3011 = vunpack.c.l.b16 %v2181
        %v3012 = vunpack.c.h.b16 %v2181
        %v3013 = vunpack.c.l.b16 %v2182
        %v3014 = vunpack.c.h.b16 %v2182
        %v3015 = vpack.c.b16 %v2763, %v2759
        %v3016 = vpack.c.b16 %v2764, %v2760
        %v3017 = vpack.c.b16 %v2765, %v2761
        %v3018 = vpack.c.b16 %v2766, %v2762
        %v3019 = vpack.c.b16 %v2771, %v2767
        %v3020 = vpack.c.b16 %v2772, %v2768
        %v3021 = vpack.c.b16 %v2773, %v2769
        %v3022 = vpack.c.b16 %v2774, %v2770
        %v3023 = vpack.c.b16 %v2779, %v2775
        %v3024 = vpack.c.b16 %v2780, %v2776
        %v3025 = vpack.c.b16 %v2781, %v2777
        %v3026 = vpack.c.b16 %v2782, %v2778
        %v3027 = vpack.c.b16 %v2787, %v2783
        %v3028 = vpack.c.b16 %v2788, %v2784
        %v3029 = vpack.c.b16 %v2789, %v2785
        %v3030 = vpack.c.b16 %v2790, %v2786
        %v3031 = vpack.c.b16 %v2795, %v2791
        %v3032 = vpack.c.b16 %v2796, %v2792
        %v3033 = vpack.c.b16 %v2797, %v2793
        %v3034 = vpack.c.b16 %v2798, %v2794
        %v3035 = vpack.c.b16 %v2803, %v2799
        %v3036 = vpack.c.b16 %v2804, %v2800
        %v3037 = vpack.c.b16 %v2805, %v2801
        %v3038 = vpack.c.b16 %v2806, %v2802
        %v3039 = vpack.c.b16 %v2811, %v2807
        %v3040 = vpack.c.b16 %v2812, %v2808
        %v3041 = vpack.c.b16 %v2813, %v2809
        %v3042 = vpack.c.b16 %v2814, %v2810
        %v3043 = vpack.c.b16 %v2819, %v2815
        %v3044 = vpack.c.b16 %v2820, %v2816
        %v3045 = vpack.c.b16 %v2821, %v2817
        %v3046 = vpack.c.b16 %v2822, %v2818
        %v3047 = vpack.c.b16 %v2827, %v2823
        %v3048 = vpack.c.b16 %v2828, %v2824
        %v3049 = vpack.c.b16 %v2829, %v2825
        %v3050 = vpack.c.b16 %v2830, %v2826
        %v3051 = vpack.c.b16 %v2835, %v2831
        %v3052 = vpack.c.b16 %v2836, %v2832
        %v3053 = vpack.c.b16 %v2837, %v2833
        %v3054 = vpack.c.b16 %v2838, %v2834
        %v3055 = vpack.c.b16 %v2843, %v2839
        %v3056 = vpack.c.b16 %v2844, %v2840
        %v3057 = vpack.c.b16 %v2845, %v2841
        %v3058 = vpack.c.b16 %v2846, %v2842
        %v3059 = vpack.c.b16 %v2851, %v2847
        %v3060 = vpack.c.b16 %v2852, %v2848
        %v3061 = vpack.c.b16 %v2853, %v2849
        %v3062 = vpack.c.b16 %v2854, %v2850
        %v3063 = vpack.c.b16 %v2859, %v2855
        %v3064 = vpack.c.b16 %v2860, %v2856
        %v3065 = vpack.c.b16 %v2861, %v2857
        %v3066 = vpack.c.b16 %v2862, %v2858
        %v3067 = vpack.c.b16 %v2867, %v2863
        %v3068 = vpack.c.b16 %v2868, %v2864
        %v3069 = vpack.c.b16 %v2869, %v2865
        %v3070 = vpack.c.b16 %v2870, %v2866
        %v3071 = vpack.c.b16 %v2875, %v2871
        %v3072 = vpack.c.b16 %v2876, %v2872
        %v3073 = vpack.c.b16 %v2877, %v2873
        %v3074 = vpack.c.b16 %v2878, %v2874
        %v3075 = vpack.c.b16 %v2883, %v2879
        %v3076 = vpack.c.b16 %v2884, %v2880
        %v3077 = vpack.c.b16 %v2885, %v2881
        %v3078 = vpack.c.b16 %v2886, %v2882
        %v3079 = vpack.c.b16 %v2891, %v2887
        %v3080 = vpack.c.b16 %v2892, %v2888
        %v3081 = vpack.c.b16 %v2893, %v2889
        %v3082 = vpack.c.b16 %v2894, %v2890
        %v3083 = vpack.c.b16 %v2899, %v2895
        %v3084 = vpack.c.b16 %v2900, %v2896
        %v3085 = vpack.c.b16 %v2901, %v2897
        %v3086 = vpack.c.b16 %v2902, %v2898
        %v3087 = vpack.c.b16 %v2907, %v2903
        %v3088 = vpack.c.b16 %v2908, %v2904
        %v3089 = vpack.c.b16 %v2909, %v2905
        %v3090 = vpack.c.b16 %v2910, %v2906
        %v3091 = vpack.c.b16 %v2915, %v2911
        %v3092 = vpack.c.b16 %v2916, %v2912
        %v3093 = vpack.c.b16 %v2917, %v2913
        %v3094 = vpack.c.b16 %v2918, %v2914
        %v3095 = vpack.c.b16 %v2923, %v2919
        %v3096 = vpack.c.b16 %v2924, %v2920
        %v3097 = vpack.c.b16 %v2925, %v2921
        %v3098 = vpack.c.b16 %v2926, %v2922
        %v3099 = vpack.c.b16 %v2931, %v2927
        %v3100 = vpack.c.b16 %v2932, %v2928
        %v3101 = vpack.c.b16 %v2933, %v2929
        %v3102 = vpack.c.b16 %v2934, %v2930
        %v3103 = vpack.c.b16 %v2939, %v2935
        %v3104 = vpack.c.b16 %v2940, %v2936
        %v3105 = vpack.c.b16 %v2941, %v2937
        %v3106 = vpack.c.b16 %v2942, %v2938
        %v3107 = vpack.c.b16 %v2947, %v2943
        %v3108 = vpack.c.b16 %v2948, %v2944
        %v3109 = vpack.c.b16 %v2949, %v2945
        %v3110 = vpack.c.b16 %v2950, %v2946
        %v3111 = vpack.c.b16 %v2955, %v2951
        %v3112 = vpack.c.b16 %v2956, %v2952
        %v3113 = vpack.c.b16 %v2957, %v2953
        %v3114 = vpack.c.b16 %v2958, %v2954
        %v3115 = vpack.c.b16 %v2963, %v2959
        %v3116 = vpack.c.b16 %v2964, %v2960
        %v3117 = vpack.c.b16 %v2965, %v2961
        %v3118 = vpack.c.b16 %v2966, %v2962
        %v3119 = vpack.c.b16 %v2971, %v2967
        %v3120 = vpack.c.b16 %v2972, %v2968
        %v3121 = vpack.c.b16 %v2973, %v2969
        %v3122 = vpack.c.b16 %v2974, %v2970
        %v3123 = vpack.c.b16 %v2979, %v2975
        %v3124 = vpack.c.b16 %v2980, %v2976
        %v3125 = vpack.c.b16 %v2981, %v2977
        %v3126 = vpack.c.b16 %v2982, %v2978
        %v3127 = vpack.c.b16 %v2987, %v2983
        %v3128 = vpack.c.b16 %v2988, %v2984
        %v3129 = vpack.c.b16 %v2989, %v2985
        %v3130 = vpack.c.b16 %v2990, %v2986
        %v3131 = vpack.c.b16 %v2995, %v2991
        %v3132 = vpack.c.b16 %v2996, %v2992
        %v3133 = vpack.c.b16 %v2997, %v2993
        %v3134 = vpack.c.b16 %v2998, %v2994
        %v3135 = vpack.c.b16 %v3003, %v2999
        %v3136 = vpack.c.b16 %v3004, %v3000
        %v3137 = vpack.c.b16 %v3005, %v3001
        %v3138 = vpack.c.b16 %v3006, %v3002
        %v3139 = vpack.c.b16 %v3011, %v3007
        %v3140 = vpack.c.b16 %v3012, %v3008
        %v3141 = vpack.c.b16 %v3013, %v3009
        %v3142 = vpack.c.b16 %v3014, %v3010
        %3271 = vmatprep.subr.bf16.mxu0 %v2184
        %3272 = vmatpush1.bf16.msra.mxu0 %v2183
        %3273 = vmatprep.subr.bf16.mxu0 %v2186
        %3274 = vmatpush1.bf16.msra.mxu0 %v2185
        %3275 = vmatprep.subr.bf16.mxu0 %v2188
        %3276 = vmatpush1.bf16.msra.mxu0 %v2187
        %3277 = vmatprep.subr.bf16.mxu0 %v2190
        %3278 = vmatpush1.bf16.msra.mxu0 %v2189
        %3279 = vmatprep.subr.bf16.mxu0 %v2192
        %3280 = vmatpush1.bf16.msra.mxu0 %v2191
        %3281 = vmatprep.subr.bf16.mxu0 %v2194
        %3282 = vmatpush1.bf16.msra.mxu0 %v2193
        %3283 = vmatprep.subr.bf16.mxu0 %v2196
        %3284 = vmatpush1.bf16.msra.mxu0 %v2195
        %3285 = vmatprep.subr.bf16.mxu0 %v2198
        %3286 = vmatpush1.bf16.msra.mxu0 %v2197
        %3287 = vmatprep.subr.bf16.mxu0 %v2200
        %3288 = vmatpush1.bf16.msra.mxu0 %v2199
        %3289 = vmatprep.subr.bf16.mxu0 %v2202
        %3290 = vmatpush1.bf16.msra.mxu0 %v2201
        %3291 = vmatprep.subr.bf16.mxu0 %v2204
        %3292 = vmatpush1.bf16.msra.mxu0 %v2203
        %3293 = vmatprep.subr.bf16.mxu0 %v2206
        %3294 = vmatpush1.bf16.msra.mxu0 %v2205
        %3295 = vmatprep.subr.bf16.mxu0 %v2208
        %3296 = vmatpush1.bf16.msra.mxu0 %v2207
        %3297 = vmatprep.subr.bf16.mxu0 %v2210
        %3298 = vmatpush1.bf16.msra.mxu0 %v2209
        %3299 = vmatprep.subr.bf16.mxu0 %v2212
        %3300 = vmatpush1.bf16.msra.mxu0 %v2211
        %3301 = vmatprep.subr.bf16.mxu0 %v2214
        %3302 = vmatpush1.bf16.msra.mxu0 %v2213
        %3303 = vmatprep.mubr.bf16.mxu0 %v3016
        %3304 = vmatmul.mubr.bf16.gmra.mrb[0].mxu0 %v3015
        %v3305 = vpop.f32.mrb[0].mxu0
        %v3306 = vadd.f32 %v2314, %v3305
        %v3307 = vpop.f32.mrb[0].mxu0
        %v3308 = vadd.f32 %v2314, %v3307
        %v3309 = vpop.f32.mrb[0].mxu0
        %v3310 = vadd.f32 %v2319, %v3309
        %v3311 = vpop.f32.mrb[0].mxu0
        %v3312 = vadd.f32 %v2319, %v3311
        %3313 = vmatprep.mubr.bf16.mxu0 %v3020
        %3314 = vmatmul.mubr.bf16.gmra.mrb[0].mxu0 %v3019
        %v3315 = vpop.f32.mrb[0].mxu0
        %v3316 = vadd.f32 %v2324, %v3315
        %v3317 = vpop.f32.mrb[0].mxu0
        %v3318 = vadd.f32 %v2324, %v3317
        %v3319 = vpop.f32.mrb[0].mxu0
        %v3320 = vadd.f32 %v2329, %v3319
        %v3321 = vpop.f32.mrb[0].mxu0
        %v3322 = vadd.f32 %v2329, %v3321
        %3323 = vmatprep.mubr.bf16.mxu0 %v3024
        %3324 = vmatmul.mubr.bf16.gmra.mrb[0].mxu0 %v3023
        %v3325 = vpop.f32.mrb[0].mxu0
        %v3326 = vadd.f32 %v2334, %v3325
        %v3327 = vpop.f32.mrb[0].mxu0
        %v3328 = vadd.f32 %v2334, %v3327
        %v3329 = vpop.f32.mrb[0].mxu0
        %v3330 = vadd.f32 %v2339, %v3329
        %v3331 = vpop.f32.mrb[0].mxu0
        %v3332 = vadd.f32 %v2339, %v3331
        %3333 = vmatprep.mubr.bf16.mxu0 %v3028
        %3334 = vmatmul.mubr.bf16.gmra.mrb[0].mxu0 %v3027
        %v3335 = vpop.f32.mrb[0].mxu0
        %v3336 = vadd.f32 %v2344, %v3335
        %v3337 = vpop.f32.mrb[0].mxu0
        %v3338 = vadd.f32 %v2344, %v3337
        %v3339 = vpop.f32.mrb[0].mxu0
        %v3340 = vadd.f32 %v2349, %v3339
        %v3341 = vpop.f32.mrb[0].mxu0
        %v3342 = vadd.f32 %v2349, %v3341
        %3343 = vmatprep.mubr.bf16.mxu0 %v3032
        %3344 = vmatmul.mubr.bf16.gmra.mrb[0].mxu0 %v3031
        %v3345 = vpop.f32.mrb[0].mxu0
        %v3346 = vadd.f32 %v2354, %v3345
        %v3347 = vpop.f32.mrb[0].mxu0
        %v3348 = vadd.f32 %v2354, %v3347
        %v3349 = vpop.f32.mrb[0].mxu0
        %v3350 = vadd.f32 %v2359, %v3349
        %v3351 = vpop.f32.mrb[0].mxu0
        %v3352 = vadd.f32 %v2359, %v3351
        %3353 = vmatprep.mubr.bf16.mxu0 %v3036
        %3354 = vmatmul.mubr.bf16.gmra.mrb[0].mxu0 %v3035
        %v3355 = vpop.f32.mrb[0].mxu0
        %v3356 = vadd.f32 %v2364, %v3355
        %v3357 = vpop.f32.mrb[0].mxu0
        %v3358 = vadd.f32 %v2364, %v3357
        %v3359 = vpop.f32.mrb[0].mxu0
        %v3360 = vadd.f32 %v2369, %v3359
        %v3361 = vpop.f32.mrb[0].mxu0
        %v3362 = vadd.f32 %v2369, %v3361
        %3363 = vmatprep.mubr.bf16.mxu0 %v3040
        %3364 = vmatmul.mubr.bf16.gmra.mrb[0].mxu0 %v3039
        %v3365 = vpop.f32.mrb[0].mxu0
        %v3366 = vadd.f32 %v2374, %v3365
        %v3367 = vpop.f32.mrb[0].mxu0
        %v3368 = vadd.f32 %v2374, %v3367
        %v3369 = vpop.f32.mrb[0].mxu0
        %v3370 = vadd.f32 %v2379, %v3369
        %v3371 = vpop.f32.mrb[0].mxu0
        %v3372 = vadd.f32 %v2379, %v3371
        %3373 = vmatprep.mubr.bf16.mxu0 %v3044
        %3374 = vmatmul.mubr.bf16.gmra.mrb[0].mxu0 %v3043
        %v3375 = vpop.f32.mrb[0].mxu0
        %v3376 = vadd.f32 %v2384, %v3375
        %v3377 = vpop.f32.mrb[0].mxu0
        %v3378 = vadd.f32 %v2384, %v3377
        %v3379 = vpop.f32.mrb[0].mxu0
        %v3380 = vadd.f32 %v2389, %v3379
        %v3381 = vpop.f32.mrb[0].mxu0
        %v3382 = vadd.f32 %v2389, %v3381
        %3383 = vmatprep.mubr.bf16.mxu0 %v3048
        %3384 = vmatmul.mubr.bf16.gmra.mrb[0].mxu0 %v3047
        %v3385 = vpop.f32.mrb[0].mxu0
        %v3386 = vadd.f32 %v2394, %v3385
        %v3387 = vpop.f32.mrb[0].mxu0
        %v3388 = vadd.f32 %v2394, %v3387
        %v3389 = vpop.f32.mrb[0].mxu0
        %v3390 = vadd.f32 %v2399, %v3389
        %v3391 = vpop.f32.mrb[0].mxu0
        %v3392 = vadd.f32 %v2399, %v3391
        %3393 = vmatprep.mubr.bf16.mxu0 %v3052
        %3394 = vmatmul.mubr.bf16.gmra.mrb[0].mxu0 %v3051
        %v3395 = vpop.f32.mrb[0].mxu0
        %v3396 = vadd.f32 %v2404, %v3395
        %v3397 = vpop.f32.mrb[0].mxu0
        %v3398 = vadd.f32 %v2404, %v3397
        %v3399 = vpop.f32.mrb[0].mxu0
        %v3400 = vadd.f32 %v2409, %v3399
        %v3401 = vpop.f32.mrb[0].mxu0
        %v3402 = vadd.f32 %v2409, %v3401
        %3403 = vmatprep.mubr.bf16.mxu0 %v3056
        %3404 = vmatmul.mubr.bf16.gmra.mrb[0].mxu0 %v3055
        %v3405 = vpop.f32.mrb[0].mxu0
        %v3406 = vadd.f32 %v2414, %v3405
        %v3407 = vpop.f32.mrb[0].mxu0
        %v3408 = vadd.f32 %v2414, %v3407
        %v3409 = vpop.f32.mrb[0].mxu0
        %v3410 = vadd.f32 %v2419, %v3409
        %v3411 = vpop.f32.mrb[0].mxu0
        %v3412 = vadd.f32 %v2419, %v3411
        %3413 = vmatprep.mubr.bf16.mxu0 %v3060
        %3414 = vmatmul.mubr.bf16.gmra.mrb[0].mxu0 %v3059
        %v3415 = vpop.f32.mrb[0].mxu0
        %v3416 = vadd.f32 %v2424, %v3415
        %v3417 = vpop.f32.mrb[0].mxu0
        %v3418 = vadd.f32 %v2424, %v3417
        %v3419 = vpop.f32.mrb[0].mxu0
        %v3420 = vadd.f32 %v2429, %v3419
        %v3421 = vpop.f32.mrb[0].mxu0
        %v3422 = vadd.f32 %v2429, %v3421
        %3423 = vmatprep.mubr.bf16.mxu0 %v3064
        %3424 = vmatmul.mubr.bf16.gmra.mrb[0].mxu0 %v3063
        %v3425 = vpop.f32.mrb[0].mxu0
        %v3426 = vadd.f32 %v2434, %v3425
        %v3427 = vpop.f32.mrb[0].mxu0
        %v3428 = vadd.f32 %v2434, %v3427
        %v3429 = vpop.f32.mrb[0].mxu0
        %v3430 = vadd.f32 %v2439, %v3429
        %v3431 = vpop.f32.mrb[0].mxu0
        %v3432 = vadd.f32 %v2439, %v3431
        %3433 = vmatprep.mubr.bf16.mxu0 %v3068
        %3434 = vmatmul.mubr.bf16.gmra.mrb[0].mxu0 %v3067
        %v3435 = vpop.f32.mrb[0].mxu0
        %v3436 = vadd.f32 %v2444, %v3435
        %v3437 = vpop.f32.mrb[0].mxu0
        %v3438 = vadd.f32 %v2444, %v3437
        %v3439 = vpop.f32.mrb[0].mxu0
        %v3440 = vadd.f32 %v2449, %v3439
        %v3441 = vpop.f32.mrb[0].mxu0
        %v3442 = vadd.f32 %v2449, %v3441
        %3443 = vmatprep.mubr.bf16.mxu0 %v3072
        %3444 = vmatmul.mubr.bf16.gmra.mrb[0].mxu0 %v3071
        %v3445 = vpop.f32.mrb[0].mxu0
        %v3446 = vadd.f32 %v2454, %v3445
        %v3447 = vpop.f32.mrb[0].mxu0
        %v3448 = vadd.f32 %v2454, %v3447
        %v3449 = vpop.f32.mrb[0].mxu0
        %v3450 = vadd.f32 %v2459, %v3449
        %v3451 = vpop.f32.mrb[0].mxu0
        %v3452 = vadd.f32 %v2459, %v3451
        %3453 = vmatprep.mubr.bf16.mxu0 %v3076
        %3454 = vmatmul.mubr.bf16.gmra.mrb[0].mxu0 %v3075
        %v3455 = vpop.f32.mrb[0].mxu0
        %v3456 = vadd.f32 %v2464, %v3455
        %v3457 = vpop.f32.mrb[0].mxu0
        %v3458 = vadd.f32 %v2464, %v3457
        %v3459 = vpop.f32.mrb[0].mxu0
        %v3460 = vadd.f32 %v2469, %v3459
        %v3461 = vpop.f32.mrb[0].mxu0
        %v3462 = vadd.f32 %v2469, %v3461
        %3463 = vmatprep.mubr.bf16.mxu0 %v3080
        %3464 = vmatmul.mubr.bf16.gmra.mrb[0].mxu0 %v3079
        %v3465 = vpop.f32.mrb[0].mxu0
        %v3466 = vadd.f32 %v2474, %v3465
        %v3467 = vpop.f32.mrb[0].mxu0
        %v3468 = vadd.f32 %v2474, %v3467
        %v3469 = vpop.f32.mrb[0].mxu0
        %v3470 = vadd.f32 %v2479, %v3469
        %v3471 = vpop.f32.mrb[0].mxu0
        %v3472 = vadd.f32 %v2479, %v3471
        %3473 = vmatprep.mubr.bf16.mxu0 %v3084
        %3474 = vmatmul.mubr.bf16.gmra.mrb[0].mxu0 %v3083
        %v3475 = vpop.f32.mrb[0].mxu0
        %v3476 = vadd.f32 %v2484, %v3475
        %v3477 = vpop.f32.mrb[0].mxu0
        %v3478 = vadd.f32 %v2484, %v3477
        %v3479 = vpop.f32.mrb[0].mxu0
        %v3480 = vadd.f32 %v2489, %v3479
        %v3481 = vpop.f32.mrb[0].mxu0
        %v3482 = vadd.f32 %v2489, %v3481
        %3483 = vmatprep.mubr.bf16.mxu0 %v3088
        %3484 = vmatmul.mubr.bf16.gmra.mrb[0].mxu0 %v3087
        %v3485 = vpop.f32.mrb[0].mxu0
        %v3486 = vadd.f32 %v2494, %v3485
        %v3487 = vpop.f32.mrb[0].mxu0
        %v3488 = vadd.f32 %v2494, %v3487
        %v3489 = vpop.f32.mrb[0].mxu0
        %v3490 = vadd.f32 %v2499, %v3489
        %v3491 = vpop.f32.mrb[0].mxu0
        %v3492 = vadd.f32 %v2499, %v3491
        %3493 = vmatprep.mubr.bf16.mxu0 %v3092
        %3494 = vmatmul.mubr.bf16.gmra.mrb[0].mxu0 %v3091
        %v3495 = vpop.f32.mrb[0].mxu0
        %v3496 = vadd.f32 %v2504, %v3495
        %v3497 = vpop.f32.mrb[0].mxu0
        %v3498 = vadd.f32 %v2504, %v3497
        %v3499 = vpop.f32.mrb[0].mxu0
        %v3500 = vadd.f32 %v2509, %v3499
        %v3501 = vpop.f32.mrb[0].mxu0
        %v3502 = vadd.f32 %v2509, %v3501
        %3503 = vmatprep.mubr.bf16.mxu0 %v3096
        %3504 = vmatmul.mubr.bf16.gmra.mrb[0].mxu0 %v3095
        %v3505 = vpop.f32.mrb[0].mxu0
        %v3506 = vadd.f32 %v2514, %v3505
        %v3507 = vpop.f32.mrb[0].mxu0
        %v3508 = vadd.f32 %v2514, %v3507
        %v3509 = vpop.f32.mrb[0].mxu0
        %v3510 = vadd.f32 %v2519, %v3509
        %v3511 = vpop.f32.mrb[0].mxu0
        %v3512 = vadd.f32 %v2519, %v3511
        %3513 = vmatprep.mubr.bf16.mxu0 %v3100
        %3514 = vmatmul.mubr.bf16.gmra.mrb[0].mxu0 %v3099
        %v3515 = vpop.f32.mrb[0].mxu0
        %v3516 = vadd.f32 %v2524, %v3515
        %v3517 = vpop.f32.mrb[0].mxu0
        %v3518 = vadd.f32 %v2524, %v3517
        %v3519 = vpop.f32.mrb[0].mxu0
        %v3520 = vadd.f32 %v2529, %v3519
        %v3521 = vpop.f32.mrb[0].mxu0
        %v3522 = vadd.f32 %v2529, %v3521
        %3523 = vmatprep.mubr.bf16.mxu0 %v3104
        %3524 = vmatmul.mubr.bf16.gmra.mrb[0].mxu0 %v3103
        %v3525 = vpop.f32.mrb[0].mxu0
        %v3526 = vadd.f32 %v2534, %v3525
        %v3527 = vpop.f32.mrb[0].mxu0
        %v3528 = vadd.f32 %v2534, %v3527
        %v3529 = vpop.f32.mrb[0].mxu0
        %v3530 = vadd.f32 %v2539, %v3529
        %v3531 = vpop.f32.mrb[0].mxu0
        %v3532 = vadd.f32 %v2539, %v3531
        %3533 = vmatprep.mubr.bf16.mxu0 %v3108
        %3534 = vmatmul.mubr.bf16.gmra.mrb[0].mxu0 %v3107
        %v3535 = vpop.f32.mrb[0].mxu0
        %v3536 = vadd.f32 %v2544, %v3535
        %v3537 = vpop.f32.mrb[0].mxu0
        %v3538 = vadd.f32 %v2544, %v3537
        %v3539 = vpop.f32.mrb[0].mxu0
        %v3540 = vadd.f32 %v2549, %v3539
        %v3541 = vpop.f32.mrb[0].mxu0
        %v3542 = vadd.f32 %v2549, %v3541
        %3543 = vmatprep.mubr.bf16.mxu0 %v3112
        %3544 = vmatmul.mubr.bf16.gmra.mrb[0].mxu0 %v3111
        %v3545 = vpop.f32.mrb[0].mxu0
        %v3546 = vadd.f32 %v2554, %v3545
        %v3547 = vpop.f32.mrb[0].mxu0
        %v3548 = vadd.f32 %v2554, %v3547
        %v3549 = vpop.f32.mrb[0].mxu0
        %v3550 = vadd.f32 %v2559, %v3549
        %v3551 = vpop.f32.mrb[0].mxu0
        %v3552 = vadd.f32 %v2559, %v3551
        %3553 = vmatprep.mubr.bf16.mxu0 %v3116
        %3554 = vmatmul.mubr.bf16.gmra.mrb[0].mxu0 %v3115
        %v3555 = vpop.f32.mrb[0].mxu0
        %v3556 = vadd.f32 %v2564, %v3555
        %v3557 = vpop.f32.mrb[0].mxu0
        %v3558 = vadd.f32 %v2564, %v3557
        %v3559 = vpop.f32.mrb[0].mxu0
        %v3560 = vadd.f32 %v2569, %v3559
        %v3561 = vpop.f32.mrb[0].mxu0
        %v3562 = vadd.f32 %v2569, %v3561
        %3563 = vmatprep.mubr.bf16.mxu0 %v3120
        %3564 = vmatmul.mubr.bf16.gmra.mrb[0].mxu0 %v3119
        %v3565 = vpop.f32.mrb[0].mxu0
        %v3566 = vadd.f32 %v2574, %v3565
        %v3567 = vpop.f32.mrb[0].mxu0
        %v3568 = vadd.f32 %v2574, %v3567
        %v3569 = vpop.f32.mrb[0].mxu0
        %v3570 = vadd.f32 %v2579, %v3569
        %v3571 = vpop.f32.mrb[0].mxu0
        %v3572 = vadd.f32 %v2579, %v3571
        %3573 = vmatprep.mubr.bf16.mxu0 %v3124
        %3574 = vmatmul.mubr.bf16.gmra.mrb[0].mxu0 %v3123
        %v3575 = vpop.f32.mrb[0].mxu0
        %v3576 = vadd.f32 %v2584, %v3575
        %v3577 = vpop.f32.mrb[0].mxu0
        %v3578 = vadd.f32 %v2584, %v3577
        %v3579 = vpop.f32.mrb[0].mxu0
        %v3580 = vadd.f32 %v2589, %v3579
        %v3581 = vpop.f32.mrb[0].mxu0
        %v3582 = vadd.f32 %v2589, %v3581
        %3583 = vmatprep.mubr.bf16.mxu0 %v3128
        %3584 = vmatmul.mubr.bf16.gmra.mrb[0].mxu0 %v3127
        %v3585 = vpop.f32.mrb[0].mxu0
        %v3586 = vadd.f32 %v2594, %v3585
        %v3587 = vpop.f32.mrb[0].mxu0
        %v3588 = vadd.f32 %v2594, %v3587
        %v3589 = vpop.f32.mrb[0].mxu0
        %v3590 = vadd.f32 %v2599, %v3589
        %v3591 = vpop.f32.mrb[0].mxu0
        %v3592 = vadd.f32 %v2599, %v3591
        %3593 = vmatprep.mubr.bf16.mxu0 %v3132
        %3594 = vmatmul.mubr.bf16.gmra.mrb[0].mxu0 %v3131
        %v3595 = vpop.f32.mrb[0].mxu0
        %v3596 = vadd.f32 %v2604, %v3595
        %v3597 = vpop.f32.mrb[0].mxu0
        %v3598 = vadd.f32 %v2604, %v3597
        %v3599 = vpop.f32.mrb[0].mxu0
        %v3600 = vadd.f32 %v2609, %v3599
        %v3601 = vpop.f32.mrb[0].mxu0
        %v3602 = vadd.f32 %v2609, %v3601
        %3603 = vmatprep.mubr.bf16.mxu0 %v3136
        %3604 = vmatmul.mubr.bf16.gmra.mrb[0].mxu0 %v3135
        %v3605 = vpop.f32.mrb[0].mxu0
        %v3606 = vadd.f32 %v2614, %v3605
        %v3607 = vpop.f32.mrb[0].mxu0
        %v3608 = vadd.f32 %v2614, %v3607
        %v3609 = vpop.f32.mrb[0].mxu0
        %v3610 = vadd.f32 %v2619, %v3609
        %v3611 = vpop.f32.mrb[0].mxu0
        %v3612 = vadd.f32 %v2619, %v3611
        %3613 = vmatprep.mubr.bf16.mxu0 %v3140
        %3614 = vmatmul.mubr.bf16.gmra.mrb[0].mxu0 %v3139
        %v3615 = vpop.f32.mrb[0].mxu0
        %v3616 = vadd.f32 %v2624, %v3615
        %v3617 = vpop.f32.mrb[0].mxu0
        %v3618 = vadd.f32 %v2624, %v3617
        %v3619 = vpop.f32.mrb[0].mxu0
        %v3620 = vadd.f32 %v2629, %v3619
        %v3621 = vpop.f32.mrb[0].mxu0
        %v3622 = vadd.f32 %v2629, %v3621
        %3623 = vdwg.mxu0
        %3624 = vmatprep.subr.bf16.mxu0 %v2216
        %3625 = vmatpush1.bf16.msra.mxu0 %v2215
        %3626 = vmatprep.subr.bf16.mxu0 %v2218
        %3627 = vmatpush1.bf16.msra.mxu0 %v2217
        %3628 = vmatprep.subr.bf16.mxu0 %v2220
        %3629 = vmatpush1.bf16.msra.mxu0 %v2219
        %3630 = vmatprep.subr.bf16.mxu0 %v2222
        %3631 = vmatpush1.bf16.msra.mxu0 %v2221
        %3632 = vmatprep.subr.bf16.mxu0 %v2224
        %3633 = vmatpush1.bf16.msra.mxu0 %v2223
        %3634 = vmatprep.subr.bf16.mxu0 %v2226
        %3635 = vmatpush1.bf16.msra.mxu0 %v2225
        %3636 = vmatprep.subr.bf16.mxu0 %v2228
        %3637 = vmatpush1.bf16.msra.mxu0 %v2227
        %3638 = vmatprep.subr.bf16.mxu0 %v2230
        %3639 = vmatpush1.bf16.msra.mxu0 %v2229
        %3640 = vmatprep.subr.bf16.mxu0 %v2232
        %3641 = vmatpush1.bf16.msra.mxu0 %v2231
        %3642 = vmatprep.subr.bf16.mxu0 %v2234
        %3643 = vmatpush1.bf16.msra.mxu0 %v2233
        %3644 = vmatprep.subr.bf16.mxu0 %v2236
        %3645 = vmatpush1.bf16.msra.mxu0 %v2235
        %3646 = vmatprep.subr.bf16.mxu0 %v2238
        %3647 = vmatpush1.bf16.msra.mxu0 %v2237
        %3648 = vmatprep.subr.bf16.mxu0 %v2240
        %3649 = vmatpush1.bf16.msra.mxu0 %v2239
        %3650 = vmatprep.subr.bf16.mxu0 %v2242
        %3651 = vmatpush1.bf16.msra.mxu0 %v2241
        %3652 = vmatprep.subr.bf16.mxu0 %v2244
        %3653 = vmatpush1.bf16.msra.mxu0 %v2243
        %3654 = vmatprep.subr.bf16.mxu0 %v2246
        %3655 = vmatpush1.bf16.msra.mxu0 %v2245
        %3656 = vmatprep.mubr.bf16.mxu0 %v3018
        %3657 = vmatmul.mubr.bf16.gmra.mrb[0].mxu0 %v3017
        %v3658 = vpop.f32.mrb[0].mxu0
        %v3659 = vadd.f32 %v3306, %v3658
        %v3660 = vpop.f32.mrb[0].mxu0
        %v3661 = vadd.f32 %v3308, %v3660
        %v3662 = vpop.f32.mrb[0].mxu0
        %v3663 = vadd.f32 %v3310, %v3662
        %v3664 = vpop.f32.mrb[0].mxu0
        %v3665 = vadd.f32 %v3312, %v3664
        %3666 = vmatprep.mubr.bf16.mxu0 %v3022
        %3667 = vmatmul.mubr.bf16.gmra.mrb[0].mxu0 %v3021
        %v3668 = vpop.f32.mrb[0].mxu0
        %v3669 = vadd.f32 %v3316, %v3668
        %v3670 = vpop.f32.mrb[0].mxu0
        %v3671 = vadd.f32 %v3318, %v3670
        %v3672 = vpop.f32.mrb[0].mxu0
        %v3673 = vadd.f32 %v3320, %v3672
        %v3674 = vpop.f32.mrb[0].mxu0
        %v3675 = vadd.f32 %v3322, %v3674
        %3676 = vmatprep.mubr.bf16.mxu0 %v3026
        %3677 = vmatmul.mubr.bf16.gmra.mrb[0].mxu0 %v3025
        %v3678 = vpop.f32.mrb[0].mxu0
        %v3679 = vadd.f32 %v3326, %v3678
        %v3680 = vpop.f32.mrb[0].mxu0
        %v3681 = vadd.f32 %v3328, %v3680
        %v3682 = vpop.f32.mrb[0].mxu0
        %v3683 = vadd.f32 %v3330, %v3682
        %v3684 = vpop.f32.mrb[0].mxu0
        %v3685 = vadd.f32 %v3332, %v3684
        %3686 = vmatprep.mubr.bf16.mxu0 %v3030
        %3687 = vmatmul.mubr.bf16.gmra.mrb[0].mxu0 %v3029
        %v3688 = vpop.f32.mrb[0].mxu0
        %v3689 = vadd.f32 %v3336, %v3688
        %v3690 = vpop.f32.mrb[0].mxu0
        %v3691 = vadd.f32 %v3338, %v3690
        %v3692 = vpop.f32.mrb[0].mxu0
        %v3693 = vadd.f32 %v3340, %v3692
        %v3694 = vpop.f32.mrb[0].mxu0
        %v3695 = vadd.f32 %v3342, %v3694
        %3696 = vmatprep.mubr.bf16.mxu0 %v3034
        %3697 = vmatmul.mubr.bf16.gmra.mrb[0].mxu0 %v3033
        %v3698 = vpop.f32.mrb[0].mxu0
        %v3699 = vadd.f32 %v3346, %v3698
        %v3700 = vpop.f32.mrb[0].mxu0
        %v3701 = vadd.f32 %v3348, %v3700
        %v3702 = vpop.f32.mrb[0].mxu0
        %v3703 = vadd.f32 %v3350, %v3702
        %v3704 = vpop.f32.mrb[0].mxu0
        %v3705 = vadd.f32 %v3352, %v3704
        %3706 = vmatprep.mubr.bf16.mxu0 %v3038
        %3707 = vmatmul.mubr.bf16.gmra.mrb[0].mxu0 %v3037
        %v3708 = vpop.f32.mrb[0].mxu0
        %v3709 = vadd.f32 %v3356, %v3708
        %v3710 = vpop.f32.mrb[0].mxu0
        %v3711 = vadd.f32 %v3358, %v3710
        %v3712 = vpop.f32.mrb[0].mxu0
        %v3713 = vadd.f32 %v3360, %v3712
        %v3714 = vpop.f32.mrb[0].mxu0
        %v3715 = vadd.f32 %v3362, %v3714
        %3716 = vmatprep.mubr.bf16.mxu0 %v3042
        %3717 = vmatmul.mubr.bf16.gmra.mrb[0].mxu0 %v3041
        %v3718 = vpop.f32.mrb[0].mxu0
        %v3719 = vadd.f32 %v3366, %v3718
        %v3720 = vpop.f32.mrb[0].mxu0
        %v3721 = vadd.f32 %v3368, %v3720
        %v3722 = vpop.f32.mrb[0].mxu0
        %v3723 = vadd.f32 %v3370, %v3722
        %v3724 = vpop.f32.mrb[0].mxu0
        %v3725 = vadd.f32 %v3372, %v3724
        %3726 = vmatprep.mubr.bf16.mxu0 %v3046
        %3727 = vmatmul.mubr.bf16.gmra.mrb[0].mxu0 %v3045
        %v3728 = vpop.f32.mrb[0].mxu0
        %v3729 = vadd.f32 %v3376, %v3728
        %v3730 = vpop.f32.mrb[0].mxu0
        %v3731 = vadd.f32 %v3378, %v3730
        %v3732 = vpop.f32.mrb[0].mxu0
        %v3733 = vadd.f32 %v3380, %v3732
        %v3734 = vpop.f32.mrb[0].mxu0
        %v3735 = vadd.f32 %v3382, %v3734
        %3736 = vmatprep.mubr.bf16.mxu0 %v3050
        %3737 = vmatmul.mubr.bf16.gmra.mrb[0].mxu0 %v3049
        %v3738 = vpop.f32.mrb[0].mxu0
        %v3739 = vadd.f32 %v3386, %v3738
        %v3740 = vpop.f32.mrb[0].mxu0
        %v3741 = vadd.f32 %v3388, %v3740
        %v3742 = vpop.f32.mrb[0].mxu0
        %v3743 = vadd.f32 %v3390, %v3742
        %v3744 = vpop.f32.mrb[0].mxu0
        %v3745 = vadd.f32 %v3392, %v3744
        %3746 = vmatprep.mubr.bf16.mxu0 %v3054
        %3747 = vmatmul.mubr.bf16.gmra.mrb[0].mxu0 %v3053
        %v3748 = vpop.f32.mrb[0].mxu0
        %v3749 = vadd.f32 %v3396, %v3748
        %v3750 = vpop.f32.mrb[0].mxu0
        %v3751 = vadd.f32 %v3398, %v3750
        %v3752 = vpop.f32.mrb[0].mxu0
        %v3753 = vadd.f32 %v3400, %v3752
        %v3754 = vpop.f32.mrb[0].mxu0
        %v3755 = vadd.f32 %v3402, %v3754
        %3756 = vmatprep.mubr.bf16.mxu0 %v3058
        %3757 = vmatmul.mubr.bf16.gmra.mrb[0].mxu0 %v3057
        %v3758 = vpop.f32.mrb[0].mxu0
        %v3759 = vadd.f32 %v3406, %v3758
        %v3760 = vpop.f32.mrb[0].mxu0
        %v3761 = vadd.f32 %v3408, %v3760
        %v3762 = vpop.f32.mrb[0].mxu0
        %v3763 = vadd.f32 %v3410, %v3762
        %v3764 = vpop.f32.mrb[0].mxu0
        %v3765 = vadd.f32 %v3412, %v3764
        %3766 = vmatprep.mubr.bf16.mxu0 %v3062
        %3767 = vmatmul.mubr.bf16.gmra.mrb[0].mxu0 %v3061
        %v3768 = vpop.f32.mrb[0].mxu0
        %v3769 = vadd.f32 %v3416, %v3768
        %v3770 = vpop.f32.mrb[0].mxu0
        %v3771 = vadd.f32 %v3418, %v3770
        %v3772 = vpop.f32.mrb[0].mxu0
        %v3773 = vadd.f32 %v3420, %v3772
        %v3774 = vpop.f32.mrb[0].mxu0
        %v3775 = vadd.f32 %v3422, %v3774
        %3776 = vmatprep.mubr.bf16.mxu0 %v3066
        %3777 = vmatmul.mubr.bf16.gmra.mrb[0].mxu0 %v3065
        %v3778 = vpop.f32.mrb[0].mxu0
        %v3779 = vadd.f32 %v3426, %v3778
        %v3780 = vpop.f32.mrb[0].mxu0
        %v3781 = vadd.f32 %v3428, %v3780
        %v3782 = vpop.f32.mrb[0].mxu0
        %v3783 = vadd.f32 %v3430, %v3782
        %v3784 = vpop.f32.mrb[0].mxu0
        %v3785 = vadd.f32 %v3432, %v3784
        %3786 = vmatprep.mubr.bf16.mxu0 %v3070
        %3787 = vmatmul.mubr.bf16.gmra.mrb[0].mxu0 %v3069
        %v3788 = vpop.f32.mrb[0].mxu0
        %v3789 = vadd.f32 %v3436, %v3788
        %v3790 = vpop.f32.mrb[0].mxu0
        %v3791 = vadd.f32 %v3438, %v3790
        %v3792 = vpop.f32.mrb[0].mxu0
        %v3793 = vadd.f32 %v3440, %v3792
        %v3794 = vpop.f32.mrb[0].mxu0
        %v3795 = vadd.f32 %v3442, %v3794
        %3796 = vmatprep.mubr.bf16.mxu0 %v3074
        %3797 = vmatmul.mubr.bf16.gmra.mrb[0].mxu0 %v3073
        %v3798 = vpop.f32.mrb[0].mxu0
        %v3799 = vadd.f32 %v3446, %v3798
        %v3800 = vpop.f32.mrb[0].mxu0
        %v3801 = vadd.f32 %v3448, %v3800
        %v3802 = vpop.f32.mrb[0].mxu0
        %v3803 = vadd.f32 %v3450, %v3802
        %v3804 = vpop.f32.mrb[0].mxu0
        %v3805 = vadd.f32 %v3452, %v3804
        %3806 = vmatprep.mubr.bf16.mxu0 %v3078
        %3807 = vmatmul.mubr.bf16.gmra.mrb[0].mxu0 %v3077
        %v3808 = vpop.f32.mrb[0].mxu0
        %v3809 = vadd.f32 %v3456, %v3808
        %v3810 = vpop.f32.mrb[0].mxu0
        %v3811 = vadd.f32 %v3458, %v3810
        %v3812 = vpop.f32.mrb[0].mxu0
        %v3813 = vadd.f32 %v3460, %v3812
        %v3814 = vpop.f32.mrb[0].mxu0
        %v3815 = vadd.f32 %v3462, %v3814
        %3816 = vmatprep.mubr.bf16.mxu0 %v3082
        %3817 = vmatmul.mubr.bf16.gmra.mrb[0].mxu0 %v3081
        %v3818 = vpop.f32.mrb[0].mxu0
        %v3819 = vadd.f32 %v3466, %v3818
        %v3820 = vpop.f32.mrb[0].mxu0
        %v3821 = vadd.f32 %v3468, %v3820
        %v3822 = vpop.f32.mrb[0].mxu0
        %v3823 = vadd.f32 %v3470, %v3822
        %v3824 = vpop.f32.mrb[0].mxu0
        %v3825 = vadd.f32 %v3472, %v3824
        %3826 = vmatprep.mubr.bf16.mxu0 %v3086
        %3827 = vmatmul.mubr.bf16.gmra.mrb[0].mxu0 %v3085
        %v3828 = vpop.f32.mrb[0].mxu0
        %v3829 = vadd.f32 %v3476, %v3828
        %v3830 = vpop.f32.mrb[0].mxu0
        %v3831 = vadd.f32 %v3478, %v3830
        %v3832 = vpop.f32.mrb[0].mxu0
        %v3833 = vadd.f32 %v3480, %v3832
        %v3834 = vpop.f32.mrb[0].mxu0
        %v3835 = vadd.f32 %v3482, %v3834
        %3836 = vmatprep.mubr.bf16.mxu0 %v3090
        %3837 = vmatmul.mubr.bf16.gmra.mrb[0].mxu0 %v3089
        %v3838 = vpop.f32.mrb[0].mxu0
        %v3839 = vadd.f32 %v3486, %v3838
        %v3840 = vpop.f32.mrb[0].mxu0
        %v3841 = vadd.f32 %v3488, %v3840
        %v3842 = vpop.f32.mrb[0].mxu0
        %v3843 = vadd.f32 %v3490, %v3842
        %v3844 = vpop.f32.mrb[0].mxu0
        %v3845 = vadd.f32 %v3492, %v3844
        %3846 = vmatprep.mubr.bf16.mxu0 %v3094
        %3847 = vmatmul.mubr.bf16.gmra.mrb[0].mxu0 %v3093
        %v3848 = vpop.f32.mrb[0].mxu0
        %v3849 = vadd.f32 %v3496, %v3848
        %v3850 = vpop.f32.mrb[0].mxu0
        %v3851 = vadd.f32 %v3498, %v3850
        %v3852 = vpop.f32.mrb[0].mxu0
        %v3853 = vadd.f32 %v3500, %v3852
        %v3854 = vpop.f32.mrb[0].mxu0
        %v3855 = vadd.f32 %v3502, %v3854
        %3856 = vmatprep.mubr.bf16.mxu0 %v3098
        %3857 = vmatmul.mubr.bf16.gmra.mrb[0].mxu0 %v3097
        %v3858 = vpop.f32.mrb[0].mxu0
        %v3859 = vadd.f32 %v3506, %v3858
        %v3860 = vpop.f32.mrb[0].mxu0
        %v3861 = vadd.f32 %v3508, %v3860
        %v3862 = vpop.f32.mrb[0].mxu0
        %v3863 = vadd.f32 %v3510, %v3862
        %v3864 = vpop.f32.mrb[0].mxu0
        %v3865 = vadd.f32 %v3512, %v3864
        %3866 = vmatprep.mubr.bf16.mxu0 %v3102
        %3867 = vmatmul.mubr.bf16.gmra.mrb[0].mxu0 %v3101
        %v3868 = vpop.f32.mrb[0].mxu0
        %v3869 = vadd.f32 %v3516, %v3868
        %v3870 = vpop.f32.mrb[0].mxu0
        %v3871 = vadd.f32 %v3518, %v3870
        %v3872 = vpop.f32.mrb[0].mxu0
        %v3873 = vadd.f32 %v3520, %v3872
        %v3874 = vpop.f32.mrb[0].mxu0
        %v3875 = vadd.f32 %v3522, %v3874
        %3876 = vmatprep.mubr.bf16.mxu0 %v3106
        %3877 = vmatmul.mubr.bf16.gmra.mrb[0].mxu0 %v3105
        %v3878 = vpop.f32.mrb[0].mxu0
        %v3879 = vadd.f32 %v3526, %v3878
        %v3880 = vpop.f32.mrb[0].mxu0
        %v3881 = vadd.f32 %v3528, %v3880
        %v3882 = vpop.f32.mrb[0].mxu0
        %v3883 = vadd.f32 %v3530, %v3882
        %v3884 = vpop.f32.mrb[0].mxu0
        %v3885 = vadd.f32 %v3532, %v3884
        %3886 = vmatprep.mubr.bf16.mxu0 %v3110
        %3887 = vmatmul.mubr.bf16.gmra.mrb[0].mxu0 %v3109
        %v3888 = vpop.f32.mrb[0].mxu0
        %v3889 = vadd.f32 %v3536, %v3888
        %v3890 = vpop.f32.mrb[0].mxu0
        %v3891 = vadd.f32 %v3538, %v3890
        %v3892 = vpop.f32.mrb[0].mxu0
        %v3893 = vadd.f32 %v3540, %v3892
        %v3894 = vpop.f32.mrb[0].mxu0
        %v3895 = vadd.f32 %v3542, %v3894
        %3896 = vmatprep.mubr.bf16.mxu0 %v3114
        %3897 = vmatmul.mubr.bf16.gmra.mrb[0].mxu0 %v3113
        %v3898 = vpop.f32.mrb[0].mxu0
        %v3899 = vadd.f32 %v3546, %v3898
        %v3900 = vpop.f32.mrb[0].mxu0
        %v3901 = vadd.f32 %v3548, %v3900
        %v3902 = vpop.f32.mrb[0].mxu0
        %v3903 = vadd.f32 %v3550, %v3902
        %v3904 = vpop.f32.mrb[0].mxu0
        %v3905 = vadd.f32 %v3552, %v3904
        %3906 = vmatprep.mubr.bf16.mxu0 %v3118
        %3907 = vmatmul.mubr.bf16.gmra.mrb[0].mxu0 %v3117
        %v3908 = vpop.f32.mrb[0].mxu0
        %v3909 = vadd.f32 %v3556, %v3908
        %v3910 = vpop.f32.mrb[0].mxu0
        %v3911 = vadd.f32 %v3558, %v3910
        %v3912 = vpop.f32.mrb[0].mxu0
        %v3913 = vadd.f32 %v3560, %v3912
        %v3914 = vpop.f32.mrb[0].mxu0
        %v3915 = vadd.f32 %v3562, %v3914
        %3916 = vmatprep.mubr.bf16.mxu0 %v3122
        %3917 = vmatmul.mubr.bf16.gmra.mrb[0].mxu0 %v3121
        %v3918 = vpop.f32.mrb[0].mxu0
        %v3919 = vadd.f32 %v3566, %v3918
        %v3920 = vpop.f32.mrb[0].mxu0
        %v3921 = vadd.f32 %v3568, %v3920
        %v3922 = vpop.f32.mrb[0].mxu0
        %v3923 = vadd.f32 %v3570, %v3922
        %v3924 = vpop.f32.mrb[0].mxu0
        %v3925 = vadd.f32 %v3572, %v3924
        %3926 = vmatprep.mubr.bf16.mxu0 %v3126
        %3927 = vmatmul.mubr.bf16.gmra.mrb[0].mxu0 %v3125
        %v3928 = vpop.f32.mrb[0].mxu0
        %v3929 = vadd.f32 %v3576, %v3928
        %v3930 = vpop.f32.mrb[0].mxu0
        %v3931 = vadd.f32 %v3578, %v3930
        %v3932 = vpop.f32.mrb[0].mxu0
        %v3933 = vadd.f32 %v3580, %v3932
        %v3934 = vpop.f32.mrb[0].mxu0
        %v3935 = vadd.f32 %v3582, %v3934
        %3936 = vmatprep.mubr.bf16.mxu0 %v3130
        %3937 = vmatmul.mubr.bf16.gmra.mrb[0].mxu0 %v3129
        %v3938 = vpop.f32.mrb[0].mxu0
        %v3939 = vadd.f32 %v3586, %v3938
        %v3940 = vpop.f32.mrb[0].mxu0
        %v3941 = vadd.f32 %v3588, %v3940
        %v3942 = vpop.f32.mrb[0].mxu0
        %v3943 = vadd.f32 %v3590, %v3942
        %v3944 = vpop.f32.mrb[0].mxu0
        %v3945 = vadd.f32 %v3592, %v3944
        %3946 = vmatprep.mubr.bf16.mxu0 %v3134
        %3947 = vmatmul.mubr.bf16.gmra.mrb[0].mxu0 %v3133
        %v3948 = vpop.f32.mrb[0].mxu0
        %v3949 = vadd.f32 %v3596, %v3948
        %v3950 = vpop.f32.mrb[0].mxu0
        %v3951 = vadd.f32 %v3598, %v3950
        %v3952 = vpop.f32.mrb[0].mxu0
        %v3953 = vadd.f32 %v3600, %v3952
        %v3954 = vpop.f32.mrb[0].mxu0
        %v3955 = vadd.f32 %v3602, %v3954
        %3956 = vmatprep.mubr.bf16.mxu0 %v3138
        %3957 = vmatmul.mubr.bf16.gmra.mrb[0].mxu0 %v3137
        %v3958 = vpop.f32.mrb[0].mxu0
        %v3959 = vadd.f32 %v3606, %v3958
        %v3960 = vpop.f32.mrb[0].mxu0
        %v3961 = vadd.f32 %v3608, %v3960
        %v3962 = vpop.f32.mrb[0].mxu0
        %v3963 = vadd.f32 %v3610, %v3962
        %v3964 = vpop.f32.mrb[0].mxu0
        %v3965 = vadd.f32 %v3612, %v3964
        %3966 = vmatprep.mubr.bf16.mxu0 %v3142
        %3967 = vmatmul.mubr.bf16.gmra.mrb[0].mxu0 %v3141
        %v3968 = vpop.f32.mrb[0].mxu0
        %v3969 = vadd.f32 %v3616, %v3968
        %v3970 = vpop.f32.mrb[0].mxu0
        %v3971 = vadd.f32 %v3618, %v3970
        %v3972 = vpop.f32.mrb[0].mxu0
        %v3973 = vadd.f32 %v3620, %v3972
        %v3974 = vpop.f32.mrb[0].mxu0
        %v3975 = vadd.f32 %v3622, %v3974
        %3976 = vdwg.mxu0
        %v3977 = vmax.f32 %v3659, 0.0
        %v3978 = vmax.f32 %v3661, 0.0
        %v3979 = vmax.f32 %v3663, 0.0
        %v3980 = vmax.f32 %v3665, 0.0
        %v3981 = vmax.f32 %v3669, 0.0
        %v3982 = vmax.f32 %v3671, 0.0
        %v3983 = vmax.f32 %v3673, 0.0
        %v3984 = vmax.f32 %v3675, 0.0
        %v3985 = vmax.f32 %v3679, 0.0
        %v3986 = vmax.f32 %v3681, 0.0
        %v3987 = vmax.f32 %v3683, 0.0
        %v3988 = vmax.f32 %v3685, 0.0
        %v3989 = vmax.f32 %v3689, 0.0
        %v3990 = vmax.f32 %v3691, 0.0
        %v3991 = vmax.f32 %v3693, 0.0
        %v3992 = vmax.f32 %v3695, 0.0
        %v3993 = vmax.f32 %v3699, 0.0
        %v3994 = vmax.f32 %v3701, 0.0
        %v3995 = vmax.f32 %v3703, 0.0
        %v3996 = vmax.f32 %v3705, 0.0
        %v3997 = vmax.f32 %v3709, 0.0
        %v3998 = vmax.f32 %v3711, 0.0
        %v3999 = vmax.f32 %v3713, 0.0
        %v4000 = vmax.f32 %v3715, 0.0
        %v4001 = vmax.f32 %v3719, 0.0
        %v4002 = vmax.f32 %v3721, 0.0
        %v4003 = vmax.f32 %v3723, 0.0
        %v4004 = vmax.f32 %v3725, 0.0
        %v4005 = vmax.f32 %v3729, 0.0
        %v4006 = vmax.f32 %v3731, 0.0
        %v4007 = vmax.f32 %v3733, 0.0
        %v4008 = vmax.f32 %v3735, 0.0
        %v4009 = vmax.f32 %v3739, 0.0
        %v4010 = vmax.f32 %v3741, 0.0
        %v4011 = vmax.f32 %v3743, 0.0
        %v4012 = vmax.f32 %v3745, 0.0
        %v4013 = vmax.f32 %v3749, 0.0
        %v4014 = vmax.f32 %v3751, 0.0
        %v4015 = vmax.f32 %v3753, 0.0
        %v4016 = vmax.f32 %v3755, 0.0
        %v4017 = vmax.f32 %v3759, 0.0
        %v4018 = vmax.f32 %v3761, 0.0
        %v4019 = vmax.f32 %v3763, 0.0
        %v4020 = vmax.f32 %v3765, 0.0
        %v4021 = vmax.f32 %v3769, 0.0
        %v4022 = vmax.f32 %v3771, 0.0
        %v4023 = vmax.f32 %v3773, 0.0
        %v4024 = vmax.f32 %v3775, 0.0
        %v4025 = vmax.f32 %v3779, 0.0
        %v4026 = vmax.f32 %v3781, 0.0
        %v4027 = vmax.f32 %v3783, 0.0
        %v4028 = vmax.f32 %v3785, 0.0
        %v4029 = vmax.f32 %v3789, 0.0
        %v4030 = vmax.f32 %v3791, 0.0
        %v4031 = vmax.f32 %v3793, 0.0
        %v4032 = vmax.f32 %v3795, 0.0
        %v4033 = vmax.f32 %v3799, 0.0
        %v4034 = vmax.f32 %v3801, 0.0
        %v4035 = vmax.f32 %v3803, 0.0
        %v4036 = vmax.f32 %v3805, 0.0
        %v4037 = vmax.f32 %v3809, 0.0
        %v4038 = vmax.f32 %v3811, 0.0
        %v4039 = vmax.f32 %v3813, 0.0
        %v4040 = vmax.f32 %v3815, 0.0
        %v4041 = vmax.f32 %v3819, 0.0
        %v4042 = vmax.f32 %v3821, 0.0
        %v4043 = vmax.f32 %v3823, 0.0
        %v4044 = vmax.f32 %v3825, 0.0
        %v4045 = vmax.f32 %v3829, 0.0
        %v4046 = vmax.f32 %v3831, 0.0
        %v4047 = vmax.f32 %v3833, 0.0
        %v4048 = vmax.f32 %v3835, 0.0
        %v4049 = vmax.f32 %v3839, 0.0
        %v4050 = vmax.f32 %v3841, 0.0
        %v4051 = vmax.f32 %v3843, 0.0
        %v4052 = vmax.f32 %v3845, 0.0
        %v4053 = vmax.f32 %v3849, 0.0
        %v4054 = vmax.f32 %v3851, 0.0
        %v4055 = vmax.f32 %v3853, 0.0
        %v4056 = vmax.f32 %v3855, 0.0
        %v4057 = vmax.f32 %v3859, 0.0
        %v4058 = vmax.f32 %v3861, 0.0
        %v4059 = vmax.f32 %v3863, 0.0
        %v4060 = vmax.f32 %v3865, 0.0
        %v4061 = vmax.f32 %v3869, 0.0
        %v4062 = vmax.f32 %v3871, 0.0
        %v4063 = vmax.f32 %v3873, 0.0
        %v4064 = vmax.f32 %v3875, 0.0
        %v4065 = vmax.f32 %v3879, 0.0
        %v4066 = vmax.f32 %v3881, 0.0
        %v4067 = vmax.f32 %v3883, 0.0
        %v4068 = vmax.f32 %v3885, 0.0
        %v4069 = vmax.f32 %v3889, 0.0
        %v4070 = vmax.f32 %v3891, 0.0
        %v4071 = vmax.f32 %v3893, 0.0
        %v4072 = vmax.f32 %v3895, 0.0
        %v4073 = vmax.f32 %v3899, 0.0
        %v4074 = vmax.f32 %v3901, 0.0
        %v4075 = vmax.f32 %v3903, 0.0
        %v4076 = vmax.f32 %v3905, 0.0
        %v4077 = vmax.f32 %v3909, 0.0
        %v4078 = vmax.f32 %v3911, 0.0
        %v4079 = vmax.f32 %v3913, 0.0
        %v4080 = vmax.f32 %v3915, 0.0
        %v4081 = vmax.f32 %v3919, 0.0
        %v4082 = vmax.f32 %v3921, 0.0
        %v4083 = vmax.f32 %v3923, 0.0
        %v4084 = vmax.f32 %v3925, 0.0
        %v4085 = vmax.f32 %v3929, 0.0
        %v4086 = vmax.f32 %v3931, 0.0
        %v4087 = vmax.f32 %v3933, 0.0
        %v4088 = vmax.f32 %v3935, 0.0
        %v4089 = vmax.f32 %v3939, 0.0
        %v4090 = vmax.f32 %v3941, 0.0
        %v4091 = vmax.f32 %v3943, 0.0
        %v4092 = vmax.f32 %v3945, 0.0
        %v4093 = vmax.f32 %v3949, 0.0
        %v4094 = vmax.f32 %v3951, 0.0
        %v4095 = vmax.f32 %v3953, 0.0
        %v4096 = vmax.f32 %v3955, 0.0
        %v4097 = vmax.f32 %v3959, 0.0
        %v4098 = vmax.f32 %v3961, 0.0
        %v4099 = vmax.f32 %v3963, 0.0
        %v4100 = vmax.f32 %v3965, 0.0
        %v4101 = vmax.f32 %v3969, 0.0
        %v4102 = vmax.f32 %v3971, 0.0
        %v4103 = vmax.f32 %v3973, 0.0
        %v4104 = vmax.f32 %v3975, 0.0
        %v4105 = vld [vmem:[%s5] sm:$0xff]
        %v4106 = vld [vmem:[%s5 + $0x8] sm:$0xff]
        %v4107 = vld [vmem:[%s5 + $0x10] sm:$0xff]
        %v4108 = vld [vmem:[%s5 + $0x18] sm:$0xff]
        %v4109 = vld [vmem:[%s5 + $0x20] sm:$0xff]
        %v4110 = vld [vmem:[%s5 + $0x28] sm:$0xff]
        %v4111 = vld [vmem:[%s5 + $0x30] sm:$0xff]
        %v4112 = vld [vmem:[%s5 + $0x38] sm:$0xff]
        %v4113 = vld [vmem:[%s5 + $0x40] sm:$0xff]
        %v4114 = vld [vmem:[%s5 + $0x48] sm:$0xff]
        %v4115 = vld [vmem:[%s5 + $0x50] sm:$0xff]
        %v4116 = vld [vmem:[%s5 + $0x58] sm:$0xff]
        %v4117 = vld [vmem:[%s5 + $0x60] sm:$0xff]
        %v4118 = vld [vmem:[%s5 + $0x68] sm:$0xff]
        %v4119 = vld [vmem:[%s5 + $0x70] sm:$0xff]
        %v4120 = vld [vmem:[%s5 + $0x78] sm:$0xff]
        %v4121 = vld [vmem:[%s5 + $0x80] sm:$0xff]
        %v4122 = vld [vmem:[%s5 + $0x88] sm:$0xff]
        %v4123 = vld [vmem:[%s5 + $0x90] sm:$0xff]
        %v4124 = vld [vmem:[%s5 + $0x98] sm:$0xff]
        %v4125 = vld [vmem:[%s5 + $0xa0] sm:$0xff]
        %v4126 = vld [vmem:[%s5 + $0xa8] sm:$0xff]
        %v4127 = vld [vmem:[%s5 + $0xb0] sm:$0xff]
        %v4128 = vld [vmem:[%s5 + $0xb8] sm:$0xff]
        %v4129 = vld [vmem:[%s5 + $0xc0] sm:$0xff]
        %v4130 = vld [vmem:[%s5 + $0xc8] sm:$0xff]
        %v4131 = vld [vmem:[%s5 + $0xd0] sm:$0xff]
        %v4132 = vld [vmem:[%s5 + $0xd8] sm:$0xff]
        %v4133 = vld [vmem:[%s5 + $0xe0] sm:$0xff]
        %v4134 = vld [vmem:[%s5 + $0xe8] sm:$0xff]
        %v4135 = vld [vmem:[%s5 + $0xf0] sm:$0xff]
        %v4136 = vld [vmem:[%s5 + $0xf8] sm:$0xff]
        %v4137 = vld [vmem:[%s5 + $0x100] sm:$0xff]
        %v4138 = vld [vmem:[%s5 + $0x108] sm:$0xff]
        %v4139 = vld [vmem:[%s5 + $0x110] sm:$0xff]
        %v4140 = vld [vmem:[%s5 + $0x118] sm:$0xff]
        %v4141 = vld [vmem:[%s5 + $0x120] sm:$0xff]
        %v4142 = vld [vmem:[%s5 + $0x128] sm:$0xff]
        %v4143 = vld [vmem:[%s5 + $0x130] sm:$0xff]
        %v4144 = vld [vmem:[%s5 + $0x138] sm:$0xff]
        %v4145 = vld [vmem:[%s5 + $0x140] sm:$0xff]
        %v4146 = vld [vmem:[%s5 + $0x148] sm:$0xff]
        %v4147 = vld [vmem:[%s5 + $0x150] sm:$0xff]
        %v4148 = vld [vmem:[%s5 + $0x158] sm:$0xff]
        %v4149 = vld [vmem:[%s5 + $0x160] sm:$0xff]
        %v4150 = vld [vmem:[%s5 + $0x168] sm:$0xff]
        %v4151 = vld [vmem:[%s5 + $0x170] sm:$0xff]
        %v4152 = vld [vmem:[%s5 + $0x178] sm:$0xff]
        %v4153 = vld [vmem:[%s5 + $0x180] sm:$0xff]
        %v4154 = vld [vmem:[%s5 + $0x188] sm:$0xff]
        %v4155 = vld [vmem:[%s5 + $0x190] sm:$0xff]
        %v4156 = vld [vmem:[%s5 + $0x198] sm:$0xff]
        %v4157 = vld [vmem:[%s5 + $0x1a0] sm:$0xff]
        %v4158 = vld [vmem:[%s5 + $0x1a8] sm:$0xff]
        %v4159 = vld [vmem:[%s5 + $0x1b0] sm:$0xff]
        %v4160 = vld [vmem:[%s5 + $0x1b8] sm:$0xff]
        %v4161 = vld [vmem:[%s5 + $0x1c0] sm:$0xff]
        %v4162 = vld [vmem:[%s5 + $0x1c8] sm:$0xff]
        %v4163 = vld [vmem:[%s5 + $0x1d0] sm:$0xff]
        %v4164 = vld [vmem:[%s5 + $0x1d8] sm:$0xff]
        %v4165 = vld [vmem:[%s5 + $0x1e0] sm:$0xff]
        %v4166 = vld [vmem:[%s5 + $0x1e8] sm:$0xff]
        %v4167 = vld [vmem:[%s5 + $0x1f0] sm:$0xff]
        %v4168 = vld [vmem:[%s5 + $0x1f8] sm:$0xff]
        %v4169 = vld [vmem:[%s5 + $0x200] sm:$0xff]
        %v4170 = vld [vmem:[%s5 + $0x208] sm:$0xff]
        %v4171 = vld [vmem:[%s5 + $0x210] sm:$0xff]
        %v4172 = vld [vmem:[%s5 + $0x218] sm:$0xff]
        %v4173 = vld [vmem:[%s5 + $0x220] sm:$0xff]
        %v4174 = vld [vmem:[%s5 + $0x228] sm:$0xff]
        %v4175 = vld [vmem:[%s5 + $0x230] sm:$0xff]
        %v4176 = vld [vmem:[%s5 + $0x238] sm:$0xff]
        %v4177 = vld [vmem:[%s5 + $0x240] sm:$0xff]
        %v4178 = vld [vmem:[%s5 + $0x248] sm:$0xff]
        %v4179 = vld [vmem:[%s5 + $0x250] sm:$0xff]
        %v4180 = vld [vmem:[%s5 + $0x258] sm:$0xff]
        %v4181 = vld [vmem:[%s5 + $0x260] sm:$0xff]
        %v4182 = vld [vmem:[%s5 + $0x268] sm:$0xff]
        %v4183 = vld [vmem:[%s5 + $0x270] sm:$0xff]
        %v4184 = vld [vmem:[%s5 + $0x278] sm:$0xff]
        %v4185 = vld [vmem:[%s5 + $0x280] sm:$0xff]
        %v4186 = vld [vmem:[%s5 + $0x288] sm:$0xff]
        %v4187 = vld [vmem:[%s5 + $0x290] sm:$0xff]
        %v4188 = vld [vmem:[%s5 + $0x298] sm:$0xff]
        %v4189 = vld [vmem:[%s5 + $0x2a0] sm:$0xff]
        %v4190 = vld [vmem:[%s5 + $0x2a8] sm:$0xff]
        %v4191 = vld [vmem:[%s5 + $0x2b0] sm:$0xff]
        %v4192 = vld [vmem:[%s5 + $0x2b8] sm:$0xff]
        %v4193 = vld [vmem:[%s5 + $0x2c0] sm:$0xff]
        %v4194 = vld [vmem:[%s5 + $0x2c8] sm:$0xff]
        %v4195 = vld [vmem:[%s5 + $0x2d0] sm:$0xff]
        %v4196 = vld [vmem:[%s5 + $0x2d8] sm:$0xff]
        %v4197 = vld [vmem:[%s5 + $0x2e0] sm:$0xff]
        %v4198 = vld [vmem:[%s5 + $0x2e8] sm:$0xff]
        %v4199 = vld [vmem:[%s5 + $0x2f0] sm:$0xff]
        %v4200 = vld [vmem:[%s5 + $0x2f8] sm:$0xff]
        %v4201 = vld [vmem:[%s5 + $0x300] sm:$0xff]
        %v4202 = vld [vmem:[%s5 + $0x308] sm:$0xff]
        %v4203 = vld [vmem:[%s5 + $0x310] sm:$0xff]
        %v4204 = vld [vmem:[%s5 + $0x318] sm:$0xff]
        %v4205 = vld [vmem:[%s5 + $0x320] sm:$0xff]
        %v4206 = vld [vmem:[%s5 + $0x328] sm:$0xff]
        %v4207 = vld [vmem:[%s5 + $0x330] sm:$0xff]
        %v4208 = vld [vmem:[%s5 + $0x338] sm:$0xff]
        %v4209 = vld [vmem:[%s5 + $0x340] sm:$0xff]
        %v4210 = vld [vmem:[%s5 + $0x348] sm:$0xff]
        %v4211 = vld [vmem:[%s5 + $0x350] sm:$0xff]
        %v4212 = vld [vmem:[%s5 + $0x358] sm:$0xff]
        %v4213 = vld [vmem:[%s5 + $0x360] sm:$0xff]
        %v4214 = vld [vmem:[%s5 + $0x368] sm:$0xff]
        %v4215 = vld [vmem:[%s5 + $0x370] sm:$0xff]
        %v4216 = vld [vmem:[%s5 + $0x378] sm:$0xff]
        %v4217 = vld [vmem:[%s5 + $0x380] sm:$0xff]
        %v4218 = vld [vmem:[%s5 + $0x388] sm:$0xff]
        %v4219 = vld [vmem:[%s5 + $0x390] sm:$0xff]
        %v4220 = vld [vmem:[%s5 + $0x398] sm:$0xff]
        %v4221 = vld [vmem:[%s5 + $0x3a0] sm:$0xff]
        %v4222 = vld [vmem:[%s5 + $0x3a8] sm:$0xff]
        %v4223 = vld [vmem:[%s5 + $0x3b0] sm:$0xff]
        %v4224 = vld [vmem:[%s5 + $0x3b8] sm:$0xff]
        %v4225 = vld [vmem:[%s5 + $0x3c0] sm:$0xff]
        %v4226 = vld [vmem:[%s5 + $0x3c8] sm:$0xff]
        %v4227 = vld [vmem:[%s5 + $0x3d0] sm:$0xff]
        %v4228 = vld [vmem:[%s5 + $0x3d8] sm:$0xff]
        %v4229 = vld [vmem:[%s5 + $0x3e0] sm:$0xff]
        %v4230 = vld [vmem:[%s5 + $0x3e8] sm:$0xff]
        %v4231 = vld [vmem:[%s5 + $0x3f0] sm:$0xff]
        %v4232 = vld [vmem:[%s5 + $0x3f8] sm:$0xff]
        %v4233 = vpack.c.bf16 %v3979, %v3977
        %v4234 = vpack.c.bf16 %v3980, %v3978
        %v4235 = vpack.c.bf16 %v3983, %v3981
        %v4236 = vpack.c.bf16 %v3984, %v3982
        %v4237 = vpack.c.bf16 %v3987, %v3985
        %v4238 = vpack.c.bf16 %v3988, %v3986
        %v4239 = vpack.c.bf16 %v3991, %v3989
        %v4240 = vpack.c.bf16 %v3992, %v3990
        %v4241 = vpack.c.bf16 %v3995, %v3993
        %v4242 = vpack.c.bf16 %v3996, %v3994
        %v4243 = vpack.c.bf16 %v3999, %v3997
        %v4244 = vpack.c.bf16 %v4000, %v3998
        %v4245 = vpack.c.bf16 %v4003, %v4001
        %v4246 = vpack.c.bf16 %v4004, %v4002
        %v4247 = vpack.c.bf16 %v4007, %v4005
        %v4248 = vpack.c.bf16 %v4008, %v4006
        %v4249 = vpack.c.bf16 %v4011, %v4009
        %v4250 = vpack.c.bf16 %v4012, %v4010
        %v4251 = vpack.c.bf16 %v4015, %v4013
        %v4252 = vpack.c.bf16 %v4016, %v4014
        %v4253 = vpack.c.bf16 %v4019, %v4017
        %v4254 = vpack.c.bf16 %v4020, %v4018
        %v4255 = vpack.c.bf16 %v4023, %v4021
        %v4256 = vpack.c.bf16 %v4024, %v4022
        %v4257 = vpack.c.bf16 %v4027, %v4025
        %v4258 = vpack.c.bf16 %v4028, %v4026
        %v4259 = vpack.c.bf16 %v4031, %v4029
        %v4260 = vpack.c.bf16 %v4032, %v4030
        %v4261 = vpack.c.bf16 %v4035, %v4033
        %v4262 = vpack.c.bf16 %v4036, %v4034
        %v4263 = vpack.c.bf16 %v4039, %v4037
        %v4264 = vpack.c.bf16 %v4040, %v4038
        %v4265 = vpack.c.bf16 %v4043, %v4041
        %v4266 = vpack.c.bf16 %v4044, %v4042
        %v4267 = vpack.c.bf16 %v4047, %v4045
        %v4268 = vpack.c.bf16 %v4048, %v4046
        %v4269 = vpack.c.bf16 %v4051, %v4049
        %v4270 = vpack.c.bf16 %v4052, %v4050
        %v4271 = vpack.c.bf16 %v4055, %v4053
        %v4272 = vpack.c.bf16 %v4056, %v4054
        %v4273 = vpack.c.bf16 %v4059, %v4057
        %v4274 = vpack.c.bf16 %v4060, %v4058
        %v4275 = vpack.c.bf16 %v4063, %v4061
        %v4276 = vpack.c.bf16 %v4064, %v4062
        %v4277 = vpack.c.bf16 %v4067, %v4065
        %v4278 = vpack.c.bf16 %v4068, %v4066
        %v4279 = vpack.c.bf16 %v4071, %v4069
        %v4280 = vpack.c.bf16 %v4072, %v4070
        %v4281 = vpack.c.bf16 %v4075, %v4073
        %v4282 = vpack.c.bf16 %v4076, %v4074
        %v4283 = vpack.c.bf16 %v4079, %v4077
        %v4284 = vpack.c.bf16 %v4080, %v4078
        %v4285 = vpack.c.bf16 %v4083, %v4081
        %v4286 = vpack.c.bf16 %v4084, %v4082
        %v4287 = vpack.c.bf16 %v4087, %v4085
        %v4288 = vpack.c.bf16 %v4088, %v4086
        %v4289 = vpack.c.bf16 %v4091, %v4089
        %v4290 = vpack.c.bf16 %v4092, %v4090
        %v4291 = vpack.c.bf16 %v4095, %v4093
        %v4292 = vpack.c.bf16 %v4096, %v4094
        %v4293 = vpack.c.bf16 %v4099, %v4097
        %v4294 = vpack.c.bf16 %v4100, %v4098
        %v4295 = vpack.c.bf16 %v4103, %v4101
        %v4296 = vpack.c.bf16 %v4104, %v4102
        %v4297 = vld [vmem:[%s6] sm:$0xff]
        %v4298 = vld [vmem:[%s6 + $0x8] sm:$0xff]
        %v4299 = vld [vmem:[%s6 + $0x10] sm:$0xff]
        %v4300 = vld [vmem:[%s6 + $0x18] sm:$0xff]
        %v4301 = vld [vmem:[%s6 + $0x20] sm:$0xff]
        %v4302 = vld [vmem:[%s6 + $0x28] sm:$0xff]
        %v4303 = vld [vmem:[%s6 + $0x30] sm:$0xff]
        %v4304 = vld [vmem:[%s6 + $0x38] sm:$0xff]
        %v4305 = vld [vmem:[%s6 + $0x40] sm:$0xff]
        %v4306 = vld [vmem:[%s6 + $0x48] sm:$0xff]
        %v4307 = vld [vmem:[%s6 + $0x50] sm:$0xff]
        %v4308 = vld [vmem:[%s6 + $0x58] sm:$0xff]
        %v4309 = vld [vmem:[%s6 + $0x60] sm:$0xff]
        %v4310 = vld [vmem:[%s6 + $0x68] sm:$0xff]
        %v4311 = vld [vmem:[%s6 + $0x70] sm:$0xff]
        %v4312 = vld [vmem:[%s6 + $0x78] sm:$0xff]
        %v4313 = vld [vmem:[%s6 + $0x80] sm:$0xff]
        %v4314 = vld [vmem:[%s6 + $0x88] sm:$0xff]
        %v4315 = vld [vmem:[%s6 + $0x90] sm:$0xff]
        %v4316 = vld [vmem:[%s6 + $0x98] sm:$0xff]
        %v4317 = vld [vmem:[%s6 + $0xa0] sm:$0xff]
        %v4318 = vld [vmem:[%s6 + $0xa8] sm:$0xff]
        %v4319 = vld [vmem:[%s6 + $0xb0] sm:$0xff]
        %v4320 = vld [vmem:[%s6 + $0xb8] sm:$0xff]
        %v4321 = vld [vmem:[%s6 + $0xc0] sm:$0xff]
        %v4322 = vld [vmem:[%s6 + $0xc8] sm:$0xff]
        %v4323 = vld [vmem:[%s6 + $0xd0] sm:$0xff]
        %v4324 = vld [vmem:[%s6 + $0xd8] sm:$0xff]
        %v4325 = vld [vmem:[%s6 + $0xe0] sm:$0xff]
        %v4326 = vld [vmem:[%s6 + $0xe8] sm:$0xff]
        %v4327 = vld [vmem:[%s6 + $0xf0] sm:$0xff]
        %v4328 = vld [vmem:[%s6 + $0xf8] sm:$0xff]
        %v4329 = vld [vmem:[%s6 + $0x100] sm:$0xff]
        %v4330 = vld [vmem:[%s6 + $0x108] sm:$0xff]
        %v4331 = vld [vmem:[%s6 + $0x110] sm:$0xff]
        %v4332 = vld [vmem:[%s6 + $0x118] sm:$0xff]
        %v4333 = vld [vmem:[%s6 + $0x120] sm:$0xff]
        %v4334 = vld [vmem:[%s6 + $0x128] sm:$0xff]
        %v4335 = vld [vmem:[%s6 + $0x130] sm:$0xff]
        %v4336 = vld [vmem:[%s6 + $0x138] sm:$0xff]
        %v4337 = vld [vmem:[%s6 + $0x140] sm:$0xff]
        %v4338 = vld [vmem:[%s6 + $0x148] sm:$0xff]
        %v4339 = vld [vmem:[%s6 + $0x150] sm:$0xff]
        %v4340 = vld [vmem:[%s6 + $0x158] sm:$0xff]
        %v4341 = vld [vmem:[%s6 + $0x160] sm:$0xff]
        %v4342 = vld [vmem:[%s6 + $0x168] sm:$0xff]
        %v4343 = vld [vmem:[%s6 + $0x170] sm:$0xff]
        %v4344 = vld [vmem:[%s6 + $0x178] sm:$0xff]
        %v4345 = vld [vmem:[%s6 + $0x180] sm:$0xff]
        %v4346 = vld [vmem:[%s6 + $0x188] sm:$0xff]
        %v4347 = vld [vmem:[%s6 + $0x190] sm:$0xff]
        %v4348 = vld [vmem:[%s6 + $0x198] sm:$0xff]
        %v4349 = vld [vmem:[%s6 + $0x1a0] sm:$0xff]
        %v4350 = vld [vmem:[%s6 + $0x1a8] sm:$0xff]
        %v4351 = vld [vmem:[%s6 + $0x1b0] sm:$0xff]
        %v4352 = vld [vmem:[%s6 + $0x1b8] sm:$0xff]
        %v4353 = vld [vmem:[%s6 + $0x1c0] sm:$0xff]
        %v4354 = vld [vmem:[%s6 + $0x1c8] sm:$0xff]
        %v4355 = vld [vmem:[%s6 + $0x1d0] sm:$0xff]
        %v4356 = vld [vmem:[%s6 + $0x1d8] sm:$0xff]
        %v4357 = vld [vmem:[%s6 + $0x1e0] sm:$0xff]
        %v4358 = vld [vmem:[%s6 + $0x1e8] sm:$0xff]
        %v4359 = vld [vmem:[%s6 + $0x1f0] sm:$0xff]
        %v4360 = vld [vmem:[%s6 + $0x1f8] sm:$0xff]
        %4362 = vset.pattern.permute.xlu0 0
        %4363 = vperm.xlu0 %4362, %v4297
        %v4364 = vpop.permute.xlu0 %4363
        %4367 = vset.pattern.permute.xlu0 0
        %4368 = vperm.xlu0 %4367, %v4298
        %v4369 = vpop.permute.xlu0 %4368
        %4372 = vset.pattern.permute.xlu0 0
        %4373 = vperm.xlu0 %4372, %v4299
        %v4374 = vpop.permute.xlu0 %4373
        %4377 = vset.pattern.permute.xlu0 0
        %4378 = vperm.xlu0 %4377, %v4300
        %v4379 = vpop.permute.xlu0 %4378
        %4382 = vset.pattern.permute.xlu0 0
        %4383 = vperm.xlu0 %4382, %v4301
        %v4384 = vpop.permute.xlu0 %4383
        %4387 = vset.pattern.permute.xlu0 0
        %4388 = vperm.xlu0 %4387, %v4302
        %v4389 = vpop.permute.xlu0 %4388
        %4392 = vset.pattern.permute.xlu0 0
        %4393 = vperm.xlu0 %4392, %v4303
        %v4394 = vpop.permute.xlu0 %4393
        %4397 = vset.pattern.permute.xlu0 0
        %4398 = vperm.xlu0 %4397, %v4304
        %v4399 = vpop.permute.xlu0 %4398
        %4402 = vset.pattern.permute.xlu0 0
        %4403 = vperm.xlu0 %4402, %v4305
        %v4404 = vpop.permute.xlu0 %4403
        %4407 = vset.pattern.permute.xlu0 0
        %4408 = vperm.xlu0 %4407, %v4306
        %v4409 = vpop.permute.xlu0 %4408
        %4412 = vset.pattern.permute.xlu0 0
        %4413 = vperm.xlu0 %4412, %v4307
        %v4414 = vpop.permute.xlu0 %4413
        %4417 = vset.pattern.permute.xlu0 0
        %4418 = vperm.xlu0 %4417, %v4308
        %v4419 = vpop.permute.xlu0 %4418
        %4422 = vset.pattern.permute.xlu0 0
        %4423 = vperm.xlu0 %4422, %v4309
        %v4424 = vpop.permute.xlu0 %4423
        %4427 = vset.pattern.permute.xlu0 0
        %4428 = vperm.xlu0 %4427, %v4310
        %v4429 = vpop.permute.xlu0 %4428
        %4432 = vset.pattern.permute.xlu0 0
        %4433 = vperm.xlu0 %4432, %v4311
        %v4434 = vpop.permute.xlu0 %4433
        %4437 = vset.pattern.permute.xlu0 0
        %4438 = vperm.xlu0 %4437, %v4312
        %v4439 = vpop.permute.xlu0 %4438
        %4442 = vset.pattern.permute.xlu0 0
        %4443 = vperm.xlu0 %4442, %v4313
        %v4444 = vpop.permute.xlu0 %4443
        %4447 = vset.pattern.permute.xlu0 0
        %4448 = vperm.xlu0 %4447, %v4314
        %v4449 = vpop.permute.xlu0 %4448
        %4452 = vset.pattern.permute.xlu0 0
        %4453 = vperm.xlu0 %4452, %v4315
        %v4454 = vpop.permute.xlu0 %4453
        %4457 = vset.pattern.permute.xlu0 0
        %4458 = vperm.xlu0 %4457, %v4316
        %v4459 = vpop.permute.xlu0 %4458
        %4462 = vset.pattern.permute.xlu0 0
        %4463 = vperm.xlu0 %4462, %v4317
        %v4464 = vpop.permute.xlu0 %4463
        %4467 = vset.pattern.permute.xlu0 0
        %4468 = vperm.xlu0 %4467, %v4318
        %v4469 = vpop.permute.xlu0 %4468
        %4472 = vset.pattern.permute.xlu0 0
        %4473 = vperm.xlu0 %4472, %v4319
        %v4474 = vpop.permute.xlu0 %4473
        %4477 = vset.pattern.permute.xlu0 0
        %4478 = vperm.xlu0 %4477, %v4320
        %v4479 = vpop.permute.xlu0 %4478
        %4482 = vset.pattern.permute.xlu0 0
        %4483 = vperm.xlu0 %4482, %v4321
        %v4484 = vpop.permute.xlu0 %4483
        %4487 = vset.pattern.permute.xlu0 0
        %4488 = vperm.xlu0 %4487, %v4322
        %v4489 = vpop.permute.xlu0 %4488
        %4492 = vset.pattern.permute.xlu0 0
        %4493 = vperm.xlu0 %4492, %v4323
        %v4494 = vpop.permute.xlu0 %4493
        %4497 = vset.pattern.permute.xlu0 0
        %4498 = vperm.xlu0 %4497, %v4324
        %v4499 = vpop.permute.xlu0 %4498
        %4502 = vset.pattern.permute.xlu0 0
        %4503 = vperm.xlu0 %4502, %v4325
        %v4504 = vpop.permute.xlu0 %4503
        %4507 = vset.pattern.permute.xlu0 0
        %4508 = vperm.xlu0 %4507, %v4326
        %v4509 = vpop.permute.xlu0 %4508
        %4512 = vset.pattern.permute.xlu0 0
        %4513 = vperm.xlu0 %4512, %v4327
        %v4514 = vpop.permute.xlu0 %4513
        %4517 = vset.pattern.permute.xlu0 0
        %4518 = vperm.xlu0 %4517, %v4328
        %v4519 = vpop.permute.xlu0 %4518
        %4522 = vset.pattern.permute.xlu0 0
        %4523 = vperm.xlu0 %4522, %v4329
        %v4524 = vpop.permute.xlu0 %4523
        %4527 = vset.pattern.permute.xlu0 0
        %4528 = vperm.xlu0 %4527, %v4330
        %v4529 = vpop.permute.xlu0 %4528
        %4532 = vset.pattern.permute.xlu0 0
        %4533 = vperm.xlu0 %4532, %v4331
        %v4534 = vpop.permute.xlu0 %4533
        %4537 = vset.pattern.permute.xlu0 0
        %4538 = vperm.xlu0 %4537, %v4332
        %v4539 = vpop.permute.xlu0 %4538
        %4542 = vset.pattern.permute.xlu0 0
        %4543 = vperm.xlu0 %4542, %v4333
        %v4544 = vpop.permute.xlu0 %4543
        %4547 = vset.pattern.permute.xlu0 0
        %4548 = vperm.xlu0 %4547, %v4334
        %v4549 = vpop.permute.xlu0 %4548
        %4552 = vset.pattern.permute.xlu0 0
        %4553 = vperm.xlu0 %4552, %v4335
        %v4554 = vpop.permute.xlu0 %4553
        %4557 = vset.pattern.permute.xlu0 0
        %4558 = vperm.xlu0 %4557, %v4336
        %v4559 = vpop.permute.xlu0 %4558
        %4562 = vset.pattern.permute.xlu0 0
        %4563 = vperm.xlu0 %4562, %v4337
        %v4564 = vpop.permute.xlu0 %4563
        %4567 = vset.pattern.permute.xlu0 0
        %4568 = vperm.xlu0 %4567, %v4338
        %v4569 = vpop.permute.xlu0 %4568
        %4572 = vset.pattern.permute.xlu0 0
        %4573 = vperm.xlu0 %4572, %v4339
        %v4574 = vpop.permute.xlu0 %4573
        %4577 = vset.pattern.permute.xlu0 0
        %4578 = vperm.xlu0 %4577, %v4340
        %v4579 = vpop.permute.xlu0 %4578
        %4582 = vset.pattern.permute.xlu0 0
        %4583 = vperm.xlu0 %4582, %v4341
        %v4584 = vpop.permute.xlu0 %4583
        %4587 = vset.pattern.permute.xlu0 0
        %4588 = vperm.xlu0 %4587, %v4342
        %v4589 = vpop.permute.xlu0 %4588
        %4592 = vset.pattern.permute.xlu0 0
        %4593 = vperm.xlu0 %4592, %v4343
        %v4594 = vpop.permute.xlu0 %4593
        %4597 = vset.pattern.permute.xlu0 0
        %4598 = vperm.xlu0 %4597, %v4344
        %v4599 = vpop.permute.xlu0 %4598
        %4602 = vset.pattern.permute.xlu0 0
        %4603 = vperm.xlu0 %4602, %v4345
        %v4604 = vpop.permute.xlu0 %4603
        %4607 = vset.pattern.permute.xlu0 0
        %4608 = vperm.xlu0 %4607, %v4346
        %v4609 = vpop.permute.xlu0 %4608
        %4612 = vset.pattern.permute.xlu0 0
        %4613 = vperm.xlu0 %4612, %v4347
        %v4614 = vpop.permute.xlu0 %4613
        %4617 = vset.pattern.permute.xlu0 0
        %4618 = vperm.xlu0 %4617, %v4348
        %v4619 = vpop.permute.xlu0 %4618
        %4622 = vset.pattern.permute.xlu0 0
        %4623 = vperm.xlu0 %4622, %v4349
        %v4624 = vpop.permute.xlu0 %4623
        %4627 = vset.pattern.permute.xlu0 0
        %4628 = vperm.xlu0 %4627, %v4350
        %v4629 = vpop.permute.xlu0 %4628
        %4632 = vset.pattern.permute.xlu0 0
        %4633 = vperm.xlu0 %4632, %v4351
        %v4634 = vpop.permute.xlu0 %4633
        %4637 = vset.pattern.permute.xlu0 0
        %4638 = vperm.xlu0 %4637, %v4352
        %v4639 = vpop.permute.xlu0 %4638
        %4642 = vset.pattern.permute.xlu0 0
        %4643 = vperm.xlu0 %4642, %v4353
        %v4644 = vpop.permute.xlu0 %4643
        %4647 = vset.pattern.permute.xlu0 0
        %4648 = vperm.xlu0 %4647, %v4354
        %v4649 = vpop.permute.xlu0 %4648
        %4652 = vset.pattern.permute.xlu0 0
        %4653 = vperm.xlu0 %4652, %v4355
        %v4654 = vpop.permute.xlu0 %4653
        %4657 = vset.pattern.permute.xlu0 0
        %4658 = vperm.xlu0 %4657, %v4356
        %v4659 = vpop.permute.xlu0 %4658
        %4662 = vset.pattern.permute.xlu0 0
        %4663 = vperm.xlu0 %4662, %v4357
        %v4664 = vpop.permute.xlu0 %4663
        %4667 = vset.pattern.permute.xlu0 0
        %4668 = vperm.xlu0 %4667, %v4358
        %v4669 = vpop.permute.xlu0 %4668
        %4672 = vset.pattern.permute.xlu0 0
        %4673 = vperm.xlu0 %4672, %v4359
        %v4674 = vpop.permute.xlu0 %4673
        %4677 = vset.pattern.permute.xlu0 0
        %4678 = vperm.xlu0 %4677, %v4360
        %v4679 = vpop.permute.xlu0 %4678
        %v4809 = vunpack.c.l.b16 %v4105
        %v4810 = vunpack.c.h.b16 %v4105
        %v4811 = vunpack.c.l.b16 %v4106
        %v4812 = vunpack.c.h.b16 %v4106
        %v4813 = vunpack.c.l.b16 %v4107
        %v4814 = vunpack.c.h.b16 %v4107
        %v4815 = vunpack.c.l.b16 %v4108
        %v4816 = vunpack.c.h.b16 %v4108
        %v4817 = vunpack.c.l.b16 %v4109
        %v4818 = vunpack.c.h.b16 %v4109
        %v4819 = vunpack.c.l.b16 %v4110
        %v4820 = vunpack.c.h.b16 %v4110
        %v4821 = vunpack.c.l.b16 %v4111
        %v4822 = vunpack.c.h.b16 %v4111
        %v4823 = vunpack.c.l.b16 %v4112
        %v4824 = vunpack.c.h.b16 %v4112
        %v4825 = vunpack.c.l.b16 %v4113
        %v4826 = vunpack.c.h.b16 %v4113
        %v4827 = vunpack.c.l.b16 %v4114
        %v4828 = vunpack.c.h.b16 %v4114
        %v4829 = vunpack.c.l.b16 %v4115
        %v4830 = vunpack.c.h.b16 %v4115
        %v4831 = vunpack.c.l.b16 %v4116
        %v4832 = vunpack.c.h.b16 %v4116
        %v4833 = vunpack.c.l.b16 %v4117
        %v4834 = vunpack.c.h.b16 %v4117
        %v4835 = vunpack.c.l.b16 %v4118
        %v4836 = vunpack.c.h.b16 %v4118
        %v4837 = vunpack.c.l.b16 %v4119
        %v4838 = vunpack.c.h.b16 %v4119
        %v4839 = vunpack.c.l.b16 %v4120
        %v4840 = vunpack.c.h.b16 %v4120
        %v4841 = vunpack.c.l.b16 %v4121
        %v4842 = vunpack.c.h.b16 %v4121
        %v4843 = vunpack.c.l.b16 %v4122
        %v4844 = vunpack.c.h.b16 %v4122
        %v4845 = vunpack.c.l.b16 %v4123
        %v4846 = vunpack.c.h.b16 %v4123
        %v4847 = vunpack.c.l.b16 %v4124
        %v4848 = vunpack.c.h.b16 %v4124
        %v4849 = vunpack.c.l.b16 %v4125
        %v4850 = vunpack.c.h.b16 %v4125
        %v4851 = vunpack.c.l.b16 %v4126
        %v4852 = vunpack.c.h.b16 %v4126
        %v4853 = vunpack.c.l.b16 %v4127
        %v4854 = vunpack.c.h.b16 %v4127
        %v4855 = vunpack.c.l.b16 %v4128
        %v4856 = vunpack.c.h.b16 %v4128
        %v4857 = vunpack.c.l.b16 %v4129
        %v4858 = vunpack.c.h.b16 %v4129
        %v4859 = vunpack.c.l.b16 %v4130
        %v4860 = vunpack.c.h.b16 %v4130
        %v4861 = vunpack.c.l.b16 %v4131
        %v4862 = vunpack.c.h.b16 %v4131
        %v4863 = vunpack.c.l.b16 %v4132
        %v4864 = vunpack.c.h.b16 %v4132
        %v4865 = vunpack.c.l.b16 %v4133
        %v4866 = vunpack.c.h.b16 %v4133
        %v4867 = vunpack.c.l.b16 %v4134
        %v4868 = vunpack.c.h.b16 %v4134
        %v4869 = vunpack.c.l.b16 %v4135
        %v4870 = vunpack.c.h.b16 %v4135
        %v4871 = vunpack.c.l.b16 %v4136
        %v4872 = vunpack.c.h.b16 %v4136
        %v4873 = vunpack.c.l.b16 %v4137
        %v4874 = vunpack.c.h.b16 %v4137
        %v4875 = vunpack.c.l.b16 %v4138
        %v4876 = vunpack.c.h.b16 %v4138
        %v4877 = vunpack.c.l.b16 %v4139
        %v4878 = vunpack.c.h.b16 %v4139
        %v4879 = vunpack.c.l.b16 %v4140
        %v4880 = vunpack.c.h.b16 %v4140
        %v4881 = vunpack.c.l.b16 %v4141
        %v4882 = vunpack.c.h.b16 %v4141
        %v4883 = vunpack.c.l.b16 %v4142
        %v4884 = vunpack.c.h.b16 %v4142
        %v4885 = vunpack.c.l.b16 %v4143
        %v4886 = vunpack.c.h.b16 %v4143
        %v4887 = vunpack.c.l.b16 %v4144
        %v4888 = vunpack.c.h.b16 %v4144
        %v4889 = vunpack.c.l.b16 %v4145
        %v4890 = vunpack.c.h.b16 %v4145
        %v4891 = vunpack.c.l.b16 %v4146
        %v4892 = vunpack.c.h.b16 %v4146
        %v4893 = vunpack.c.l.b16 %v4147
        %v4894 = vunpack.c.h.b16 %v4147
        %v4895 = vunpack.c.l.b16 %v4148
        %v4896 = vunpack.c.h.b16 %v4148
        %v4897 = vunpack.c.l.b16 %v4149
        %v4898 = vunpack.c.h.b16 %v4149
        %v4899 = vunpack.c.l.b16 %v4150
        %v4900 = vunpack.c.h.b16 %v4150
        %v4901 = vunpack.c.l.b16 %v4151
        %v4902 = vunpack.c.h.b16 %v4151
        %v4903 = vunpack.c.l.b16 %v4152
        %v4904 = vunpack.c.h.b16 %v4152
        %v4905 = vunpack.c.l.b16 %v4153
        %v4906 = vunpack.c.h.b16 %v4153
        %v4907 = vunpack.c.l.b16 %v4154
        %v4908 = vunpack.c.h.b16 %v4154
        %v4909 = vunpack.c.l.b16 %v4155
        %v4910 = vunpack.c.h.b16 %v4155
        %v4911 = vunpack.c.l.b16 %v4156
        %v4912 = vunpack.c.h.b16 %v4156
        %v4913 = vunpack.c.l.b16 %v4157
        %v4914 = vunpack.c.h.b16 %v4157
        %v4915 = vunpack.c.l.b16 %v4158
        %v4916 = vunpack.c.h.b16 %v4158
        %v4917 = vunpack.c.l.b16 %v4159
        %v4918 = vunpack.c.h.b16 %v4159
        %v4919 = vunpack.c.l.b16 %v4160
        %v4920 = vunpack.c.h.b16 %v4160
        %v4921 = vunpack.c.l.b16 %v4161
        %v4922 = vunpack.c.h.b16 %v4161
        %v4923 = vunpack.c.l.b16 %v4162
        %v4924 = vunpack.c.h.b16 %v4162
        %v4925 = vunpack.c.l.b16 %v4163
        %v4926 = vunpack.c.h.b16 %v4163
        %v4927 = vunpack.c.l.b16 %v4164
        %v4928 = vunpack.c.h.b16 %v4164
        %v4929 = vunpack.c.l.b16 %v4165
        %v4930 = vunpack.c.h.b16 %v4165
        %v4931 = vunpack.c.l.b16 %v4166
        %v4932 = vunpack.c.h.b16 %v4166
        %v4933 = vunpack.c.l.b16 %v4167
        %v4934 = vunpack.c.h.b16 %v4167
        %v4935 = vunpack.c.l.b16 %v4168
        %v4936 = vunpack.c.h.b16 %v4168
        %v4937 = vunpack.c.l.b16 %v4169
        %v4938 = vunpack.c.h.b16 %v4169
        %v4939 = vunpack.c.l.b16 %v4170
        %v4940 = vunpack.c.h.b16 %v4170
        %v4941 = vunpack.c.l.b16 %v4171
        %v4942 = vunpack.c.h.b16 %v4171
        %v4943 = vunpack.c.l.b16 %v4172
        %v4944 = vunpack.c.h.b16 %v4172
        %v4945 = vunpack.c.l.b16 %v4173
        %v4946 = vunpack.c.h.b16 %v4173
        %v4947 = vunpack.c.l.b16 %v4174
        %v4948 = vunpack.c.h.b16 %v4174
        %v4949 = vunpack.c.l.b16 %v4175
        %v4950 = vunpack.c.h.b16 %v4175
        %v4951 = vunpack.c.l.b16 %v4176
        %v4952 = vunpack.c.h.b16 %v4176
        %v4953 = vunpack.c.l.b16 %v4177
        %v4954 = vunpack.c.h.b16 %v4177
        %v4955 = vunpack.c.l.b16 %v4178
        %v4956 = vunpack.c.h.b16 %v4178
        %v4957 = vunpack.c.l.b16 %v4179
        %v4958 = vunpack.c.h.b16 %v4179
        %v4959 = vunpack.c.l.b16 %v4180
        %v4960 = vunpack.c.h.b16 %v4180
        %v4961 = vunpack.c.l.b16 %v4181
        %v4962 = vunpack.c.h.b16 %v4181
        %v4963 = vunpack.c.l.b16 %v4182
        %v4964 = vunpack.c.h.b16 %v4182
        %v4965 = vunpack.c.l.b16 %v4183
        %v4966 = vunpack.c.h.b16 %v4183
        %v4967 = vunpack.c.l.b16 %v4184
        %v4968 = vunpack.c.h.b16 %v4184
        %v4969 = vunpack.c.l.b16 %v4185
        %v4970 = vunpack.c.h.b16 %v4185
        %v4971 = vunpack.c.l.b16 %v4186
        %v4972 = vunpack.c.h.b16 %v4186
        %v4973 = vunpack.c.l.b16 %v4187
        %v4974 = vunpack.c.h.b16 %v4187
        %v4975 = vunpack.c.l.b16 %v4188
        %v4976 = vunpack.c.h.b16 %v4188
        %v4977 = vunpack.c.l.b16 %v4189
        %v4978 = vunpack.c.h.b16 %v4189
        %v4979 = vunpack.c.l.b16 %v4190
        %v4980 = vunpack.c.h.b16 %v4190
        %v4981 = vunpack.c.l.b16 %v4191
        %v4982 = vunpack.c.h.b16 %v4191
        %v4983 = vunpack.c.l.b16 %v4192
        %v4984 = vunpack.c.h.b16 %v4192
        %v4985 = vunpack.c.l.b16 %v4193
        %v4986 = vunpack.c.h.b16 %v4193
        %v4987 = vunpack.c.l.b16 %v4194
        %v4988 = vunpack.c.h.b16 %v4194
        %v4989 = vunpack.c.l.b16 %v4195
        %v4990 = vunpack.c.h.b16 %v4195
        %v4991 = vunpack.c.l.b16 %v4196
        %v4992 = vunpack.c.h.b16 %v4196
        %v4993 = vunpack.c.l.b16 %v4197
        %v4994 = vunpack.c.h.b16 %v4197
        %v4995 = vunpack.c.l.b16 %v4198
        %v4996 = vunpack.c.h.b16 %v4198
        %v4997 = vunpack.c.l.b16 %v4199
        %v4998 = vunpack.c.h.b16 %v4199
        %v4999 = vunpack.c.l.b16 %v4200
        %v5000 = vunpack.c.h.b16 %v4200
        %v5001 = vunpack.c.l.b16 %v4201
        %v5002 = vunpack.c.h.b16 %v4201
        %v5003 = vunpack.c.l.b16 %v4202
        %v5004 = vunpack.c.h.b16 %v4202
        %v5005 = vunpack.c.l.b16 %v4203
        %v5006 = vunpack.c.h.b16 %v4203
        %v5007 = vunpack.c.l.b16 %v4204
        %v5008 = vunpack.c.h.b16 %v4204
        %v5009 = vunpack.c.l.b16 %v4205
        %v5010 = vunpack.c.h.b16 %v4205
        %v5011 = vunpack.c.l.b16 %v4206
        %v5012 = vunpack.c.h.b16 %v4206
        %v5013 = vunpack.c.l.b16 %v4207
        %v5014 = vunpack.c.h.b16 %v4207
        %v5015 = vunpack.c.l.b16 %v4208
        %v5016 = vunpack.c.h.b16 %v4208
        %v5017 = vunpack.c.l.b16 %v4209
        %v5018 = vunpack.c.h.b16 %v4209
        %v5019 = vunpack.c.l.b16 %v4210
        %v5020 = vunpack.c.h.b16 %v4210
        %v5021 = vunpack.c.l.b16 %v4211
        %v5022 = vunpack.c.h.b16 %v4211
        %v5023 = vunpack.c.l.b16 %v4212
        %v5024 = vunpack.c.h.b16 %v4212
        %v5025 = vunpack.c.l.b16 %v4213
        %v5026 = vunpack.c.h.b16 %v4213
        %v5027 = vunpack.c.l.b16 %v4214
        %v5028 = vunpack.c.h.b16 %v4214
        %v5029 = vunpack.c.l.b16 %v4215
        %v5030 = vunpack.c.h.b16 %v4215
        %v5031 = vunpack.c.l.b16 %v4216
        %v5032 = vunpack.c.h.b16 %v4216
        %v5033 = vunpack.c.l.b16 %v4217
        %v5034 = vunpack.c.h.b16 %v4217
        %v5035 = vunpack.c.l.b16 %v4218
        %v5036 = vunpack.c.h.b16 %v4218
        %v5037 = vunpack.c.l.b16 %v4219
        %v5038 = vunpack.c.h.b16 %v4219
        %v5039 = vunpack.c.l.b16 %v4220
        %v5040 = vunpack.c.h.b16 %v4220
        %v5041 = vunpack.c.l.b16 %v4221
        %v5042 = vunpack.c.h.b16 %v4221
        %v5043 = vunpack.c.l.b16 %v4222
        %v5044 = vunpack.c.h.b16 %v4222
        %v5045 = vunpack.c.l.b16 %v4223
        %v5046 = vunpack.c.h.b16 %v4223
        %v5047 = vunpack.c.l.b16 %v4224
        %v5048 = vunpack.c.h.b16 %v4224
        %v5049 = vunpack.c.l.b16 %v4225
        %v5050 = vunpack.c.h.b16 %v4225
        %v5051 = vunpack.c.l.b16 %v4226
        %v5052 = vunpack.c.h.b16 %v4226
        %v5053 = vunpack.c.l.b16 %v4227
        %v5054 = vunpack.c.h.b16 %v4227
        %v5055 = vunpack.c.l.b16 %v4228
        %v5056 = vunpack.c.h.b16 %v4228
        %v5057 = vunpack.c.l.b16 %v4229
        %v5058 = vunpack.c.h.b16 %v4229
        %v5059 = vunpack.c.l.b16 %v4230
        %v5060 = vunpack.c.h.b16 %v4230
        %v5061 = vunpack.c.l.b16 %v4231
        %v5062 = vunpack.c.h.b16 %v4231
        %v5063 = vunpack.c.l.b16 %v4232
        %v5064 = vunpack.c.h.b16 %v4232
        %v5065 = vpack.c.b16 %v4813, %v4809
        %v5066 = vpack.c.b16 %v4814, %v4810
        %v5067 = vpack.c.b16 %v4815, %v4811
        %v5068 = vpack.c.b16 %v4816, %v4812
        %v5069 = vpack.c.b16 %v4821, %v4817
        %v5070 = vpack.c.b16 %v4822, %v4818
        %v5071 = vpack.c.b16 %v4823, %v4819
        %v5072 = vpack.c.b16 %v4824, %v4820
        %v5073 = vpack.c.b16 %v4829, %v4825
        %v5074 = vpack.c.b16 %v4830, %v4826
        %v5075 = vpack.c.b16 %v4831, %v4827
        %v5076 = vpack.c.b16 %v4832, %v4828
        %v5077 = vpack.c.b16 %v4837, %v4833
        %v5078 = vpack.c.b16 %v4838, %v4834
        %v5079 = vpack.c.b16 %v4839, %v4835
        %v5080 = vpack.c.b16 %v4840, %v4836
        %v5081 = vpack.c.b16 %v4845, %v4841
        %v5082 = vpack.c.b16 %v4846, %v4842
        %v5083 = vpack.c.b16 %v4847, %v4843
        %v5084 = vpack.c.b16 %v4848, %v4844
        %v5085 = vpack.c.b16 %v4853, %v4849
        %v5086 = vpack.c.b16 %v4854, %v4850
        %v5087 = vpack.c.b16 %v4855, %v4851
        %v5088 = vpack.c.b16 %v4856, %v4852
        %v5089 = vpack.c.b16 %v4861, %v4857
        %v5090 = vpack.c.b16 %v4862, %v4858
        %v5091 = vpack.c.b16 %v4863, %v4859
        %v5092 = vpack.c.b16 %v4864, %v4860
        %v5093 = vpack.c.b16 %v4869, %v4865
        %v5094 = vpack.c.b16 %v4870, %v4866
        %v5095 = vpack.c.b16 %v4871, %v4867
        %v5096 = vpack.c.b16 %v4872, %v4868
        %v5097 = vpack.c.b16 %v4877, %v4873
        %v5098 = vpack.c.b16 %v4878, %v4874
        %v5099 = vpack.c.b16 %v4879, %v4875
        %v5100 = vpack.c.b16 %v4880, %v4876
        %v5101 = vpack.c.b16 %v4885, %v4881
        %v5102 = vpack.c.b16 %v4886, %v4882
        %v5103 = vpack.c.b16 %v4887, %v4883
        %v5104 = vpack.c.b16 %v4888, %v4884
        %v5105 = vpack.c.b16 %v4893, %v4889
        %v5106 = vpack.c.b16 %v4894, %v4890
        %v5107 = vpack.c.b16 %v4895, %v4891
        %v5108 = vpack.c.b16 %v4896, %v4892
        %v5109 = vpack.c.b16 %v4901, %v4897
        %v5110 = vpack.c.b16 %v4902, %v4898
        %v5111 = vpack.c.b16 %v4903, %v4899
        %v5112 = vpack.c.b16 %v4904, %v4900
        %v5113 = vpack.c.b16 %v4909, %v4905
        %v5114 = vpack.c.b16 %v4910, %v4906
        %v5115 = vpack.c.b16 %v4911, %v4907
        %v5116 = vpack.c.b16 %v4912, %v4908
        %v5117 = vpack.c.b16 %v4917, %v4913
        %v5118 = vpack.c.b16 %v4918, %v4914
        %v5119 = vpack.c.b16 %v4919, %v4915
        %v5120 = vpack.c.b16 %v4920, %v4916
        %v5121 = vpack.c.b16 %v4925, %v4921
        %v5122 = vpack.c.b16 %v4926, %v4922
        %v5123 = vpack.c.b16 %v4927, %v4923
        %v5124 = vpack.c.b16 %v4928, %v4924
        %v5125 = vpack.c.b16 %v4933, %v4929
        %v5126 = vpack.c.b16 %v4934, %v4930
        %v5127 = vpack.c.b16 %v4935, %v4931
        %v5128 = vpack.c.b16 %v4936, %v4932
        %v5129 = vpack.c.b16 %v4941, %v4937
        %v5130 = vpack.c.b16 %v4942, %v4938
        %v5131 = vpack.c.b16 %v4943, %v4939
        %v5132 = vpack.c.b16 %v4944, %v4940
        %v5133 = vpack.c.b16 %v4949, %v4945
        %v5134 = vpack.c.b16 %v4950, %v4946
        %v5135 = vpack.c.b16 %v4951, %v4947
        %v5136 = vpack.c.b16 %v4952, %v4948
        %v5137 = vpack.c.b16 %v4957, %v4953
        %v5138 = vpack.c.b16 %v4958, %v4954
        %v5139 = vpack.c.b16 %v4959, %v4955
        %v5140 = vpack.c.b16 %v4960, %v4956
        %v5141 = vpack.c.b16 %v4965, %v4961
        %v5142 = vpack.c.b16 %v4966, %v4962
        %v5143 = vpack.c.b16 %v4967, %v4963
        %v5144 = vpack.c.b16 %v4968, %v4964
        %v5145 = vpack.c.b16 %v4973, %v4969
        %v5146 = vpack.c.b16 %v4974, %v4970
        %v5147 = vpack.c.b16 %v4975, %v4971
        %v5148 = vpack.c.b16 %v4976, %v4972
        %v5149 = vpack.c.b16 %v4981, %v4977
        %v5150 = vpack.c.b16 %v4982, %v4978
        %v5151 = vpack.c.b16 %v4983, %v4979
        %v5152 = vpack.c.b16 %v4984, %v4980
        %v5153 = vpack.c.b16 %v4989, %v4985
        %v5154 = vpack.c.b16 %v4990, %v4986
        %v5155 = vpack.c.b16 %v4991, %v4987
        %v5156 = vpack.c.b16 %v4992, %v4988
        %v5157 = vpack.c.b16 %v4997, %v4993
        %v5158 = vpack.c.b16 %v4998, %v4994
        %v5159 = vpack.c.b16 %v4999, %v4995
        %v5160 = vpack.c.b16 %v5000, %v4996
        %v5161 = vpack.c.b16 %v5005, %v5001
        %v5162 = vpack.c.b16 %v5006, %v5002
        %v5163 = vpack.c.b16 %v5007, %v5003
        %v5164 = vpack.c.b16 %v5008, %v5004
        %v5165 = vpack.c.b16 %v5013, %v5009
        %v5166 = vpack.c.b16 %v5014, %v5010
        %v5167 = vpack.c.b16 %v5015, %v5011
        %v5168 = vpack.c.b16 %v5016, %v5012
        %v5169 = vpack.c.b16 %v5021, %v5017
        %v5170 = vpack.c.b16 %v5022, %v5018
        %v5171 = vpack.c.b16 %v5023, %v5019
        %v5172 = vpack.c.b16 %v5024, %v5020
        %v5173 = vpack.c.b16 %v5029, %v5025
        %v5174 = vpack.c.b16 %v5030, %v5026
        %v5175 = vpack.c.b16 %v5031, %v5027
        %v5176 = vpack.c.b16 %v5032, %v5028
        %v5177 = vpack.c.b16 %v5037, %v5033
        %v5178 = vpack.c.b16 %v5038, %v5034
        %v5179 = vpack.c.b16 %v5039, %v5035
        %v5180 = vpack.c.b16 %v5040, %v5036
        %v5181 = vpack.c.b16 %v5045, %v5041
        %v5182 = vpack.c.b16 %v5046, %v5042
        %v5183 = vpack.c.b16 %v5047, %v5043
        %v5184 = vpack.c.b16 %v5048, %v5044
        %v5185 = vpack.c.b16 %v5053, %v5049
        %v5186 = vpack.c.b16 %v5054, %v5050
        %v5187 = vpack.c.b16 %v5055, %v5051
        %v5188 = vpack.c.b16 %v5056, %v5052
        %v5189 = vpack.c.b16 %v5061, %v5057
        %v5190 = vpack.c.b16 %v5062, %v5058
        %v5191 = vpack.c.b16 %v5063, %v5059
        %v5192 = vpack.c.b16 %v5064, %v5060
        %5321 = vmatprep.subr.bf16.mxu0 %v4234
        %5322 = vmatpush1.bf16.msra.mxu0 %v4233
        %5323 = vmatprep.subr.bf16.mxu0 %v4236
        %5324 = vmatpush1.bf16.msra.mxu0 %v4235
        %5325 = vmatprep.subr.bf16.mxu0 %v4238
        %5326 = vmatpush1.bf16.msra.mxu0 %v4237
        %5327 = vmatprep.subr.bf16.mxu0 %v4240
        %5328 = vmatpush1.bf16.msra.mxu0 %v4239
        %5329 = vmatprep.subr.bf16.mxu0 %v4242
        %5330 = vmatpush1.bf16.msra.mxu0 %v4241
        %5331 = vmatprep.subr.bf16.mxu0 %v4244
        %5332 = vmatpush1.bf16.msra.mxu0 %v4243
        %5333 = vmatprep.subr.bf16.mxu0 %v4246
        %5334 = vmatpush1.bf16.msra.mxu0 %v4245
        %5335 = vmatprep.subr.bf16.mxu0 %v4248
        %5336 = vmatpush1.bf16.msra.mxu0 %v4247
        %5337 = vmatprep.subr.bf16.mxu0 %v4250
        %5338 = vmatpush1.bf16.msra.mxu0 %v4249
        %5339 = vmatprep.subr.bf16.mxu0 %v4252
        %5340 = vmatpush1.bf16.msra.mxu0 %v4251
        %5341 = vmatprep.subr.bf16.mxu0 %v4254
        %5342 = vmatpush1.bf16.msra.mxu0 %v4253
        %5343 = vmatprep.subr.bf16.mxu0 %v4256
        %5344 = vmatpush1.bf16.msra.mxu0 %v4255
        %5345 = vmatprep.subr.bf16.mxu0 %v4258
        %5346 = vmatpush1.bf16.msra.mxu0 %v4257
        %5347 = vmatprep.subr.bf16.mxu0 %v4260
        %5348 = vmatpush1.bf16.msra.mxu0 %v4259
        %5349 = vmatprep.subr.bf16.mxu0 %v4262
        %5350 = vmatpush1.bf16.msra.mxu0 %v4261
        %5351 = vmatprep.subr.bf16.mxu0 %v4264
        %5352 = vmatpush1.bf16.msra.mxu0 %v4263
        %5353 = vmatprep.mubr.bf16.mxu0 %v5066
        %5354 = vmatmul.mubr.bf16.gmra.mrb[0].mxu0 %v5065
        %v5355 = vpop.f32.mrb[0].mxu0
        %v5356 = vadd.f32 %v4364, %v5355
        %v5357 = vpop.f32.mrb[0].mxu0
        %v5358 = vadd.f32 %v4364, %v5357
        %v5359 = vpop.f32.mrb[0].mxu0
        %v5360 = vadd.f32 %v4369, %v5359
        %v5361 = vpop.f32.mrb[0].mxu0
        %v5362 = vadd.f32 %v4369, %v5361
        %5363 = vmatprep.mubr.bf16.mxu0 %v5070
        %5364 = vmatmul.mubr.bf16.gmra.mrb[0].mxu0 %v5069
        %v5365 = vpop.f32.mrb[0].mxu0
        %v5366 = vadd.f32 %v4374, %v5365
        %v5367 = vpop.f32.mrb[0].mxu0
        %v5368 = vadd.f32 %v4374, %v5367
        %v5369 = vpop.f32.mrb[0].mxu0
        %v5370 = vadd.f32 %v4379, %v5369
        %v5371 = vpop.f32.mrb[0].mxu0
        %v5372 = vadd.f32 %v4379, %v5371
        %5373 = vmatprep.mubr.bf16.mxu0 %v5074
        %5374 = vmatmul.mubr.bf16.gmra.mrb[0].mxu0 %v5073
        %v5375 = vpop.f32.mrb[0].mxu0
        %v5376 = vadd.f32 %v4384, %v5375
        %v5377 = vpop.f32.mrb[0].mxu0
        %v5378 = vadd.f32 %v4384, %v5377
        %v5379 = vpop.f32.mrb[0].mxu0
        %v5380 = vadd.f32 %v4389, %v5379
        %v5381 = vpop.f32.mrb[0].mxu0
        %v5382 = vadd.f32 %v4389, %v5381
        %5383 = vmatprep.mubr.bf16.mxu0 %v5078
        %5384 = vmatmul.mubr.bf16.gmra.mrb[0].mxu0 %v5077
        %v5385 = vpop.f32.mrb[0].mxu0
        %v5386 = vadd.f32 %v4394, %v5385
        %v5387 = vpop.f32.mrb[0].mxu0
        %v5388 = vadd.f32 %v4394, %v5387
        %v5389 = vpop.f32.mrb[0].mxu0
        %v5390 = vadd.f32 %v4399, %v5389
        %v5391 = vpop.f32.mrb[0].mxu0
        %v5392 = vadd.f32 %v4399, %v5391
        %5393 = vmatprep.mubr.bf16.mxu0 %v5082
        %5394 = vmatmul.mubr.bf16.gmra.mrb[0].mxu0 %v5081
        %v5395 = vpop.f32.mrb[0].mxu0
        %v5396 = vadd.f32 %v4404, %v5395
        %v5397 = vpop.f32.mrb[0].mxu0
        %v5398 = vadd.f32 %v4404, %v5397
        %v5399 = vpop.f32.mrb[0].mxu0
        %v5400 = vadd.f32 %v4409, %v5399
        %v5401 = vpop.f32.mrb[0].mxu0
        %v5402 = vadd.f32 %v4409, %v5401
        %5403 = vmatprep.mubr.bf16.mxu0 %v5086
        %5404 = vmatmul.mubr.bf16.gmra.mrb[0].mxu0 %v5085
        %v5405 = vpop.f32.mrb[0].mxu0
        %v5406 = vadd.f32 %v4414, %v5405
        %v5407 = vpop.f32.mrb[0].mxu0
        %v5408 = vadd.f32 %v4414, %v5407
        %v5409 = vpop.f32.mrb[0].mxu0
        %v5410 = vadd.f32 %v4419, %v5409
        %v5411 = vpop.f32.mrb[0].mxu0
        %v5412 = vadd.f32 %v4419, %v5411
        %5413 = vmatprep.mubr.bf16.mxu0 %v5090
        %5414 = vmatmul.mubr.bf16.gmra.mrb[0].mxu0 %v5089
        %v5415 = vpop.f32.mrb[0].mxu0
        %v5416 = vadd.f32 %v4424, %v5415
        %v5417 = vpop.f32.mrb[0].mxu0
        %v5418 = vadd.f32 %v4424, %v5417
        %v5419 = vpop.f32.mrb[0].mxu0
        %v5420 = vadd.f32 %v4429, %v5419
        %v5421 = vpop.f32.mrb[0].mxu0
        %v5422 = vadd.f32 %v4429, %v5421
        %5423 = vmatprep.mubr.bf16.mxu0 %v5094
        %5424 = vmatmul.mubr.bf16.gmra.mrb[0].mxu0 %v5093
        %v5425 = vpop.f32.mrb[0].mxu0
        %v5426 = vadd.f32 %v4434, %v5425
        %v5427 = vpop.f32.mrb[0].mxu0
        %v5428 = vadd.f32 %v4434, %v5427
        %v5429 = vpop.f32.mrb[0].mxu0
        %v5430 = vadd.f32 %v4439, %v5429
        %v5431 = vpop.f32.mrb[0].mxu0
        %v5432 = vadd.f32 %v4439, %v5431
        %5433 = vmatprep.mubr.bf16.mxu0 %v5098
        %5434 = vmatmul.mubr.bf16.gmra.mrb[0].mxu0 %v5097
        %v5435 = vpop.f32.mrb[0].mxu0
        %v5436 = vadd.f32 %v4444, %v5435
        %v5437 = vpop.f32.mrb[0].mxu0
        %v5438 = vadd.f32 %v4444, %v5437
        %v5439 = vpop.f32.mrb[0].mxu0
        %v5440 = vadd.f32 %v4449, %v5439
        %v5441 = vpop.f32.mrb[0].mxu0
        %v5442 = vadd.f32 %v4449, %v5441
        %5443 = vmatprep.mubr.bf16.mxu0 %v5102
        %5444 = vmatmul.mubr.bf16.gmra.mrb[0].mxu0 %v5101
        %v5445 = vpop.f32.mrb[0].mxu0
        %v5446 = vadd.f32 %v4454, %v5445
        %v5447 = vpop.f32.mrb[0].mxu0
        %v5448 = vadd.f32 %v4454, %v5447
        %v5449 = vpop.f32.mrb[0].mxu0
        %v5450 = vadd.f32 %v4459, %v5449
        %v5451 = vpop.f32.mrb[0].mxu0
        %v5452 = vadd.f32 %v4459, %v5451
        %5453 = vmatprep.mubr.bf16.mxu0 %v5106
        %5454 = vmatmul.mubr.bf16.gmra.mrb[0].mxu0 %v5105
        %v5455 = vpop.f32.mrb[0].mxu0
        %v5456 = vadd.f32 %v4464, %v5455
        %v5457 = vpop.f32.mrb[0].mxu0
        %v5458 = vadd.f32 %v4464, %v5457
        %v5459 = vpop.f32.mrb[0].mxu0
        %v5460 = vadd.f32 %v4469, %v5459
        %v5461 = vpop.f32.mrb[0].mxu0
        %v5462 = vadd.f32 %v4469, %v5461
        %5463 = vmatprep.mubr.bf16.mxu0 %v5110
        %5464 = vmatmul.mubr.bf16.gmra.mrb[0].mxu0 %v5109
        %v5465 = vpop.f32.mrb[0].mxu0
        %v5466 = vadd.f32 %v4474, %v5465
        %v5467 = vpop.f32.mrb[0].mxu0
        %v5468 = vadd.f32 %v4474, %v5467
        %v5469 = vpop.f32.mrb[0].mxu0
        %v5470 = vadd.f32 %v4479, %v5469
        %v5471 = vpop.f32.mrb[0].mxu0
        %v5472 = vadd.f32 %v4479, %v5471
        %5473 = vmatprep.mubr.bf16.mxu0 %v5114
        %5474 = vmatmul.mubr.bf16.gmra.mrb[0].mxu0 %v5113
        %v5475 = vpop.f32.mrb[0].mxu0
        %v5476 = vadd.f32 %v4484, %v5475
        %v5477 = vpop.f32.mrb[0].mxu0
        %v5478 = vadd.f32 %v4484, %v5477
        %v5479 = vpop.f32.mrb[0].mxu0
        %v5480 = vadd.f32 %v4489, %v5479
        %v5481 = vpop.f32.mrb[0].mxu0
        %v5482 = vadd.f32 %v4489, %v5481
        %5483 = vmatprep.mubr.bf16.mxu0 %v5118
        %5484 = vmatmul.mubr.bf16.gmra.mrb[0].mxu0 %v5117
        %v5485 = vpop.f32.mrb[0].mxu0
        %v5486 = vadd.f32 %v4494, %v5485
        %v5487 = vpop.f32.mrb[0].mxu0
        %v5488 = vadd.f32 %v4494, %v5487
        %v5489 = vpop.f32.mrb[0].mxu0
        %v5490 = vadd.f32 %v4499, %v5489
        %v5491 = vpop.f32.mrb[0].mxu0
        %v5492 = vadd.f32 %v4499, %v5491
        %5493 = vmatprep.mubr.bf16.mxu0 %v5122
        %5494 = vmatmul.mubr.bf16.gmra.mrb[0].mxu0 %v5121
        %v5495 = vpop.f32.mrb[0].mxu0
        %v5496 = vadd.f32 %v4504, %v5495
        %v5497 = vpop.f32.mrb[0].mxu0
        %v5498 = vadd.f32 %v4504, %v5497
        %v5499 = vpop.f32.mrb[0].mxu0
        %v5500 = vadd.f32 %v4509, %v5499
        %v5501 = vpop.f32.mrb[0].mxu0
        %v5502 = vadd.f32 %v4509, %v5501
        %5503 = vmatprep.mubr.bf16.mxu0 %v5126
        %5504 = vmatmul.mubr.bf16.gmra.mrb[0].mxu0 %v5125
        %v5505 = vpop.f32.mrb[0].mxu0
        %v5506 = vadd.f32 %v4514, %v5505
        %v5507 = vpop.f32.mrb[0].mxu0
        %v5508 = vadd.f32 %v4514, %v5507
        %v5509 = vpop.f32.mrb[0].mxu0
        %v5510 = vadd.f32 %v4519, %v5509
        %v5511 = vpop.f32.mrb[0].mxu0
        %v5512 = vadd.f32 %v4519, %v5511
        %5513 = vmatprep.mubr.bf16.mxu0 %v5130
        %5514 = vmatmul.mubr.bf16.gmra.mrb[0].mxu0 %v5129
        %v5515 = vpop.f32.mrb[0].mxu0
        %v5516 = vadd.f32 %v4524, %v5515
        %v5517 = vpop.f32.mrb[0].mxu0
        %v5518 = vadd.f32 %v4524, %v5517
        %v5519 = vpop.f32.mrb[0].mxu0
        %v5520 = vadd.f32 %v4529, %v5519
        %v5521 = vpop.f32.mrb[0].mxu0
        %v5522 = vadd.f32 %v4529, %v5521
        %5523 = vmatprep.mubr.bf16.mxu0 %v5134
        %5524 = vmatmul.mubr.bf16.gmra.mrb[0].mxu0 %v5133
        %v5525 = vpop.f32.mrb[0].mxu0
        %v5526 = vadd.f32 %v4534, %v5525
        %v5527 = vpop.f32.mrb[0].mxu0
        %v5528 = vadd.f32 %v4534, %v5527
        %v5529 = vpop.f32.mrb[0].mxu0
        %v5530 = vadd.f32 %v4539, %v5529
        %v5531 = vpop.f32.mrb[0].mxu0
        %v5532 = vadd.f32 %v4539, %v5531
        %5533 = vmatprep.mubr.bf16.mxu0 %v5138
        %5534 = vmatmul.mubr.bf16.gmra.mrb[0].mxu0 %v5137
        %v5535 = vpop.f32.mrb[0].mxu0
        %v5536 = vadd.f32 %v4544, %v5535
        %v5537 = vpop.f32.mrb[0].mxu0
        %v5538 = vadd.f32 %v4544, %v5537
        %v5539 = vpop.f32.mrb[0].mxu0
        %v5540 = vadd.f32 %v4549, %v5539
        %v5541 = vpop.f32.mrb[0].mxu0
        %v5542 = vadd.f32 %v4549, %v5541
        %5543 = vmatprep.mubr.bf16.mxu0 %v5142
        %5544 = vmatmul.mubr.bf16.gmra.mrb[0].mxu0 %v5141
        %v5545 = vpop.f32.mrb[0].mxu0
        %v5546 = vadd.f32 %v4554, %v5545
        %v5547 = vpop.f32.mrb[0].mxu0
        %v5548 = vadd.f32 %v4554, %v5547
        %v5549 = vpop.f32.mrb[0].mxu0
        %v5550 = vadd.f32 %v4559, %v5549
        %v5551 = vpop.f32.mrb[0].mxu0
        %v5552 = vadd.f32 %v4559, %v5551
        %5553 = vmatprep.mubr.bf16.mxu0 %v5146
        %5554 = vmatmul.mubr.bf16.gmra.mrb[0].mxu0 %v5145
        %v5555 = vpop.f32.mrb[0].mxu0
        %v5556 = vadd.f32 %v4564, %v5555
        %v5557 = vpop.f32.mrb[0].mxu0
        %v5558 = vadd.f32 %v4564, %v5557
        %v5559 = vpop.f32.mrb[0].mxu0
        %v5560 = vadd.f32 %v4569, %v5559
        %v5561 = vpop.f32.mrb[0].mxu0
        %v5562 = vadd.f32 %v4569, %v5561
        %5563 = vmatprep.mubr.bf16.mxu0 %v5150
        %5564 = vmatmul.mubr.bf16.gmra.mrb[0].mxu0 %v5149
        %v5565 = vpop.f32.mrb[0].mxu0
        %v5566 = vadd.f32 %v4574, %v5565
        %v5567 = vpop.f32.mrb[0].mxu0
        %v5568 = vadd.f32 %v4574, %v5567
        %v5569 = vpop.f32.mrb[0].mxu0
        %v5570 = vadd.f32 %v4579, %v5569
        %v5571 = vpop.f32.mrb[0].mxu0
        %v5572 = vadd.f32 %v4579, %v5571
        %5573 = vmatprep.mubr.bf16.mxu0 %v5154
        %5574 = vmatmul.mubr.bf16.gmra.mrb[0].mxu0 %v5153
        %v5575 = vpop.f32.mrb[0].mxu0
        %v5576 = vadd.f32 %v4584, %v5575
        %v5577 = vpop.f32.mrb[0].mxu0
        %v5578 = vadd.f32 %v4584, %v5577
        %v5579 = vpop.f32.mrb[0].mxu0
        %v5580 = vadd.f32 %v4589, %v5579
        %v5581 = vpop.f32.mrb[0].mxu0
        %v5582 = vadd.f32 %v4589, %v5581
        %5583 = vmatprep.mubr.bf16.mxu0 %v5158
        %5584 = vmatmul.mubr.bf16.gmra.mrb[0].mxu0 %v5157
        %v5585 = vpop.f32.mrb[0].mxu0
        %v5586 = vadd.f32 %v4594, %v5585
        %v5587 = vpop.f32.mrb[0].mxu0
        %v5588 = vadd.f32 %v4594, %v5587
        %v5589 = vpop.f32.mrb[0].mxu0
        %v5590 = vadd.f32 %v4599, %v5589
        %v5591 = vpop.f32.mrb[0].mxu0
        %v5592 = vadd.f32 %v4599, %v5591
        %5593 = vmatprep.mubr.bf16.mxu0 %v5162
        %5594 = vmatmul.mubr.bf16.gmra.mrb[0].mxu0 %v5161
        %v5595 = vpop.f32.mrb[0].mxu0
        %v5596 = vadd.f32 %v4604, %v5595
        %v5597 = vpop.f32.mrb[0].mxu0
        %v5598 = vadd.f32 %v4604, %v5597
        %v5599 = vpop.f32.mrb[0].mxu0
        %v5600 = vadd.f32 %v4609, %v5599
        %v5601 = vpop.f32.mrb[0].mxu0
        %v5602 = vadd.f32 %v4609, %v5601
        %5603 = vmatprep.mubr.bf16.mxu0 %v5166
        %5604 = vmatmul.mubr.bf16.gmra.mrb[0].mxu0 %v5165
        %v5605 = vpop.f32.mrb[0].mxu0
        %v5606 = vadd.f32 %v4614, %v5605
        %v5607 = vpop.f32.mrb[0].mxu0
        %v5608 = vadd.f32 %v4614, %v5607
        %v5609 = vpop.f32.mrb[0].mxu0
        %v5610 = vadd.f32 %v4619, %v5609
        %v5611 = vpop.f32.mrb[0].mxu0
        %v5612 = vadd.f32 %v4619, %v5611
        %5613 = vmatprep.mubr.bf16.mxu0 %v5170
        %5614 = vmatmul.mubr.bf16.gmra.mrb[0].mxu0 %v5169
        %v5615 = vpop.f32.mrb[0].mxu0
        %v5616 = vadd.f32 %v4624, %v5615
        %v5617 = vpop.f32.mrb[0].mxu0
        %v5618 = vadd.f32 %v4624, %v5617
        %v5619 = vpop.f32.mrb[0].mxu0
        %v5620 = vadd.f32 %v4629, %v5619
        %v5621 = vpop.f32.mrb[0].mxu0
        %v5622 = vadd.f32 %v4629, %v5621
        %5623 = vmatprep.mubr.bf16.mxu0 %v5174
        %5624 = vmatmul.mubr.bf16.gmra.mrb[0].mxu0 %v5173
        %v5625 = vpop.f32.mrb[0].mxu0
        %v5626 = vadd.f32 %v4634, %v5625
        %v5627 = vpop.f32.mrb[0].mxu0
        %v5628 = vadd.f32 %v4634, %v5627
        %v5629 = vpop.f32.mrb[0].mxu0
        %v5630 = vadd.f32 %v4639, %v5629
        %v5631 = vpop.f32.mrb[0].mxu0
        %v5632 = vadd.f32 %v4639, %v5631
        %5633 = vmatprep.mubr.bf16.mxu0 %v5178
        %5634 = vmatmul.mubr.bf16.gmra.mrb[0].mxu0 %v5177
        %v5635 = vpop.f32.mrb[0].mxu0
        %v5636 = vadd.f32 %v4644, %v5635
        %v5637 = vpop.f32.mrb[0].mxu0
        %v5638 = vadd.f32 %v4644, %v5637
        %v5639 = vpop.f32.mrb[0].mxu0
        %v5640 = vadd.f32 %v4649, %v5639
        %v5641 = vpop.f32.mrb[0].mxu0
        %v5642 = vadd.f32 %v4649, %v5641
        %5643 = vmatprep.mubr.bf16.mxu0 %v5182
        %5644 = vmatmul.mubr.bf16.gmra.mrb[0].mxu0 %v5181
        %v5645 = vpop.f32.mrb[0].mxu0
        %v5646 = vadd.f32 %v4654, %v5645
        %v5647 = vpop.f32.mrb[0].mxu0
        %v5648 = vadd.f32 %v4654, %v5647
        %v5649 = vpop.f32.mrb[0].mxu0
        %v5650 = vadd.f32 %v4659, %v5649
        %v5651 = vpop.f32.mrb[0].mxu0
        %v5652 = vadd.f32 %v4659, %v5651
        %5653 = vmatprep.mubr.bf16.mxu0 %v5186
        %5654 = vmatmul.mubr.bf16.gmra.mrb[0].mxu0 %v5185
        %v5655 = vpop.f32.mrb[0].mxu0
        %v5656 = vadd.f32 %v4664, %v5655
        %v5657 = vpop.f32.mrb[0].mxu0
        %v5658 = vadd.f32 %v4664, %v5657
        %v5659 = vpop.f32.mrb[0].mxu0
        %v5660 = vadd.f32 %v4669, %v5659
        %v5661 = vpop.f32.mrb[0].mxu0
        %v5662 = vadd.f32 %v4669, %v5661
        %5663 = vmatprep.mubr.bf16.mxu0 %v5190
        %5664 = vmatmul.mubr.bf16.gmra.mrb[0].mxu0 %v5189
        %v5665 = vpop.f32.mrb[0].mxu0
        %v5666 = vadd.f32 %v4674, %v5665
        %v5667 = vpop.f32.mrb[0].mxu0
        %v5668 = vadd.f32 %v4674, %v5667
        %v5669 = vpop.f32.mrb[0].mxu0
        %v5670 = vadd.f32 %v4679, %v5669
        %v5671 = vpop.f32.mrb[0].mxu0
        %v5672 = vadd.f32 %v4679, %v5671
        %5673 = vdwg.mxu0
        %5674 = vmatprep.subr.bf16.mxu0 %v4266
        %5675 = vmatpush1.bf16.msra.mxu0 %v4265
        %5676 = vmatprep.subr.bf16.mxu0 %v4268
        %5677 = vmatpush1.bf16.msra.mxu0 %v4267
        %5678 = vmatprep.subr.bf16.mxu0 %v4270
        %5679 = vmatpush1.bf16.msra.mxu0 %v4269
        %5680 = vmatprep.subr.bf16.mxu0 %v4272
        %5681 = vmatpush1.bf16.msra.mxu0 %v4271
        %5682 = vmatprep.subr.bf16.mxu0 %v4274
        %5683 = vmatpush1.bf16.msra.mxu0 %v4273
        %5684 = vmatprep.subr.bf16.mxu0 %v4276
        %5685 = vmatpush1.bf16.msra.mxu0 %v4275
        %5686 = vmatprep.subr.bf16.mxu0 %v4278
        %5687 = vmatpush1.bf16.msra.mxu0 %v4277
        %5688 = vmatprep.subr.bf16.mxu0 %v4280
        %5689 = vmatpush1.bf16.msra.mxu0 %v4279
        %5690 = vmatprep.subr.bf16.mxu0 %v4282
        %5691 = vmatpush1.bf16.msra.mxu0 %v4281
        %5692 = vmatprep.subr.bf16.mxu0 %v4284
        %5693 = vmatpush1.bf16.msra.mxu0 %v4283
        %5694 = vmatprep.subr.bf16.mxu0 %v4286
        %5695 = vmatpush1.bf16.msra.mxu0 %v4285
        %5696 = vmatprep.subr.bf16.mxu0 %v4288
        %5697 = vmatpush1.bf16.msra.mxu0 %v4287
        %5698 = vmatprep.subr.bf16.mxu0 %v4290
        %5699 = vmatpush1.bf16.msra.mxu0 %v4289
        %5700 = vmatprep.subr.bf16.mxu0 %v4292
        %5701 = vmatpush1.bf16.msra.mxu0 %v4291
        %5702 = vmatprep.subr.bf16.mxu0 %v4294
        %5703 = vmatpush1.bf16.msra.mxu0 %v4293
        %5704 = vmatprep.subr.bf16.mxu0 %v4296
        %5705 = vmatpush1.bf16.msra.mxu0 %v4295
        %5706 = vmatprep.mubr.bf16.mxu0 %v5068
        %5707 = vmatmul.mubr.bf16.gmra.mrb[0].mxu0 %v5067
        %v5708 = vpop.f32.mrb[0].mxu0
        %v5709 = vadd.f32 %v5356, %v5708
        %v5710 = vpop.f32.mrb[0].mxu0
        %v5711 = vadd.f32 %v5358, %v5710
        %v5712 = vpop.f32.mrb[0].mxu0
        %v5713 = vadd.f32 %v5360, %v5712
        %v5714 = vpop.f32.mrb[0].mxu0
        %v5715 = vadd.f32 %v5362, %v5714
        %5716 = vmatprep.mubr.bf16.mxu0 %v5072
        %5717 = vmatmul.mubr.bf16.gmra.mrb[0].mxu0 %v5071
        %v5718 = vpop.f32.mrb[0].mxu0
        %v5719 = vadd.f32 %v5366, %v5718
        %v5720 = vpop.f32.mrb[0].mxu0
        %v5721 = vadd.f32 %v5368, %v5720
        %v5722 = vpop.f32.mrb[0].mxu0
        %v5723 = vadd.f32 %v5370, %v5722
        %v5724 = vpop.f32.mrb[0].mxu0
        %v5725 = vadd.f32 %v5372, %v5724
        %5726 = vmatprep.mubr.bf16.mxu0 %v5076
        %5727 = vmatmul.mubr.bf16.gmra.mrb[0].mxu0 %v5075
        %v5728 = vpop.f32.mrb[0].mxu0
        %v5729 = vadd.f32 %v5376, %v5728
        %v5730 = vpop.f32.mrb[0].mxu0
        %v5731 = vadd.f32 %v5378, %v5730
        %v5732 = vpop.f32.mrb[0].mxu0
        %v5733 = vadd.f32 %v5380, %v5732
        %v5734 = vpop.f32.mrb[0].mxu0
        %v5735 = vadd.f32 %v5382, %v5734
        %5736 = vmatprep.mubr.bf16.mxu0 %v5080
        %5737 = vmatmul.mubr.bf16.gmra.mrb[0].mxu0 %v5079
        %v5738 = vpop.f32.mrb[0].mxu0
        %v5739 = vadd.f32 %v5386, %v5738
        %v5740 = vpop.f32.mrb[0].mxu0
        %v5741 = vadd.f32 %v5388, %v5740
        %v5742 = vpop.f32.mrb[0].mxu0
        %v5743 = vadd.f32 %v5390, %v5742
        %v5744 = vpop.f32.mrb[0].mxu0
        %v5745 = vadd.f32 %v5392, %v5744
        %5746 = vmatprep.mubr.bf16.mxu0 %v5084
        %5747 = vmatmul.mubr.bf16.gmra.mrb[0].mxu0 %v5083
        %v5748 = vpop.f32.mrb[0].mxu0
        %v5749 = vadd.f32 %v5396, %v5748
        %v5750 = vpop.f32.mrb[0].mxu0
        %v5751 = vadd.f32 %v5398, %v5750
        %v5752 = vpop.f32.mrb[0].mxu0
        %v5753 = vadd.f32 %v5400, %v5752
        %v5754 = vpop.f32.mrb[0].mxu0
        %v5755 = vadd.f32 %v5402, %v5754
        %5756 = vmatprep.mubr.bf16.mxu0 %v5088
        %5757 = vmatmul.mubr.bf16.gmra.mrb[0].mxu0 %v5087
        %v5758 = vpop.f32.mrb[0].mxu0
        %v5759 = vadd.f32 %v5406, %v5758
        %v5760 = vpop.f32.mrb[0].mxu0
        %v5761 = vadd.f32 %v5408, %v5760
        %v5762 = vpop.f32.mrb[0].mxu0
        %v5763 = vadd.f32 %v5410, %v5762
        %v5764 = vpop.f32.mrb[0].mxu0
        %v5765 = vadd.f32 %v5412, %v5764
        %5766 = vmatprep.mubr.bf16.mxu0 %v5092
        %5767 = vmatmul.mubr.bf16.gmra.mrb[0].mxu0 %v5091
        %v5768 = vpop.f32.mrb[0].mxu0
        %v5769 = vadd.f32 %v5416, %v5768
        %v5770 = vpop.f32.mrb[0].mxu0
        %v5771 = vadd.f32 %v5418, %v5770
        %v5772 = vpop.f32.mrb[0].mxu0
        %v5773 = vadd.f32 %v5420, %v5772
        %v5774 = vpop.f32.mrb[0].mxu0
        %v5775 = vadd.f32 %v5422, %v5774
        %5776 = vmatprep.mubr.bf16.mxu0 %v5096
        %5777 = vmatmul.mubr.bf16.gmra.mrb[0].mxu0 %v5095
        %v5778 = vpop.f32.mrb[0].mxu0
        %v5779 = vadd.f32 %v5426, %v5778
        %v5780 = vpop.f32.mrb[0].mxu0
        %v5781 = vadd.f32 %v5428, %v5780
        %v5782 = vpop.f32.mrb[0].mxu0
        %v5783 = vadd.f32 %v5430, %v5782
        %v5784 = vpop.f32.mrb[0].mxu0
        %v5785 = vadd.f32 %v5432, %v5784
        %5786 = vmatprep.mubr.bf16.mxu0 %v5100
        %5787 = vmatmul.mubr.bf16.gmra.mrb[0].mxu0 %v5099
        %v5788 = vpop.f32.mrb[0].mxu0
        %v5789 = vadd.f32 %v5436, %v5788
        %v5790 = vpop.f32.mrb[0].mxu0
        %v5791 = vadd.f32 %v5438, %v5790
        %v5792 = vpop.f32.mrb[0].mxu0
        %v5793 = vadd.f32 %v5440, %v5792
        %v5794 = vpop.f32.mrb[0].mxu0
        %v5795 = vadd.f32 %v5442, %v5794
        %5796 = vmatprep.mubr.bf16.mxu0 %v5104
        %5797 = vmatmul.mubr.bf16.gmra.mrb[0].mxu0 %v5103
        %v5798 = vpop.f32.mrb[0].mxu0
        %v5799 = vadd.f32 %v5446, %v5798
        %v5800 = vpop.f32.mrb[0].mxu0
        %v5801 = vadd.f32 %v5448, %v5800
        %v5802 = vpop.f32.mrb[0].mxu0
        %v5803 = vadd.f32 %v5450, %v5802
        %v5804 = vpop.f32.mrb[0].mxu0
        %v5805 = vadd.f32 %v5452, %v5804
        %5806 = vmatprep.mubr.bf16.mxu0 %v5108
        %5807 = vmatmul.mubr.bf16.gmra.mrb[0].mxu0 %v5107
        %v5808 = vpop.f32.mrb[0].mxu0
        %v5809 = vadd.f32 %v5456, %v5808
        %v5810 = vpop.f32.mrb[0].mxu0
        %v5811 = vadd.f32 %v5458, %v5810
        %v5812 = vpop.f32.mrb[0].mxu0
        %v5813 = vadd.f32 %v5460, %v5812
        %v5814 = vpop.f32.mrb[0].mxu0
        %v5815 = vadd.f32 %v5462, %v5814
        %5816 = vmatprep.mubr.bf16.mxu0 %v5112
        %5817 = vmatmul.mubr.bf16.gmra.mrb[0].mxu0 %v5111
        %v5818 = vpop.f32.mrb[0].mxu0
        %v5819 = vadd.f32 %v5466, %v5818
        %v5820 = vpop.f32.mrb[0].mxu0
        %v5821 = vadd.f32 %v5468, %v5820
        %v5822 = vpop.f32.mrb[0].mxu0
        %v5823 = vadd.f32 %v5470, %v5822
        %v5824 = vpop.f32.mrb[0].mxu0
        %v5825 = vadd.f32 %v5472, %v5824
        %5826 = vmatprep.mubr.bf16.mxu0 %v5116
        %5827 = vmatmul.mubr.bf16.gmra.mrb[0].mxu0 %v5115
        %v5828 = vpop.f32.mrb[0].mxu0
        %v5829 = vadd.f32 %v5476, %v5828
        %v5830 = vpop.f32.mrb[0].mxu0
        %v5831 = vadd.f32 %v5478, %v5830
        %v5832 = vpop.f32.mrb[0].mxu0
        %v5833 = vadd.f32 %v5480, %v5832
        %v5834 = vpop.f32.mrb[0].mxu0
        %v5835 = vadd.f32 %v5482, %v5834
        %5836 = vmatprep.mubr.bf16.mxu0 %v5120
        %5837 = vmatmul.mubr.bf16.gmra.mrb[0].mxu0 %v5119
        %v5838 = vpop.f32.mrb[0].mxu0
        %v5839 = vadd.f32 %v5486, %v5838
        %v5840 = vpop.f32.mrb[0].mxu0
        %v5841 = vadd.f32 %v5488, %v5840
        %v5842 = vpop.f32.mrb[0].mxu0
        %v5843 = vadd.f32 %v5490, %v5842
        %v5844 = vpop.f32.mrb[0].mxu0
        %v5845 = vadd.f32 %v5492, %v5844
        %5846 = vmatprep.mubr.bf16.mxu0 %v5124
        %5847 = vmatmul.mubr.bf16.gmra.mrb[0].mxu0 %v5123
        %v5848 = vpop.f32.mrb[0].mxu0
        %v5849 = vadd.f32 %v5496, %v5848
        %v5850 = vpop.f32.mrb[0].mxu0
        %v5851 = vadd.f32 %v5498, %v5850
        %v5852 = vpop.f32.mrb[0].mxu0
        %v5853 = vadd.f32 %v5500, %v5852
        %v5854 = vpop.f32.mrb[0].mxu0
        %v5855 = vadd.f32 %v5502, %v5854
        %5856 = vmatprep.mubr.bf16.mxu0 %v5128
        %5857 = vmatmul.mubr.bf16.gmra.mrb[0].mxu0 %v5127
        %v5858 = vpop.f32.mrb[0].mxu0
        %v5859 = vadd.f32 %v5506, %v5858
        %v5860 = vpop.f32.mrb[0].mxu0
        %v5861 = vadd.f32 %v5508, %v5860
        %v5862 = vpop.f32.mrb[0].mxu0
        %v5863 = vadd.f32 %v5510, %v5862
        %v5864 = vpop.f32.mrb[0].mxu0
        %v5865 = vadd.f32 %v5512, %v5864
        %5866 = vmatprep.mubr.bf16.mxu0 %v5132
        %5867 = vmatmul.mubr.bf16.gmra.mrb[0].mxu0 %v5131
        %v5868 = vpop.f32.mrb[0].mxu0
        %v5869 = vadd.f32 %v5516, %v5868
        %v5870 = vpop.f32.mrb[0].mxu0
        %v5871 = vadd.f32 %v5518, %v5870
        %v5872 = vpop.f32.mrb[0].mxu0
        %v5873 = vadd.f32 %v5520, %v5872
        %v5874 = vpop.f32.mrb[0].mxu0
        %v5875 = vadd.f32 %v5522, %v5874
        %5876 = vmatprep.mubr.bf16.mxu0 %v5136
        %5877 = vmatmul.mubr.bf16.gmra.mrb[0].mxu0 %v5135
        %v5878 = vpop.f32.mrb[0].mxu0
        %v5879 = vadd.f32 %v5526, %v5878
        %v5880 = vpop.f32.mrb[0].mxu0
        %v5881 = vadd.f32 %v5528, %v5880
        %v5882 = vpop.f32.mrb[0].mxu0
        %v5883 = vadd.f32 %v5530, %v5882
        %v5884 = vpop.f32.mrb[0].mxu0
        %v5885 = vadd.f32 %v5532, %v5884
        %5886 = vmatprep.mubr.bf16.mxu0 %v5140
        %5887 = vmatmul.mubr.bf16.gmra.mrb[0].mxu0 %v5139
        %v5888 = vpop.f32.mrb[0].mxu0
        %v5889 = vadd.f32 %v5536, %v5888
        %v5890 = vpop.f32.mrb[0].mxu0
        %v5891 = vadd.f32 %v5538, %v5890
        %v5892 = vpop.f32.mrb[0].mxu0
        %v5893 = vadd.f32 %v5540, %v5892
        %v5894 = vpop.f32.mrb[0].mxu0
        %v5895 = vadd.f32 %v5542, %v5894
        %5896 = vmatprep.mubr.bf16.mxu0 %v5144
        %5897 = vmatmul.mubr.bf16.gmra.mrb[0].mxu0 %v5143
        %v5898 = vpop.f32.mrb[0].mxu0
        %v5899 = vadd.f32 %v5546, %v5898
        %v5900 = vpop.f32.mrb[0].mxu0
        %v5901 = vadd.f32 %v5548, %v5900
        %v5902 = vpop.f32.mrb[0].mxu0
        %v5903 = vadd.f32 %v5550, %v5902
        %v5904 = vpop.f32.mrb[0].mxu0
        %v5905 = vadd.f32 %v5552, %v5904
        %5906 = vmatprep.mubr.bf16.mxu0 %v5148
        %5907 = vmatmul.mubr.bf16.gmra.mrb[0].mxu0 %v5147
        %v5908 = vpop.f32.mrb[0].mxu0
        %v5909 = vadd.f32 %v5556, %v5908
        %v5910 = vpop.f32.mrb[0].mxu0
        %v5911 = vadd.f32 %v5558, %v5910
        %v5912 = vpop.f32.mrb[0].mxu0
        %v5913 = vadd.f32 %v5560, %v5912
        %v5914 = vpop.f32.mrb[0].mxu0
        %v5915 = vadd.f32 %v5562, %v5914
        %5916 = vmatprep.mubr.bf16.mxu0 %v5152
        %5917 = vmatmul.mubr.bf16.gmra.mrb[0].mxu0 %v5151
        %v5918 = vpop.f32.mrb[0].mxu0
        %v5919 = vadd.f32 %v5566, %v5918
        %v5920 = vpop.f32.mrb[0].mxu0
        %v5921 = vadd.f32 %v5568, %v5920
        %v5922 = vpop.f32.mrb[0].mxu0
        %v5923 = vadd.f32 %v5570, %v5922
        %v5924 = vpop.f32.mrb[0].mxu0
        %v5925 = vadd.f32 %v5572, %v5924
        %5926 = vmatprep.mubr.bf16.mxu0 %v5156
        %5927 = vmatmul.mubr.bf16.gmra.mrb[0].mxu0 %v5155
        %v5928 = vpop.f32.mrb[0].mxu0
        %v5929 = vadd.f32 %v5576, %v5928
        %v5930 = vpop.f32.mrb[0].mxu0
        %v5931 = vadd.f32 %v5578, %v5930
        %v5932 = vpop.f32.mrb[0].mxu0
        %v5933 = vadd.f32 %v5580, %v5932
        %v5934 = vpop.f32.mrb[0].mxu0
        %v5935 = vadd.f32 %v5582, %v5934
        %5936 = vmatprep.mubr.bf16.mxu0 %v5160
        %5937 = vmatmul.mubr.bf16.gmra.mrb[0].mxu0 %v5159
        %v5938 = vpop.f32.mrb[0].mxu0
        %v5939 = vadd.f32 %v5586, %v5938
        %v5940 = vpop.f32.mrb[0].mxu0
        %v5941 = vadd.f32 %v5588, %v5940
        %v5942 = vpop.f32.mrb[0].mxu0
        %v5943 = vadd.f32 %v5590, %v5942
        %v5944 = vpop.f32.mrb[0].mxu0
        %v5945 = vadd.f32 %v5592, %v5944
        %5946 = vmatprep.mubr.bf16.mxu0 %v5164
        %5947 = vmatmul.mubr.bf16.gmra.mrb[0].mxu0 %v5163
        %v5948 = vpop.f32.mrb[0].mxu0
        %v5949 = vadd.f32 %v5596, %v5948
        %v5950 = vpop.f32.mrb[0].mxu0
        %v5951 = vadd.f32 %v5598, %v5950
        %v5952 = vpop.f32.mrb[0].mxu0
        %v5953 = vadd.f32 %v5600, %v5952
        %v5954 = vpop.f32.mrb[0].mxu0
        %v5955 = vadd.f32 %v5602, %v5954
        %5956 = vmatprep.mubr.bf16.mxu0 %v5168
        %5957 = vmatmul.mubr.bf16.gmra.mrb[0].mxu0 %v5167
        %v5958 = vpop.f32.mrb[0].mxu0
        %v5959 = vadd.f32 %v5606, %v5958
        %v5960 = vpop.f32.mrb[0].mxu0
        %v5961 = vadd.f32 %v5608, %v5960
        %v5962 = vpop.f32.mrb[0].mxu0
        %v5963 = vadd.f32 %v5610, %v5962
        %v5964 = vpop.f32.mrb[0].mxu0
        %v5965 = vadd.f32 %v5612, %v5964
        %5966 = vmatprep.mubr.bf16.mxu0 %v5172
        %5967 = vmatmul.mubr.bf16.gmra.mrb[0].mxu0 %v5171
        %v5968 = vpop.f32.mrb[0].mxu0
        %v5969 = vadd.f32 %v5616, %v5968
        %v5970 = vpop.f32.mrb[0].mxu0
        %v5971 = vadd.f32 %v5618, %v5970
        %v5972 = vpop.f32.mrb[0].mxu0
        %v5973 = vadd.f32 %v5620, %v5972
        %v5974 = vpop.f32.mrb[0].mxu0
        %v5975 = vadd.f32 %v5622, %v5974
        %5976 = vmatprep.mubr.bf16.mxu0 %v5176
        %5977 = vmatmul.mubr.bf16.gmra.mrb[0].mxu0 %v5175
        %v5978 = vpop.f32.mrb[0].mxu0
        %v5979 = vadd.f32 %v5626, %v5978
        %v5980 = vpop.f32.mrb[0].mxu0
        %v5981 = vadd.f32 %v5628, %v5980
        %v5982 = vpop.f32.mrb[0].mxu0
        %v5983 = vadd.f32 %v5630, %v5982
        %v5984 = vpop.f32.mrb[0].mxu0
        %v5985 = vadd.f32 %v5632, %v5984
        %5986 = vmatprep.mubr.bf16.mxu0 %v5180
        %5987 = vmatmul.mubr.bf16.gmra.mrb[0].mxu0 %v5179
        %v5988 = vpop.f32.mrb[0].mxu0
        %v5989 = vadd.f32 %v5636, %v5988
        %v5990 = vpop.f32.mrb[0].mxu0
        %v5991 = vadd.f32 %v5638, %v5990
        %v5992 = vpop.f32.mrb[0].mxu0
        %v5993 = vadd.f32 %v5640, %v5992
        %v5994 = vpop.f32.mrb[0].mxu0
        %v5995 = vadd.f32 %v5642, %v5994
        %5996 = vmatprep.mubr.bf16.mxu0 %v5184
        %5997 = vmatmul.mubr.bf16.gmra.mrb[0].mxu0 %v5183
        %v5998 = vpop.f32.mrb[0].mxu0
        %v5999 = vadd.f32 %v5646, %v5998
        %v6000 = vpop.f32.mrb[0].mxu0
        %v6001 = vadd.f32 %v5648, %v6000
        %v6002 = vpop.f32.mrb[0].mxu0
        %v6003 = vadd.f32 %v5650, %v6002
        %v6004 = vpop.f32.mrb[0].mxu0
        %v6005 = vadd.f32 %v5652, %v6004
        %6006 = vmatprep.mubr.bf16.mxu0 %v5188
        %6007 = vmatmul.mubr.bf16.gmra.mrb[0].mxu0 %v5187
        %v6008 = vpop.f32.mrb[0].mxu0
        %v6009 = vadd.f32 %v5656, %v6008
        %v6010 = vpop.f32.mrb[0].mxu0
        %v6011 = vadd.f32 %v5658, %v6010
        %v6012 = vpop.f32.mrb[0].mxu0
        %v6013 = vadd.f32 %v5660, %v6012
        %v6014 = vpop.f32.mrb[0].mxu0
        %v6015 = vadd.f32 %v5662, %v6014
        %6016 = vmatprep.mubr.bf16.mxu0 %v5192
        %6017 = vmatmul.mubr.bf16.gmra.mrb[0].mxu0 %v5191
        %v6018 = vpop.f32.mrb[0].mxu0
        %v6019 = vadd.f32 %v5666, %v6018
        %v6020 = vpop.f32.mrb[0].mxu0
        %v6021 = vadd.f32 %v5668, %v6020
        %v6022 = vpop.f32.mrb[0].mxu0
        %v6023 = vadd.f32 %v5670, %v6022
        %v6024 = vpop.f32.mrb[0].mxu0
        %v6025 = vadd.f32 %v5672, %v6024
        %6026 = vdwg.mxu0
        %v6027 = vmax.f32 %v5709, 0.0
        %v6028 = vmax.f32 %v5711, 0.0
        %v6029 = vmax.f32 %v5713, 0.0
        %v6030 = vmax.f32 %v5715, 0.0
        %v6031 = vmax.f32 %v5719, 0.0
        %v6032 = vmax.f32 %v5721, 0.0
        %v6033 = vmax.f32 %v5723, 0.0
        %v6034 = vmax.f32 %v5725, 0.0
        %v6035 = vmax.f32 %v5729, 0.0
        %v6036 = vmax.f32 %v5731, 0.0
        %v6037 = vmax.f32 %v5733, 0.0
        %v6038 = vmax.f32 %v5735, 0.0
        %v6039 = vmax.f32 %v5739, 0.0
        %v6040 = vmax.f32 %v5741, 0.0
        %v6041 = vmax.f32 %v5743, 0.0
        %v6042 = vmax.f32 %v5745, 0.0
        %v6043 = vmax.f32 %v5749, 0.0
        %v6044 = vmax.f32 %v5751, 0.0
        %v6045 = vmax.f32 %v5753, 0.0
        %v6046 = vmax.f32 %v5755, 0.0
        %v6047 = vmax.f32 %v5759, 0.0
        %v6048 = vmax.f32 %v5761, 0.0
        %v6049 = vmax.f32 %v5763, 0.0
        %v6050 = vmax.f32 %v5765, 0.0
        %v6051 = vmax.f32 %v5769, 0.0
        %v6052 = vmax.f32 %v5771, 0.0
        %v6053 = vmax.f32 %v5773, 0.0
        %v6054 = vmax.f32 %v5775, 0.0
        %v6055 = vmax.f32 %v5779, 0.0
        %v6056 = vmax.f32 %v5781, 0.0
        %v6057 = vmax.f32 %v5783, 0.0
        %v6058 = vmax.f32 %v5785, 0.0
        %v6059 = vmax.f32 %v5789, 0.0
        %v6060 = vmax.f32 %v5791, 0.0
        %v6061 = vmax.f32 %v5793, 0.0
        %v6062 = vmax.f32 %v5795, 0.0
        %v6063 = vmax.f32 %v5799, 0.0
        %v6064 = vmax.f32 %v5801, 0.0
        %v6065 = vmax.f32 %v5803, 0.0
        %v6066 = vmax.f32 %v5805, 0.0
        %v6067 = vmax.f32 %v5809, 0.0
        %v6068 = vmax.f32 %v5811, 0.0
        %v6069 = vmax.f32 %v5813, 0.0
        %v6070 = vmax.f32 %v5815, 0.0
        %v6071 = vmax.f32 %v5819, 0.0
        %v6072 = vmax.f32 %v5821, 0.0
        %v6073 = vmax.f32 %v5823, 0.0
        %v6074 = vmax.f32 %v5825, 0.0
        %v6075 = vmax.f32 %v5829, 0.0
        %v6076 = vmax.f32 %v5831, 0.0
        %v6077 = vmax.f32 %v5833, 0.0
        %v6078 = vmax.f32 %v5835, 0.0
        %v6079 = vmax.f32 %v5839, 0.0
        %v6080 = vmax.f32 %v5841, 0.0
        %v6081 = vmax.f32 %v5843, 0.0
        %v6082 = vmax.f32 %v5845, 0.0
        %v6083 = vmax.f32 %v5849, 0.0
        %v6084 = vmax.f32 %v5851, 0.0
        %v6085 = vmax.f32 %v5853, 0.0
        %v6086 = vmax.f32 %v5855, 0.0
        %v6087 = vmax.f32 %v5859, 0.0
        %v6088 = vmax.f32 %v5861, 0.0
        %v6089 = vmax.f32 %v5863, 0.0
        %v6090 = vmax.f32 %v5865, 0.0
        %v6091 = vmax.f32 %v5869, 0.0
        %v6092 = vmax.f32 %v5871, 0.0
        %v6093 = vmax.f32 %v5873, 0.0
        %v6094 = vmax.f32 %v5875, 0.0
        %v6095 = vmax.f32 %v5879, 0.0
        %v6096 = vmax.f32 %v5881, 0.0
        %v6097 = vmax.f32 %v5883, 0.0
        %v6098 = vmax.f32 %v5885, 0.0
        %v6099 = vmax.f32 %v5889, 0.0
        %v6100 = vmax.f32 %v5891, 0.0
        %v6101 = vmax.f32 %v5893, 0.0
        %v6102 = vmax.f32 %v5895, 0.0
        %v6103 = vmax.f32 %v5899, 0.0
        %v6104 = vmax.f32 %v5901, 0.0
        %v6105 = vmax.f32 %v5903, 0.0
        %v6106 = vmax.f32 %v5905, 0.0
        %v6107 = vmax.f32 %v5909, 0.0
        %v6108 = vmax.f32 %v5911, 0.0
        %v6109 = vmax.f32 %v5913, 0.0
        %v6110 = vmax.f32 %v5915, 0.0
        %v6111 = vmax.f32 %v5919, 0.0
        %v6112 = vmax.f32 %v5921, 0.0
        %v6113 = vmax.f32 %v5923, 0.0
        %v6114 = vmax.f32 %v5925, 0.0
        %v6115 = vmax.f32 %v5929, 0.0
        %v6116 = vmax.f32 %v5931, 0.0
        %v6117 = vmax.f32 %v5933, 0.0
        %v6118 = vmax.f32 %v5935, 0.0
        %v6119 = vmax.f32 %v5939, 0.0
        %v6120 = vmax.f32 %v5941, 0.0
        %v6121 = vmax.f32 %v5943, 0.0
        %v6122 = vmax.f32 %v5945, 0.0
        %v6123 = vmax.f32 %v5949, 0.0
        %v6124 = vmax.f32 %v5951, 0.0
        %v6125 = vmax.f32 %v5953, 0.0
        %v6126 = vmax.f32 %v5955, 0.0
        %v6127 = vmax.f32 %v5959, 0.0
        %v6128 = vmax.f32 %v5961, 0.0
        %v6129 = vmax.f32 %v5963, 0.0
        %v6130 = vmax.f32 %v5965, 0.0
        %v6131 = vmax.f32 %v5969, 0.0
        %v6132 = vmax.f32 %v5971, 0.0
        %v6133 = vmax.f32 %v5973, 0.0
        %v6134 = vmax.f32 %v5975, 0.0
        %v6135 = vmax.f32 %v5979, 0.0
        %v6136 = vmax.f32 %v5981, 0.0
        %v6137 = vmax.f32 %v5983, 0.0
        %v6138 = vmax.f32 %v5985, 0.0
        %v6139 = vmax.f32 %v5989, 0.0
        %v6140 = vmax.f32 %v5991, 0.0
        %v6141 = vmax.f32 %v5993, 0.0
        %v6142 = vmax.f32 %v5995, 0.0
        %v6143 = vmax.f32 %v5999, 0.0
        %v6144 = vmax.f32 %v6001, 0.0
        %v6145 = vmax.f32 %v6003, 0.0
        %v6146 = vmax.f32 %v6005, 0.0
        %v6147 = vmax.f32 %v6009, 0.0
        %v6148 = vmax.f32 %v6011, 0.0
        %v6149 = vmax.f32 %v6013, 0.0
        %v6150 = vmax.f32 %v6015, 0.0
        %v6151 = vmax.f32 %v6019, 0.0
        %v6152 = vmax.f32 %v6021, 0.0
        %v6153 = vmax.f32 %v6023, 0.0
        %v6154 = vmax.f32 %v6025, 0.0
        %v6155 = vld [vmem:[%s7] sm:$0xff]
        %v6156 = vld [vmem:[%s7 + $0x8] sm:$0xff]
        %v6157 = vpack.c.bf16 %v6029, %v6027
        %v6158 = vpack.c.bf16 %v6030, %v6028
        %v6159 = vpack.c.bf16 %v6033, %v6031
        %v6160 = vpack.c.bf16 %v6034, %v6032
        %v6161 = vpack.c.bf16 %v6037, %v6035
        %v6162 = vpack.c.bf16 %v6038, %v6036
        %v6163 = vpack.c.bf16 %v6041, %v6039
        %v6164 = vpack.c.bf16 %v6042, %v6040
        %v6165 = vpack.c.bf16 %v6045, %v6043
        %v6166 = vpack.c.bf16 %v6046, %v6044
        %v6167 = vpack.c.bf16 %v6049, %v6047
        %v6168 = vpack.c.bf16 %v6050, %v6048
        %v6169 = vpack.c.bf16 %v6053, %v6051
        %v6170 = vpack.c.bf16 %v6054, %v6052
        %v6171 = vpack.c.bf16 %v6057, %v6055
        %v6172 = vpack.c.bf16 %v6058, %v6056
        %v6173 = vpack.c.bf16 %v6061, %v6059
        %v6174 = vpack.c.bf16 %v6062, %v6060
        %v6175 = vpack.c.bf16 %v6065, %v6063
        %v6176 = vpack.c.bf16 %v6066, %v6064
        %v6177 = vpack.c.bf16 %v6069, %v6067
        %v6178 = vpack.c.bf16 %v6070, %v6068
        %v6179 = vpack.c.bf16 %v6073, %v6071
        %v6180 = vpack.c.bf16 %v6074, %v6072
        %v6181 = vpack.c.bf16 %v6077, %v6075
        %v6182 = vpack.c.bf16 %v6078, %v6076
        %v6183 = vpack.c.bf16 %v6081, %v6079
        %v6184 = vpack.c.bf16 %v6082, %v6080
        %v6185 = vpack.c.bf16 %v6085, %v6083
        %v6186 = vpack.c.bf16 %v6086, %v6084
        %v6187 = vpack.c.bf16 %v6089, %v6087
        %v6188 = vpack.c.bf16 %v6090, %v6088
        %v6189 = vpack.c.bf16 %v6093, %v6091
        %v6190 = vpack.c.bf16 %v6094, %v6092
        %v6191 = vpack.c.bf16 %v6097, %v6095
        %v6192 = vpack.c.bf16 %v6098, %v6096
        %v6193 = vpack.c.bf16 %v6101, %v6099
        %v6194 = vpack.c.bf16 %v6102, %v6100
        %v6195 = vpack.c.bf16 %v6105, %v6103
        %v6196 = vpack.c.bf16 %v6106, %v6104
        %v6197 = vpack.c.bf16 %v6109, %v6107
        %v6198 = vpack.c.bf16 %v6110, %v6108
        %v6199 = vpack.c.bf16 %v6113, %v6111
        %v6200 = vpack.c.bf16 %v6114, %v6112
        %v6201 = vpack.c.bf16 %v6117, %v6115
        %v6202 = vpack.c.bf16 %v6118, %v6116
        %v6203 = vpack.c.bf16 %v6121, %v6119
        %v6204 = vpack.c.bf16 %v6122, %v6120
        %v6205 = vpack.c.bf16 %v6125, %v6123
        %v6206 = vpack.c.bf16 %v6126, %v6124
        %v6207 = vpack.c.bf16 %v6129, %v6127
        %v6208 = vpack.c.bf16 %v6130, %v6128
        %v6209 = vpack.c.bf16 %v6133, %v6131
        %v6210 = vpack.c.bf16 %v6134, %v6132
        %v6211 = vpack.c.bf16 %v6137, %v6135
        %v6212 = vpack.c.bf16 %v6138, %v6136
        %v6213 = vpack.c.bf16 %v6141, %v6139
        %v6214 = vpack.c.bf16 %v6142, %v6140
        %v6215 = vpack.c.bf16 %v6145, %v6143
        %v6216 = vpack.c.bf16 %v6146, %v6144
        %v6217 = vpack.c.bf16 %v6149, %v6147
        %v6218 = vpack.c.bf16 %v6150, %v6148
        %v6219 = vpack.c.bf16 %v6153, %v6151
        %v6220 = vpack.c.bf16 %v6154, %v6152
        %v6221 = vld [vmem:[%s8] sm:$0xff]
        %6223 = vset.pattern.permute.xlu0 0
        %6224 = vperm.xlu0 %6223, %v6221
        %v6225 = vpop.permute.xlu0 %6224
        %v6229 = vunpack.c.l.b16 %v6155
        %v6230 = vunpack.c.h.b16 %v6155
        %v6231 = vunpack.c.l.b16 %v6156
        %v6232 = vunpack.c.h.b16 %v6156
        %v6233 = vpack.c.b16 %v6229, %v6229
        %v6234 = vpack.c.b16 %v6230, %v6230
        %v6235 = vpack.c.b16 %v6231, %v6231
        %v6236 = vpack.c.b16 %v6232, %v6232
        %6241 = vmatprep.subr.bf16.mxu0 %v6158
        %6242 = vmatpush1.bf16.msra.mxu0 %v6157
        %6243 = vmatprep.subr.bf16.mxu0 %v6160
        %6244 = vmatpush1.bf16.msra.mxu0 %v6159
        %6245 = vmatprep.subr.bf16.mxu0 %v6162
        %6246 = vmatpush1.bf16.msra.mxu0 %v6161
        %6247 = vmatprep.subr.bf16.mxu0 %v6164
        %6248 = vmatpush1.bf16.msra.mxu0 %v6163
        %6249 = vmatprep.subr.bf16.mxu0 %v6166
        %6250 = vmatpush1.bf16.msra.mxu0 %v6165
        %6251 = vmatprep.subr.bf16.mxu0 %v6168
        %6252 = vmatpush1.bf16.msra.mxu0 %v6167
        %6253 = vmatprep.subr.bf16.mxu0 %v6170
        %6254 = vmatpush1.bf16.msra.mxu0 %v6169
        %6255 = vmatprep.subr.bf16.mxu0 %v6172
        %6256 = vmatpush1.bf16.msra.mxu0 %v6171
        %6257 = vmatprep.subr.bf16.mxu0 %v6174
        %6258 = vmatpush1.bf16.msra.mxu0 %v6173
        %6259 = vmatprep.subr.bf16.mxu0 %v6176
        %6260 = vmatpush1.bf16.msra.mxu0 %v6175
        %6261 = vmatprep.subr.bf16.mxu0 %v6178
        %6262 = vmatpush1.bf16.msra.mxu0 %v6177
        %6263 = vmatprep.subr.bf16.mxu0 %v6180
        %6264 = vmatpush1.bf16.msra.mxu0 %v6179
        %6265 = vmatprep.subr.bf16.mxu0 %v6182
        %6266 = vmatpush1.bf16.msra.mxu0 %v6181
        %6267 = vmatprep.subr.bf16.mxu0 %v6184
        %6268 = vmatpush1.bf16.msra.mxu0 %v6183
        %6269 = vmatprep.subr.bf16.mxu0 %v6186
        %6270 = vmatpush1.bf16.msra.mxu0 %v6185
        %6271 = vmatprep.subr.bf16.mxu0 %v6188
        %6272 = vmatpush1.bf16.msra.mxu0 %v6187
        %6273 = vmatprep.mubr.bf16.mxu0 %v6234
        %6274 = vmatmul.mubr.bf16.gmra.mrb[0].mxu0 %v6233
        %v6275 = vpop.f32.mrb[0].mxu0
        %v6276 = vadd.f32 %v6225, %v6275
        %v6277 = vpop.f32.mrb[0].mxu0
        %v6278 = vadd.f32 %v6225, %v6277
        %v6279 = vpop.f32.mrb[0].mxu0
        %v6280 = vpop.f32.mrb[0].mxu0
        %6281 = vdwg.mxu0
        %6282 = vmatprep.subr.bf16.mxu0 %v6190
        %6283 = vmatpush1.bf16.msra.mxu0 %v6189
        %6284 = vmatprep.subr.bf16.mxu0 %v6192
        %6285 = vmatpush1.bf16.msra.mxu0 %v6191
        %6286 = vmatprep.subr.bf16.mxu0 %v6194
        %6287 = vmatpush1.bf16.msra.mxu0 %v6193
        %6288 = vmatprep.subr.bf16.mxu0 %v6196
        %6289 = vmatpush1.bf16.msra.mxu0 %v6195
        %6290 = vmatprep.subr.bf16.mxu0 %v6198
        %6291 = vmatpush1.bf16.msra.mxu0 %v6197
        %6292 = vmatprep.subr.bf16.mxu0 %v6200
        %6293 = vmatpush1.bf16.msra.mxu0 %v6199
        %6294 = vmatprep.subr.bf16.mxu0 %v6202
        %6295 = vmatpush1.bf16.msra.mxu0 %v6201
        %6296 = vmatprep.subr.bf16.mxu0 %v6204
        %6297 = vmatpush1.bf16.msra.mxu0 %v6203
        %6298 = vmatprep.subr.bf16.mxu0 %v6206
        %6299 = vmatpush1.bf16.msra.mxu0 %v6205
        %6300 = vmatprep.subr.bf16.mxu0 %v6208
        %6301 = vmatpush1.bf16.msra.mxu0 %v6207
        %6302 = vmatprep.subr.bf16.mxu0 %v6210
        %6303 = vmatpush1.bf16.msra.mxu0 %v6209
        %6304 = vmatprep.subr.bf16.mxu0 %v6212
        %6305 = vmatpush1.bf16.msra.mxu0 %v6211
        %6306 = vmatprep.subr.bf16.mxu0 %v6214
        %6307 = vmatpush1.bf16.msra.mxu0 %v6213
        %6308 = vmatprep.subr.bf16.mxu0 %v6216
        %6309 = vmatpush1.bf16.msra.mxu0 %v6215
        %6310 = vmatprep.subr.bf16.mxu0 %v6218
        %6311 = vmatpush1.bf16.msra.mxu0 %v6217
        %6312 = vmatprep.subr.bf16.mxu0 %v6220
        %6313 = vmatpush1.bf16.msra.mxu0 %v6219
        %6314 = vmatprep.mubr.bf16.mxu0 %v6236
        %6315 = vmatmul.mubr.bf16.gmra.mrb[0].mxu0 %v6235
        %v6316 = vpop.f32.mrb[0].mxu0
        %v6317 = vadd.f32 %v6276, %v6316
        %v6318 = vpop.f32.mrb[0].mxu0
        %v6319 = vadd.f32 %v6278, %v6318
        %v6320 = vpop.f32.mrb[0].mxu0
        %v6321 = vpop.f32.mrb[0].mxu0
        %6322 = vdwg.mxu0
        %6323 = vst [vmem:[%s351] sm:$0xff] %v6317
        %6324 = vst [vmem:[%s351 + $0x8] sm:$0xff] %v6319
        %s6325 = smul.u32 2, %s23
        %p6326 = scmp.lt.s32.totalorder %s6325, 3
        %s6327 = scalar_select %p6326, %s6325, 3
        %s6328 = smul.addr %s6327, 8
        %s6329 = scalar_lea.vmem %s9, %s6328
        // Predicated region
        $region61: #{mlnet_forward.1} parent=55 // pred_check
          %p6330 = pneg %p235
        $region62: #{mlnet_forward.1} parent=55 // pred_check_branch
          %6332 = sbr.rel (%p6330) target = $region64
        $region63: #{mlnet_forward.1} parent=55 // pred_region
          %s6333 = smul.u32 2, %s23
        $region64: #{mlnet_forward.1} parent=55 // pred_fallthru
          _
      $region56: #{mlnet_forward.1} parent=5 // pred_fallthru
        _
      %p6334 = scmp.le.s32.totalorder 2, %s18
      // Predicated region
      $region65: #{mlnet_forward.1} parent=5 // pred_check
        %p6335 = pneg %p6334
      $region66: #{mlnet_forward.1} parent=5 // pred_check_branch
        %6337 = sbr.rel (%p6335) target = $region68
      $region67: #{mlnet_forward.1} parent=5 // pred_region
        %s6338 = ssub.s32 %s18, 2
        // Predicated region
        $region69: #{mlnet_forward.1} parent=67 // pred_check
          %p6339 = pneg %p241
        $region70: #{mlnet_forward.1} parent=67 // pred_check_branch
          %6341 = sbr.rel (%p6339) target = $region72
        $region71: #{mlnet_forward.1} parent=67 // pred_region
          %s6342 = smul.u32 2, %s24
          %p6343 = scmp.lt.s32.totalorder %s6342, 3
          %s6344 = scalar_select %p6343, %s6342, 3
          %s6345 = smul.addr %s6344, 8
          %s6346 = scalar_lea.vmem %s9, %s6345
        $region72: #{mlnet_forward.1} parent=67 // pred_fallthru
          _
      $region68: #{mlnet_forward.1} parent=5 // pred_fallthru
        _
    $region6: #{mlnet_forward.1} parent=1 // loop_footer
      %s22 = sadd.s32 1, %s18
    $region7: #{mlnet_forward.1} parent=1 // loop_footer_branch
      %17 = sbr.rel target = $region3
    $region8: #{mlnet_forward.1} parent=1 // loop_exit
      _
    %6347 = vsyncpa [#allocation3], 1
    %s6348 = scalar_lea.sflag [#allocation3], 1
    %6349 = vsyncpa %s6348, 1

</llo_original>
